<compile_context>
chip_gen: v6e
topology: v6e:2x2x1
jax: 0.10.0
libtpu: 0.0.40
codegen_flags: <defaults>
</compile_context>

<pallas_src>
import functools

import numpy as np
import jax
import jax.numpy as jnp
from jax.experimental import pallas as pl
from jax.experimental.pallas import tpu as pltpu

HID = 64
_VMEM = pl.BlockSpec(memory_space=pltpu.MemorySpace.VMEM)


def _silu(x):
    return x / (1.0 + jnp.exp(-x))


# ----------------------------------------------------------------------------
# fused Pallas kernel: embedding + n_layers ConvEGNN3_obs layers
# ----------------------------------------------------------------------------
def _build_fused_kernel(k, n_layers):
    def kernel(*refs):
        ped_ref, kemb_ref, obs_ref, mask_ref = refs[0:4]
        (wv_r, bv_r, wa_r, ba_r, Wev_r, Wea_r, Wek_r, be_r) = refs[4:12]
        lw_refs = refs[12:29]          # 17 layer-stacked weight refs
        h_out_ref = refs[29]

        f32 = jnp.float32
        BN = ped_ref.shape[0]

        ped = ped_ref[...]             # (BN, 6)  [x, y, vx, vy, ax, ay]
        obs = obs_ref[...]             # (E, 2)   gathered obstacle xy, neighbour-major
        mask = mask_ref[...]           # (E, 1)

        # ---- embedding: emb([encode_v(||v||), encode_a(||a||), k_emb]) ----
        v = ped[:, 2:4]
        a = ped[:, 4:6]
        vnorm = jnp.sqrt(jnp.sum(v * v, axis=-1, keepdims=True))      # (BN,1)
        anorm = jnp.sqrt(jnp.sum(a * a, axis=-1, keepdims=True))      # (BN,1)
        ev = vnorm * wv_r[...] + bv_r[...]                            # (BN,8)
        ea = anorm * wa_r[...] + ba_r[...]                            # (BN,8)
        h = (jnp.dot(ev, Wev_r[...], preferred_element_type=f32)
             + jnp.dot(ea, Wea_r[...], preferred_element_type=f32)
             + jnp.dot(kemb_ref[...], Wek_r[...], preferred_element_type=f32)
             + be_r[...])                                             # (BN,H)

        acce = ped[:, 4:6]
        px = ped[:, 0:2]
        pv = ped[:, 2:4]

        # neighbour count (mask is constant across layers)
        neigh_num = mask[0:BN]
        for j in range(1, k):
            neigh_num = neigh_num + mask[j * BN:(j + 1) * BN]
        inv_nn = 1.0 / (neigh_num + 1e-6)                             # (BN,1)

        (We1h_r, we1d_r, be1_r, We2_r, be2_r,
         Wx1_r, bx1_r, wx2_r, bx2_r,
         Wa1_r, ba1_r, wa2_r, ba2_r,
         Wh1_r, bh1_r, Wh2_r, bh2_r) = lw_refs

        for l in range(n_layers):      # static unroll, weights indexed per layer
            We1h, we1d, be1 = We1h_r[l], we1d_r[l], be1_r[l]
            We2, be2 = We2_r[l], be2_r[l]
            Wx1, bx1, wx2, bx2 = Wx1_r[l], bx1_r[l], wx2_r[l], bx2_r[l]
            Wa1, ba1, wa2, ba2 = Wa1_r[l], ba1_r[l], wa2_r[l], ba2_r[l]
            Wh1, bh1, Wh2, bh2 = Wh1_r[l], bh1_r[l], Wh2_r[l], bh2_r[l]

            # masked relative positions & distances, edge-major (E, .)
            px_t = jnp.concatenate([px] * k, axis=0)                  # (E,2)
            rel = (obs - px_t) * mask                                 # (E,2)
            dists = jnp.sqrt(jnp.sum(rel * rel, axis=-1, keepdims=True))  # (E,1)

            # f_e: Linear(H+1->H) (split weights), SiLU, Linear(H->H), SiLU
            hW = jnp.dot(h, We1h, preferred_element_type=f32)         # (BN,H)
            hW_t = jnp.concatenate([hW] * k, axis=0)                  # (E,H)
            pre1 = _silu(hW_t + dists * we1d + be1)
            m_ij = _silu(jnp.dot(pre1, We2, preferred_element_type=f32) + be2)
            m_ij = m_ij * mask                                        # m_ij[~mask] = 0

            # f_x: Linear(H->H), SiLU, Linear(H->1)
            x1 = _silu(jnp.dot(m_ij, Wx1, preferred_element_type=f32) + bx1)
            fx = jnp.sum(x1 * wx2, axis=-1, keepdims=True) + bx2      # (E,1)
            wrel = rel * fx                                           # (E,2)

            # neighbour aggregation = sum over k contiguous (BN, .) slabs
            agg = wrel[0:BN]
            m_i = m_ij[0:BN]
            for j in range(1, k):
                agg = agg + wrel[j * BN:(j + 1) * BN]
                m_i = m_i + m_ij[j * BN:(j + 1) * BN]
            agg = inv_nn * agg                                        # (BN,2)

            # f_a: Linear(H->H), SiLU, Linear(H->1)
            a1 = _silu(jnp.dot(h, Wa1, preferred_element_type=f32) + ba1)
            fa = jnp.sum(a1 * wa2, axis=-1, keepdims=True) + ba2      # (BN,1)

            a_new = fa * acce + agg
            pv = pv + a_new
            px = px + pv

            # f_h: Linear(2H->H) as one K=128 contraction, SiLU, Linear(H->H); residual
            hm = jnp.concatenate([h, m_i], axis=-1)                   # (BN,2H)
            hh = _silu(jnp.dot(hm, Wh1, preferred_element_type=f32) + bh1)
            h = h + jnp.dot(hh, Wh2, preferred_element_type=f32) + bh2

        h_out_ref[...] = h

    return kernel


# ----------------------------------------------------------------------------
# parameters (deterministic, PyTorch-Linear-like init)
# ----------------------------------------------------------------------------
def _make_linear(key, fin, fout):
    k1, k2 = jax.random.split(key)
    bound = 1.0 / np.sqrt(fin)
    W = jax.random.uniform(k1, (fin, fout), jnp.float32, -bound, bound)
    b = jax.random.uniform(k2, (1, fout), jnp.float32, -bound, bound)
    return W, b


def _make_layer_params(key):
    keys = jax.random.split(key, 8)
    We1, be1 = _make_linear(keys[0], HID + 1, HID)       # f_e[0]: in = [h, dist]
    We2, be2 = _make_linear(keys[1], HID, HID)
    Wx1, bx1 = _make_linear(keys[2], HID, HID)
    Wx2, bx2 = _make_linear(keys[3], HID, 1)
    Wa1, ba1 = _make_linear(keys[4], HID, HID)
    Wa2, ba2 = _make_linear(keys[5], HID, 1)
    Wh1, bh1 = _make_linear(keys[6], 2 * HID, HID)       # f_h[0]: in = [h, m_i]
    Wh2, bh2 = _make_linear(keys[7], HID, HID)
    return (We1[:HID], We1[HID:HID + 1], be1, We2, be2,
            Wx1, bx1, Wx2.T, bx2,
            Wa1, ba1, Wa2.T, ba2,
            Wh1, bh1, Wh2, bh2)


def _make_embed_params(key):
    keys = jax.random.split(key, 3)
    Wv, bv = _make_linear(keys[0], 1, 8)
    Wa, ba = _make_linear(keys[1], 1, 8)
    We, be = _make_linear(keys[2], 3 + 8 + 8, HID)
    return (Wv, bv, Wa, ba, We[:8], We[8:16], We[16:19], be)


def make_params(key, n_layers=3):
    keys = jax.random.split(key, 1 + n_layers)
    return {"embed": _make_embed_params(keys[0]),
            "layers": [_make_layer_params(keys[1 + i]) for i in range(n_layers)]}


def _stack_layer_params(layers):
    n_fields = len(layers[0])
    return tuple(jnp.stack([lw[i] for lw in layers], axis=0) for i in range(n_fields))


# ----------------------------------------------------------------------------
# forward pass: gather glue in JAX, everything else in one Pallas kernel
# ----------------------------------------------------------------------------
def pallas_forward(params, ped_features, obs_features, neigh_mask, neigh_index, k_emb):
    bs, N, _ = ped_features.shape
    k = neigh_index.shape[-1]
    BN = bs * N
    E = BN * k
    n_layers = len(params["layers"])

    # TODO(synk): DATA.Pedestrians.get_relative_quantity source not provided;
    # implemented as the pairwise difference (other - self), so only the
    # gathered obstacle xy is needed (the zero-padded part never matters).
    obs_xy = obs_features[..., :2]
    obs_g = jax.vmap(lambda ob, idx: ob[idx])(obs_xy, neigh_index)        # (bs,N,k,2)
    # neighbour-major flattening: edge e = j*BN + (b*N + i)
    obs_e = jnp.transpose(obs_g, (2, 0, 1, 3)).reshape(E, 2).astype(jnp.float32)
    mask_e = jnp.transpose(neigh_mask.astype(jnp.float32), (2, 0, 1)).reshape(E, 1)

    ew = params["embed"]
    lw = _stack_layer_params(params["layers"])

    kernel = _build_fused_kernel(k, n_layers)
    h = pl.pallas_call(
        kernel,
        out_shape=jax.ShapeDtypeStruct((BN, HID), jnp.float32),
        in_specs=[_VMEM] * (4 + len(ew) + len(lw)),
        out_specs=_VMEM,
    )(ped_features.reshape(BN, 6).astype(jnp.float32),
      k_emb.reshape(BN, 3).astype(jnp.float32),
      obs_e, mask_e, *ew, *lw)
    return h.reshape(bs, N, HID)


# ----------------------------------------------------------------------------
# pure-JAX reference (natural 3-D/4-D formulation) — sanity check only
# ----------------------------------------------------------------------------
def _ref_layer(lw, ped, h, rel, mask):
    (We1h, we1d, be1, We2, be2,
     Wx1, bx1, wx2, bx2,
     Wa1, ba1, wa2, ba2,
     Wh1, bh1, Wh2, bh2) = lw
    dists = jnp.sqrt(jnp.sum(rel[..., :2] * rel[..., :2], axis=-1, keepdims=True))
    neigh_num = jnp.sum(mask, axis=-1, keepdims=True)                      # (bs,N,1)
    hW = h @ We1h                                                          # (bs,N,H)
    pre1 = _silu(hW[:, :, None, :] + dists * we1d + be1)                   # (bs,N,k,H)
    m_ij = _silu(pre1 @ We2 + be2) * mask[..., None]
    x1 = _silu(m_ij @ Wx1 + bx1)
    fx = jnp.sum(x1 * wx2, axis=-1, keepdims=True) + bx2                   # (bs,N,k,1)
    agg = jnp.sum(rel[..., :2] * fx, axis=-2) / (neigh_num + 1e-6)         # (bs,N,2)
    a1 = _silu(h @ Wa1 + ba1)
    fa = jnp.sum(a1 * wa2, axis=-1, keepdims=True) + ba2                   # (bs,N,1)
    a_new = fa * ped[..., 4:6] + agg
    v_new = ped[..., 2:4] + a_new
    x_new = ped[..., :2] + v_new
    m_i = jnp.sum(m_ij, axis=-2)                                           # (bs,N,H)
    hm = jnp.concatenate([h, m_i], axis=-1)
    h_new = h + _silu(hm @ Wh1 + bh1) @ Wh2 + bh2
    return jnp.concatenate([x_new, v_new, a_new], axis=-1), h_new


def ref_forward(params, ped_features, obs_features, neigh_mask, neigh_index, k_emb):
    wv, bv, wa, ba, Wev, Wea, Wek, be = params["embed"]
    vnorm = jnp.sqrt(jnp.sum(ped_features[..., 2:4] ** 2, axis=-1, keepdims=True))
    anorm = jnp.sqrt(jnp.sum(ped_features[..., 4:6] ** 2, axis=-1, keepdims=True))
    h = ((vnorm * wv + bv) @ Wev + (anorm * wa + ba) @ Wea + k_emb @ Wek + be)
    obs_p = jnp.concatenate([obs_features, jnp.zeros_like(obs_features)], axis=-1)
    acce = ped_features[..., 4:6]
    ped = ped_features
    maskf = neigh_mask.astype(jnp.float32)
    for lw in params["layers"]:
        rel = obs_p[:, None, :, :] - ped[:, :, None, :4]                   # (bs,N,M,4)
        rel = jnp.take_along_axis(rel, neigh_index[..., None], axis=2)     # (bs,N,k,4)
        rel = rel * maskf[..., None]
        ped_in = jnp.concatenate([ped[..., :4], acce], axis=-1)
        ped, h = _ref_layer(lw, ped_in, h, rel, maskf)
    return h


# ----------------------------------------------------------------------------
if __name__ == "__main__":
    key = jax.random.PRNGKey(0)
    kp, kd = jax.random.split(key)
    params = make_params(kp, n_layers=3)

    bs, N, K, M_OBS = 2, 8, 4, 6
    ks = jax.random.split(kd, 5)
    ped_features = jax.random.normal(ks[0], (bs, N, 6), jnp.float32)
    k_emb = jax.random.normal(ks[1], (bs, N, 3), jnp.float32)
    obs_features = jax.random.normal(ks[2], (bs, M_OBS, 2), jnp.float32)
    neigh_mask = (jax.random.uniform(ks[3], (bs, N, K)) > 0.3).astype(jnp.float32)
    neigh_index = jax.random.randint(ks[4], (bs, N, K), 0, M_OBS)

    out = pallas_forward(params, ped_features, obs_features, neigh_mask, neigh_index, k_emb)
    jax.block_until_ready(out)

    ref = ref_forward(params, ped_features, obs_features, neigh_mask, neigh_index, k_emb)
    err = np.max(np.abs(np.asarray(out) - np.asarray(ref)))
    assert np.allclose(np.asarray(out), np.asarray(ref), atol=1e-4, rtol=1e-4), err
    print("KERNEL_OK")
</pallas_src>

<mosaic_0001>
module attributes {stable_mosaic.version = 11 : i64} {
  func.func @kernel(%arg0: memref<16x6xf32, #tpu.memory_space<vmem>>, %arg1: memref<16x3xf32, #tpu.memory_space<vmem>>, %arg2: memref<64x2xf32, #tpu.memory_space<vmem>>, %arg3: memref<64x1xf32, #tpu.memory_space<vmem>>, %arg4: memref<1x8xf32, #tpu.memory_space<vmem>>, %arg5: memref<1x8xf32, #tpu.memory_space<vmem>>, %arg6: memref<1x8xf32, #tpu.memory_space<vmem>>, %arg7: memref<1x8xf32, #tpu.memory_space<vmem>>, %arg8: memref<8x64xf32, #tpu.memory_space<vmem>>, %arg9: memref<8x64xf32, #tpu.memory_space<vmem>>, %arg10: memref<3x64xf32, #tpu.memory_space<vmem>>, %arg11: memref<1x64xf32, #tpu.memory_space<vmem>>, %arg12: memref<3x64x64xf32, #tpu.memory_space<vmem>>, %arg13: memref<3x1x64xf32, #tpu.memory_space<vmem>>, %arg14: memref<3x1x64xf32, #tpu.memory_space<vmem>>, %arg15: memref<3x64x64xf32, #tpu.memory_space<vmem>>, %arg16: memref<3x1x64xf32, #tpu.memory_space<vmem>>, %arg17: memref<3x64x64xf32, #tpu.memory_space<vmem>>, %arg18: memref<3x1x64xf32, #tpu.memory_space<vmem>>, %arg19: memref<3x1x64xf32, #tpu.memory_space<vmem>>, %arg20: memref<3x1x1xf32, #tpu.memory_space<vmem>>, %arg21: memref<3x64x64xf32, #tpu.memory_space<vmem>>, %arg22: memref<3x1x64xf32, #tpu.memory_space<vmem>>, %arg23: memref<3x1x64xf32, #tpu.memory_space<vmem>>, %arg24: memref<3x1x1xf32, #tpu.memory_space<vmem>>, %arg25: memref<3x128x64xf32, #tpu.memory_space<vmem>>, %arg26: memref<3x1x64xf32, #tpu.memory_space<vmem>>, %arg27: memref<3x64x64xf32, #tpu.memory_space<vmem>>, %arg28: memref<3x1x64xf32, #tpu.memory_space<vmem>>, %arg29: memref<16x64xf32, #tpu.memory_space<vmem>>) attributes {dimension_semantics = [], scalar_prefetch = 0 : i64, scratch_operands = 0 : i64, tpu.core_type = #tpu.core_type<tc>} {
    %c0 = arith.constant 0 : index
    %c0_0 = arith.constant 0 : index
    %0 = vector.load %arg0[%c0, %c0_0] : memref<16x6xf32, #tpu.memory_space<vmem>>, vector<16x6xf32>
    %c0_1 = arith.constant 0 : index
    %c0_2 = arith.constant 0 : index
    %1 = vector.load %arg2[%c0_1, %c0_2] : memref<64x2xf32, #tpu.memory_space<vmem>>, vector<64x2xf32>
    %c0_3 = arith.constant 0 : index
    %c0_4 = arith.constant 0 : index
    %2 = vector.load %arg3[%c0_3, %c0_4] : memref<64x1xf32, #tpu.memory_space<vmem>>, vector<64x1xf32>
    %3 = vector.extract_strided_slice %0 {offsets = [0, 2], sizes = [16, 2], strides = [1, 1]} : vector<16x6xf32> to vector<16x2xf32>
    %4 = vector.extract_strided_slice %0 {offsets = [0, 4], sizes = [16, 2], strides = [1, 1]} : vector<16x6xf32> to vector<16x2xf32>
    %5 = arith.mulf %3, %3 : vector<16x2xf32>
    %cst = arith.constant dense<0.000000e+00> : vector<16xf32>
    %6 = vector.multi_reduction <add>, %5, %cst [1] : vector<16x2xf32> to vector<16xf32>
    %7 = vector.shape_cast %6 : vector<16xf32> to vector<16x1xf32>
    %8 = math.sqrt %7 : vector<16x1xf32>
    %9 = arith.mulf %4, %4 : vector<16x2xf32>
    %cst_5 = arith.constant dense<0.000000e+00> : vector<16xf32>
    %10 = vector.multi_reduction <add>, %9, %cst_5 [1] : vector<16x2xf32> to vector<16xf32>
    %11 = vector.shape_cast %10 : vector<16xf32> to vector<16x1xf32>
    %12 = math.sqrt %11 : vector<16x1xf32>
    %c0_6 = arith.constant 0 : index
    %c0_7 = arith.constant 0 : index
    %13 = vector.load %arg4[%c0_6, %c0_7] : memref<1x8xf32, #tpu.memory_space<vmem>>, vector<1x8xf32>
    %14 = vector.broadcast %8 : vector<16x1xf32> to vector<16x8xf32>
    %15 = vector.broadcast %13 : vector<1x8xf32> to vector<16x8xf32>
    %16 = arith.mulf %14, %15 : vector<16x8xf32>
    %c0_8 = arith.constant 0 : index
    %c0_9 = arith.constant 0 : index
    %17 = vector.load %arg5[%c0_8, %c0_9] : memref<1x8xf32, #tpu.memory_space<vmem>>, vector<1x8xf32>
    %18 = vector.broadcast %17 : vector<1x8xf32> to vector<16x8xf32>
    %19 = arith.addf %16, %18 : vector<16x8xf32>
    %c0_10 = arith.constant 0 : index
    %c0_11 = arith.constant 0 : index
    %20 = vector.load %arg6[%c0_10, %c0_11] : memref<1x8xf32, #tpu.memory_space<vmem>>, vector<1x8xf32>
    %21 = vector.broadcast %12 : vector<16x1xf32> to vector<16x8xf32>
    %22 = vector.broadcast %20 : vector<1x8xf32> to vector<16x8xf32>
    %23 = arith.mulf %21, %22 : vector<16x8xf32>
    %c0_12 = arith.constant 0 : index
    %c0_13 = arith.constant 0 : index
    %24 = vector.load %arg7[%c0_12, %c0_13] : memref<1x8xf32, #tpu.memory_space<vmem>>, vector<1x8xf32>
    %25 = vector.broadcast %24 : vector<1x8xf32> to vector<16x8xf32>
    %26 = arith.addf %23, %25 : vector<16x8xf32>
    %c0_14 = arith.constant 0 : index
    %c0_15 = arith.constant 0 : index
    %27 = vector.load %arg8[%c0_14, %c0_15] : memref<8x64xf32, #tpu.memory_space<vmem>>, vector<8x64xf32>
    %cst_16 = arith.constant dense<0.000000e+00> : vector<16x64xf32>
    %28 = tpu.matmul %19, %27, %cst_16 {dimension_numbers = #tpu.dot_dimension_numbers<[1], [0], [0], [1], [0, 0, 1, 1], [], []>} : vector<16x8xf32>, vector<8x64xf32>, vector<16x64xf32> -> vector<16x64xf32>
    %c0_17 = arith.constant 0 : index
    %c0_18 = arith.constant 0 : index
    %29 = vector.load %arg9[%c0_17, %c0_18] : memref<8x64xf32, #tpu.memory_space<vmem>>, vector<8x64xf32>
    %cst_19 = arith.constant dense<0.000000e+00> : vector<16x64xf32>
    %30 = tpu.matmul %26, %29, %cst_19 {dimension_numbers = #tpu.dot_dimension_numbers<[1], [0], [0], [1], [0, 0, 1, 1], [], []>} : vector<16x8xf32>, vector<8x64xf32>, vector<16x64xf32> -> vector<16x64xf32>
    %31 = arith.addf %28, %30 : vector<16x64xf32>
    %c0_20 = arith.constant 0 : index
    %c0_21 = arith.constant 0 : index
    %32 = vector.load %arg1[%c0_20, %c0_21] : memref<16x3xf32, #tpu.memory_space<vmem>>, vector<16x3xf32>
    %c0_22 = arith.constant 0 : index
    %c0_23 = arith.constant 0 : index
    %33 = vector.load %arg10[%c0_22, %c0_23] : memref<3x64xf32, #tpu.memory_space<vmem>>, vector<3x64xf32>
    %cst_24 = arith.constant dense<0.000000e+00> : vector<16x64xf32>
    %34 = tpu.matmul %32, %33, %cst_24 {dimension_numbers = #tpu.dot_dimension_numbers<[1], [0], [0], [1], [0, 0, 1, 1], [], []>} : vector<16x3xf32>, vector<3x64xf32>, vector<16x64xf32> -> vector<16x64xf32>
    %35 = arith.addf %31, %34 : vector<16x64xf32>
    %c0_25 = arith.constant 0 : index
    %c0_26 = arith.constant 0 : index
    %36 = vector.load %arg11[%c0_25, %c0_26] : memref<1x64xf32, #tpu.memory_space<vmem>>, vector<1x64xf32>
    %37 = vector.broadcast %36 : vector<1x64xf32> to vector<16x64xf32>
    %38 = arith.addf %35, %37 : vector<16x64xf32>
    %39 = vector.extract_strided_slice %0 {offsets = [0, 4], sizes = [16, 2], strides = [1, 1]} : vector<16x6xf32> to vector<16x2xf32>
    %40 = vector.extract_strided_slice %0 {offsets = [0, 0], sizes = [16, 2], strides = [1, 1]} : vector<16x6xf32> to vector<16x2xf32>
    %41 = vector.extract_strided_slice %0 {offsets = [0, 2], sizes = [16, 2], strides = [1, 1]} : vector<16x6xf32> to vector<16x2xf32>
    %42 = vector.extract_strided_slice %2 {offsets = [0, 0], sizes = [16, 1], strides = [1, 1]} : vector<64x1xf32> to vector<16x1xf32>
    %43 = vector.extract_strided_slice %2 {offsets = [16, 0], sizes = [16, 1], strides = [1, 1]} : vector<64x1xf32> to vector<16x1xf32>
    %44 = arith.addf %42, %43 : vector<16x1xf32>
    %45 = vector.extract_strided_slice %2 {offsets = [32, 0], sizes = [16, 1], strides = [1, 1]} : vector<64x1xf32> to vector<16x1xf32>
    %46 = arith.addf %44, %45 : vector<16x1xf32>
    %47 = vector.extract_strided_slice %2 {offsets = [48, 0], sizes = [16, 1], strides = [1, 1]} : vector<64x1xf32> to vector<16x1xf32>
    %48 = arith.addf %46, %47 : vector<16x1xf32>
    %cst_27 = arith.constant 9.99999997E-7 : f32
    %49 = vector.broadcast %cst_27 : f32 to vector<16x1xf32>
    %50 = arith.addf %48, %49 : vector<16x1xf32>
    %cst_28 = arith.constant 1.000000e+00 : f32
    %51 = vector.broadcast %cst_28 : f32 to vector<16x1xf32>
    %52 = arith.divf %51, %50 : vector<16x1xf32>
    %c0_29 = arith.constant 0 : index
    %c0_30 = arith.constant 0 : index
    %c0_31 = arith.constant 0 : index
    %53 = vector.load %arg12[%c0_29, %c0_30, %c0_31] : memref<3x64x64xf32, #tpu.memory_space<vmem>>, vector<1x64x64xf32>
    %54 = vector.shape_cast %53 : vector<1x64x64xf32> to vector<64x64xf32>
    %c0_32 = arith.constant 0 : index
    %c0_33 = arith.constant 0 : index
    %c0_34 = arith.constant 0 : index
    %55 = vector.load %arg13[%c0_32, %c0_33, %c0_34] : memref<3x1x64xf32, #tpu.memory_space<vmem>>, vector<1x1x64xf32>
    %56 = vector.shape_cast %55 : vector<1x1x64xf32> to vector<1x64xf32>
    %c0_35 = arith.constant 0 : index
    %c0_36 = arith.constant 0 : index
    %c0_37 = arith.constant 0 : index
    %57 = vector.load %arg14[%c0_35, %c0_36, %c0_37] : memref<3x1x64xf32, #tpu.memory_space<vmem>>, vector<1x1x64xf32>
    %58 = vector.shape_cast %57 : vector<1x1x64xf32> to vector<1x64xf32>
    %c0_38 = arith.constant 0 : index
    %c0_39 = arith.constant 0 : index
    %c0_40 = arith.constant 0 : index
    %59 = vector.load %arg15[%c0_38, %c0_39, %c0_40] : memref<3x64x64xf32, #tpu.memory_space<vmem>>, vector<1x64x64xf32>
    %60 = vector.shape_cast %59 : vector<1x64x64xf32> to vector<64x64xf32>
    %c0_41 = arith.constant 0 : index
    %c0_42 = arith.constant 0 : index
    %c0_43 = arith.constant 0 : index
    %61 = vector.load %arg16[%c0_41, %c0_42, %c0_43] : memref<3x1x64xf32, #tpu.memory_space<vmem>>, vector<1x1x64xf32>
    %62 = vector.shape_cast %61 : vector<1x1x64xf32> to vector<1x64xf32>
    %c0_44 = arith.constant 0 : index
    %c0_45 = arith.constant 0 : index
    %c0_46 = arith.constant 0 : index
    %63 = vector.load %arg17[%c0_44, %c0_45, %c0_46] : memref<3x64x64xf32, #tpu.memory_space<vmem>>, vector<1x64x64xf32>
    %64 = vector.shape_cast %63 : vector<1x64x64xf32> to vector<64x64xf32>
    %c0_47 = arith.constant 0 : index
    %c0_48 = arith.constant 0 : index
    %c0_49 = arith.constant 0 : index
    %65 = vector.load %arg18[%c0_47, %c0_48, %c0_49] : memref<3x1x64xf32, #tpu.memory_space<vmem>>, vector<1x1x64xf32>
    %66 = vector.shape_cast %65 : vector<1x1x64xf32> to vector<1x64xf32>
    %c0_50 = arith.constant 0 : index
    %c0_51 = arith.constant 0 : index
    %c0_52 = arith.constant 0 : index
    %67 = vector.load %arg19[%c0_50, %c0_51, %c0_52] : memref<3x1x64xf32, #tpu.memory_space<vmem>>, vector<1x1x64xf32>
    %68 = vector.shape_cast %67 : vector<1x1x64xf32> to vector<1x64xf32>
    %c0_53 = arith.constant 0 : index
    %c0_54 = arith.constant 0 : index
    %c0_55 = arith.constant 0 : index
    %69 = vector.load %arg20[%c0_53, %c0_54, %c0_55] : memref<3x1x1xf32, #tpu.memory_space<vmem>>, vector<1x1x1xf32>
    %70 = vector.shape_cast %69 : vector<1x1x1xf32> to vector<1x1xf32>
    %c0_56 = arith.constant 0 : index
    %c0_57 = arith.constant 0 : index
    %c0_58 = arith.constant 0 : index
    %71 = vector.load %arg21[%c0_56, %c0_57, %c0_58] : memref<3x64x64xf32, #tpu.memory_space<vmem>>, vector<1x64x64xf32>
    %72 = vector.shape_cast %71 : vector<1x64x64xf32> to vector<64x64xf32>
    %c0_59 = arith.constant 0 : index
    %c0_60 = arith.constant 0 : index
    %c0_61 = arith.constant 0 : index
    %73 = vector.load %arg22[%c0_59, %c0_60, %c0_61] : memref<3x1x64xf32, #tpu.memory_space<vmem>>, vector<1x1x64xf32>
    %74 = vector.shape_cast %73 : vector<1x1x64xf32> to vector<1x64xf32>
    %c0_62 = arith.constant 0 : index
    %c0_63 = arith.constant 0 : index
    %c0_64 = arith.constant 0 : index
    %75 = vector.load %arg23[%c0_62, %c0_63, %c0_64] : memref<3x1x64xf32, #tpu.memory_space<vmem>>, vector<1x1x64xf32>
    %76 = vector.shape_cast %75 : vector<1x1x64xf32> to vector<1x64xf32>
    %c0_65 = arith.constant 0 : index
    %c0_66 = arith.constant 0 : index
    %c0_67 = arith.constant 0 : index
    %77 = vector.load %arg24[%c0_65, %c0_66, %c0_67] : memref<3x1x1xf32, #tpu.memory_space<vmem>>, vector<1x1x1xf32>
    %78 = vector.shape_cast %77 : vector<1x1x1xf32> to vector<1x1xf32>
    %c0_68 = arith.constant 0 : index
    %c0_69 = arith.constant 0 : index
    %c0_70 = arith.constant 0 : index
    %79 = vector.load %arg25[%c0_68, %c0_69, %c0_70] : memref<3x128x64xf32, #tpu.memory_space<vmem>>, vector<1x128x64xf32>
    %80 = vector.shape_cast %79 : vector<1x128x64xf32> to vector<128x64xf32>
    %c0_71 = arith.constant 0 : index
    %c0_72 = arith.constant 0 : index
    %c0_73 = arith.constant 0 : index
    %81 = vector.load %arg26[%c0_71, %c0_72, %c0_73] : memref<3x1x64xf32, #tpu.memory_space<vmem>>, vector<1x1x64xf32>
    %82 = vector.shape_cast %81 : vector<1x1x64xf32> to vector<1x64xf32>
    %c0_74 = arith.constant 0 : index
    %c0_75 = arith.constant 0 : index
    %c0_76 = arith.constant 0 : index
    %83 = vector.load %arg27[%c0_74, %c0_75, %c0_76] : memref<3x64x64xf32, #tpu.memory_space<vmem>>, vector<1x64x64xf32>
    %84 = vector.shape_cast %83 : vector<1x64x64xf32> to vector<64x64xf32>
    %c0_77 = arith.constant 0 : index
    %c0_78 = arith.constant 0 : index
    %c0_79 = arith.constant 0 : index
    %85 = vector.load %arg28[%c0_77, %c0_78, %c0_79] : memref<3x1x64xf32, #tpu.memory_space<vmem>>, vector<1x1x64xf32>
    %86 = vector.shape_cast %85 : vector<1x1x64xf32> to vector<1x64xf32>
    %87 = tpu.concatenate %40, %40, %40, %40 in 0 : vector<16x2xf32>, vector<16x2xf32>, vector<16x2xf32>, vector<16x2xf32> -> vector<64x2xf32>
    %88 = arith.subf %1, %87 : vector<64x2xf32>
    %89 = vector.broadcast %2 : vector<64x1xf32> to vector<64x2xf32>
    %90 = arith.mulf %88, %89 : vector<64x2xf32>
    %91 = arith.mulf %90, %90 : vector<64x2xf32>
    %cst_80 = arith.constant dense<0.000000e+00> : vector<64xf32>
    %92 = vector.multi_reduction <add>, %91, %cst_80 [1] : vector<64x2xf32> to vector<64xf32>
    %93 = vector.shape_cast %92 : vector<64xf32> to vector<64x1xf32>
    %94 = math.sqrt %93 : vector<64x1xf32>
    %cst_81 = arith.constant dense<0.000000e+00> : vector<16x64xf32>
    %95 = tpu.matmul %38, %54, %cst_81 {dimension_numbers = #tpu.dot_dimension_numbers<[1], [0], [0], [1], [0, 0, 1, 1], [], []>} : vector<16x64xf32>, vector<64x64xf32>, vector<16x64xf32> -> vector<16x64xf32>
    %96 = tpu.concatenate %95, %95, %95, %95 in 0 : vector<16x64xf32>, vector<16x64xf32>, vector<16x64xf32>, vector<16x64xf32> -> vector<64x64xf32>
    %97 = vector.broadcast %94 : vector<64x1xf32> to vector<64x64xf32>
    %98 = vector.broadcast %56 : vector<1x64xf32> to vector<64x64xf32>
    %99 = arith.mulf %97, %98 : vector<64x64xf32>
    %100 = arith.addf %96, %99 : vector<64x64xf32>
    %101 = vector.broadcast %58 : vector<1x64xf32> to vector<64x64xf32>
    %102 = arith.addf %100, %101 : vector<64x64xf32>
    %cst_82 = arith.constant 0.000000e+00 : f32
    %103 = vector.broadcast %cst_82 : f32 to vector<64x64xf32>
    %104 = arith.subf %103, %102 : vector<64x64xf32>
    %105 = math.exp %104 : vector<64x64xf32>
    %cst_83 = arith.constant 1.000000e+00 : f32
    %106 = vector.broadcast %cst_83 : f32 to vector<64x64xf32>
    %107 = arith.addf %106, %105 : vector<64x64xf32>
    %108 = arith.divf %102, %107 : vector<64x64xf32>
    %cst_84 = arith.constant dense<0.000000e+00> : vector<64x64xf32>
    %109 = tpu.matmul %108, %60, %cst_84 {dimension_numbers = #tpu.dot_dimension_numbers<[1], [0], [0], [1], [0, 0, 1, 1], [], []>} : vector<64x64xf32>, vector<64x64xf32>, vector<64x64xf32> -> vector<64x64xf32>
    %110 = vector.broadcast %62 : vector<1x64xf32> to vector<64x64xf32>
    %111 = arith.addf %109, %110 : vector<64x64xf32>
    %cst_85 = arith.constant 0.000000e+00 : f32
    %112 = vector.broadcast %cst_85 : f32 to vector<64x64xf32>
    %113 = arith.subf %112, %111 : vector<64x64xf32>
    %114 = math.exp %113 : vector<64x64xf32>
    %cst_86 = arith.constant 1.000000e+00 : f32
    %115 = vector.broadcast %cst_86 : f32 to vector<64x64xf32>
    %116 = arith.addf %115, %114 : vector<64x64xf32>
    %117 = arith.divf %111, %116 : vector<64x64xf32>
    %118 = vector.broadcast %2 : vector<64x1xf32> to vector<64x64xf32>
    %119 = arith.mulf %117, %118 : vector<64x64xf32>
    %cst_87 = arith.constant dense<0.000000e+00> : vector<64x64xf32>
    %120 = tpu.matmul %119, %64, %cst_87 {dimension_numbers = #tpu.dot_dimension_numbers<[1], [0], [0], [1], [0, 0, 1, 1], [], []>} : vector<64x64xf32>, vector<64x64xf32>, vector<64x64xf32> -> vector<64x64xf32>
    %121 = vector.broadcast %66 : vector<1x64xf32> to vector<64x64xf32>
    %122 = arith.addf %120, %121 : vector<64x64xf32>
    %cst_88 = arith.constant 0.000000e+00 : f32
    %123 = vector.broadcast %cst_88 : f32 to vector<64x64xf32>
    %124 = arith.subf %123, %122 : vector<64x64xf32>
    %125 = math.exp %124 : vector<64x64xf32>
    %cst_89 = arith.constant 1.000000e+00 : f32
    %126 = vector.broadcast %cst_89 : f32 to vector<64x64xf32>
    %127 = arith.addf %126, %125 : vector<64x64xf32>
    %128 = arith.divf %122, %127 : vector<64x64xf32>
    %129 = vector.broadcast %68 : vector<1x64xf32> to vector<64x64xf32>
    %130 = arith.mulf %128, %129 : vector<64x64xf32>
    %cst_90 = arith.constant dense<0.000000e+00> : vector<64xf32>
    %131 = vector.multi_reduction <add>, %130, %cst_90 [1] : vector<64x64xf32> to vector<64xf32>
    %132 = vector.shape_cast %131 : vector<64xf32> to vector<64x1xf32>
    %133 = vector.broadcast %70 : vector<1x1xf32> to vector<64x1xf32>
    %134 = arith.addf %132, %133 : vector<64x1xf32>
    %135 = vector.broadcast %134 : vector<64x1xf32> to vector<64x2xf32>
    %136 = arith.mulf %90, %135 : vector<64x2xf32>
    %137 = vector.extract_strided_slice %136 {offsets = [0, 0], sizes = [16, 2], strides = [1, 1]} : vector<64x2xf32> to vector<16x2xf32>
    %138 = vector.extract_strided_slice %119 {offsets = [0, 0], sizes = [16, 64], strides = [1, 1]} : vector<64x64xf32> to vector<16x64xf32>
    %139 = vector.extract_strided_slice %136 {offsets = [16, 0], sizes = [16, 2], strides = [1, 1]} : vector<64x2xf32> to vector<16x2xf32>
    %140 = arith.addf %137, %139 : vector<16x2xf32>
    %141 = vector.extract_strided_slice %119 {offsets = [16, 0], sizes = [16, 64], strides = [1, 1]} : vector<64x64xf32> to vector<16x64xf32>
    %142 = arith.addf %138, %141 : vector<16x64xf32>
    %143 = vector.extract_strided_slice %136 {offsets = [32, 0], sizes = [16, 2], strides = [1, 1]} : vector<64x2xf32> to vector<16x2xf32>
    %144 = arith.addf %140, %143 : vector<16x2xf32>
    %145 = vector.extract_strided_slice %119 {offsets = [32, 0], sizes = [16, 64], strides = [1, 1]} : vector<64x64xf32> to vector<16x64xf32>
    %146 = arith.addf %142, %145 : vector<16x64xf32>
    %147 = vector.extract_strided_slice %136 {offsets = [48, 0], sizes = [16, 2], strides = [1, 1]} : vector<64x2xf32> to vector<16x2xf32>
    %148 = arith.addf %144, %147 : vector<16x2xf32>
    %149 = vector.extract_strided_slice %119 {offsets = [48, 0], sizes = [16, 64], strides = [1, 1]} : vector<64x64xf32> to vector<16x64xf32>
    %150 = arith.addf %146, %149 : vector<16x64xf32>
    %151 = vector.broadcast %52 : vector<16x1xf32> to vector<16x2xf32>
    %152 = arith.mulf %151, %148 : vector<16x2xf32>
    %cst_91 = arith.constant dense<0.000000e+00> : vector<16x64xf32>
    %153 = tpu.matmul %38, %72, %cst_91 {dimension_numbers = #tpu.dot_dimension_numbers<[1], [0], [0], [1], [0, 0, 1, 1], [], []>} : vector<16x64xf32>, vector<64x64xf32>, vector<16x64xf32> -> vector<16x64xf32>
    %154 = vector.broadcast %74 : vector<1x64xf32> to vector<16x64xf32>
    %155 = arith.addf %153, %154 : vector<16x64xf32>
    %cst_92 = arith.constant 0.000000e+00 : f32
    %156 = vector.broadcast %cst_92 : f32 to vector<16x64xf32>
    %157 = arith.subf %156, %155 : vector<16x64xf32>
    %158 = math.exp %157 : vector<16x64xf32>
    %cst_93 = arith.constant 1.000000e+00 : f32
    %159 = vector.broadcast %cst_93 : f32 to vector<16x64xf32>
    %160 = arith.addf %159, %158 : vector<16x64xf32>
    %161 = arith.divf %155, %160 : vector<16x64xf32>
    %162 = vector.broadcast %76 : vector<1x64xf32> to vector<16x64xf32>
    %163 = arith.mulf %161, %162 : vector<16x64xf32>
    %cst_94 = arith.constant dense<0.000000e+00> : vector<16xf32>
    %164 = vector.multi_reduction <add>, %163, %cst_94 [1] : vector<16x64xf32> to vector<16xf32>
    %165 = vector.shape_cast %164 : vector<16xf32> to vector<16x1xf32>
    %166 = vector.broadcast %78 : vector<1x1xf32> to vector<16x1xf32>
    %167 = arith.addf %165, %166 : vector<16x1xf32>
    %168 = vector.broadcast %167 : vector<16x1xf32> to vector<16x2xf32>
    %169 = arith.mulf %168, %39 : vector<16x2xf32>
    %170 = arith.addf %169, %152 : vector<16x2xf32>
    %171 = arith.addf %41, %170 : vector<16x2xf32>
    %172 = arith.addf %40, %171 : vector<16x2xf32>
    %173 = tpu.concatenate %38, %150 in 1 : vector<16x64xf32>, vector<16x64xf32> -> vector<16x128xf32>
    %cst_95 = arith.constant dense<0.000000e+00> : vector<16x64xf32>
    %174 = tpu.matmul %173, %80, %cst_95 {dimension_numbers = #tpu.dot_dimension_numbers<[1], [0], [0], [1], [0, 0, 1, 1], [], []>} : vector<16x128xf32>, vector<128x64xf32>, vector<16x64xf32> -> vector<16x64xf32>
    %175 = vector.broadcast %82 : vector<1x64xf32> to vector<16x64xf32>
    %176 = arith.addf %174, %175 : vector<16x64xf32>
    %cst_96 = arith.constant 0.000000e+00 : f32
    %177 = vector.broadcast %cst_96 : f32 to vector<16x64xf32>
    %178 = arith.subf %177, %176 : vector<16x64xf32>
    %179 = math.exp %178 : vector<16x64xf32>
    %cst_97 = arith.constant 1.000000e+00 : f32
    %180 = vector.broadcast %cst_97 : f32 to vector<16x64xf32>
    %181 = arith.addf %180, %179 : vector<16x64xf32>
    %182 = arith.divf %176, %181 : vector<16x64xf32>
    %cst_98 = arith.constant dense<0.000000e+00> : vector<16x64xf32>
    %183 = tpu.matmul %182, %84, %cst_98 {dimension_numbers = #tpu.dot_dimension_numbers<[1], [0], [0], [1], [0, 0, 1, 1], [], []>} : vector<16x64xf32>, vector<64x64xf32>, vector<16x64xf32> -> vector<16x64xf32>
    %184 = arith.addf %38, %183 : vector<16x64xf32>
    %185 = vector.broadcast %86 : vector<1x64xf32> to vector<16x64xf32>
    %186 = arith.addf %184, %185 : vector<16x64xf32>
    %c1 = arith.constant 1 : index
    %c0_99 = arith.constant 0 : index
    %c0_100 = arith.constant 0 : index
    %187 = vector.load %arg12[%c1, %c0_99, %c0_100] : memref<3x64x64xf32, #tpu.memory_space<vmem>>, vector<1x64x64xf32>
    %188 = vector.shape_cast %187 : vector<1x64x64xf32> to vector<64x64xf32>
    %c1_101 = arith.constant 1 : index
    %c0_102 = arith.constant 0 : index
    %c0_103 = arith.constant 0 : index
    %189 = vector.load %arg13[%c1_101, %c0_102, %c0_103] : memref<3x1x64xf32, #tpu.memory_space<vmem>>, vector<1x1x64xf32>
    %190 = vector.shape_cast %189 : vector<1x1x64xf32> to vector<1x64xf32>
    %c1_104 = arith.constant 1 : index
    %c0_105 = arith.constant 0 : index
    %c0_106 = arith.constant 0 : index
    %191 = vector.load %arg14[%c1_104, %c0_105, %c0_106] : memref<3x1x64xf32, #tpu.memory_space<vmem>>, vector<1x1x64xf32>
    %192 = vector.shape_cast %191 : vector<1x1x64xf32> to vector<1x64xf32>
    %c1_107 = arith.constant 1 : index
    %c0_108 = arith.constant 0 : index
    %c0_109 = arith.constant 0 : index
    %193 = vector.load %arg15[%c1_107, %c0_108, %c0_109] : memref<3x64x64xf32, #tpu.memory_space<vmem>>, vector<1x64x64xf32>
    %194 = vector.shape_cast %193 : vector<1x64x64xf32> to vector<64x64xf32>
    %c1_110 = arith.constant 1 : index
    %c0_111 = arith.constant 0 : index
    %c0_112 = arith.constant 0 : index
    %195 = vector.load %arg16[%c1_110, %c0_111, %c0_112] : memref<3x1x64xf32, #tpu.memory_space<vmem>>, vector<1x1x64xf32>
    %196 = vector.shape_cast %195 : vector<1x1x64xf32> to vector<1x64xf32>
    %c1_113 = arith.constant 1 : index
    %c0_114 = arith.constant 0 : index
    %c0_115 = arith.constant 0 : index
    %197 = vector.load %arg17[%c1_113, %c0_114, %c0_115] : memref<3x64x64xf32, #tpu.memory_space<vmem>>, vector<1x64x64xf32>
    %198 = vector.shape_cast %197 : vector<1x64x64xf32> to vector<64x64xf32>
    %c1_116 = arith.constant 1 : index
    %c0_117 = arith.constant 0 : index
    %c0_118 = arith.constant 0 : index
    %199 = vector.load %arg18[%c1_116, %c0_117, %c0_118] : memref<3x1x64xf32, #tpu.memory_space<vmem>>, vector<1x1x64xf32>
    %200 = vector.shape_cast %199 : vector<1x1x64xf32> to vector<1x64xf32>
    %c1_119 = arith.constant 1 : index
    %c0_120 = arith.constant 0 : index
    %c0_121 = arith.constant 0 : index
    %201 = vector.load %arg19[%c1_119, %c0_120, %c0_121] : memref<3x1x64xf32, #tpu.memory_space<vmem>>, vector<1x1x64xf32>
    %202 = vector.shape_cast %201 : vector<1x1x64xf32> to vector<1x64xf32>
    %c1_122 = arith.constant 1 : index
    %c0_123 = arith.constant 0 : index
    %c0_124 = arith.constant 0 : index
    %203 = vector.load %arg20[%c1_122, %c0_123, %c0_124] : memref<3x1x1xf32, #tpu.memory_space<vmem>>, vector<1x1x1xf32>
    %204 = vector.shape_cast %203 : vector<1x1x1xf32> to vector<1x1xf32>
    %c1_125 = arith.constant 1 : index
    %c0_126 = arith.constant 0 : index
    %c0_127 = arith.constant 0 : index
    %205 = vector.load %arg21[%c1_125, %c0_126, %c0_127] : memref<3x64x64xf32, #tpu.memory_space<vmem>>, vector<1x64x64xf32>
    %206 = vector.shape_cast %205 : vector<1x64x64xf32> to vector<64x64xf32>
    %c1_128 = arith.constant 1 : index
    %c0_129 = arith.constant 0 : index
    %c0_130 = arith.constant 0 : index
    %207 = vector.load %arg22[%c1_128, %c0_129, %c0_130] : memref<3x1x64xf32, #tpu.memory_space<vmem>>, vector<1x1x64xf32>
    %208 = vector.shape_cast %207 : vector<1x1x64xf32> to vector<1x64xf32>
    %c1_131 = arith.constant 1 : index
    %c0_132 = arith.constant 0 : index
    %c0_133 = arith.constant 0 : index
    %209 = vector.load %arg23[%c1_131, %c0_132, %c0_133] : memref<3x1x64xf32, #tpu.memory_space<vmem>>, vector<1x1x64xf32>
    %210 = vector.shape_cast %209 : vector<1x1x64xf32> to vector<1x64xf32>
    %c1_134 = arith.constant 1 : index
    %c0_135 = arith.constant 0 : index
    %c0_136 = arith.constant 0 : index
    %211 = vector.load %arg24[%c1_134, %c0_135, %c0_136] : memref<3x1x1xf32, #tpu.memory_space<vmem>>, vector<1x1x1xf32>
    %212 = vector.shape_cast %211 : vector<1x1x1xf32> to vector<1x1xf32>
    %c1_137 = arith.constant 1 : index
    %c0_138 = arith.constant 0 : index
    %c0_139 = arith.constant 0 : index
    %213 = vector.load %arg25[%c1_137, %c0_138, %c0_139] : memref<3x128x64xf32, #tpu.memory_space<vmem>>, vector<1x128x64xf32>
    %214 = vector.shape_cast %213 : vector<1x128x64xf32> to vector<128x64xf32>
    %c1_140 = arith.constant 1 : index
    %c0_141 = arith.constant 0 : index
    %c0_142 = arith.constant 0 : index
    %215 = vector.load %arg26[%c1_140, %c0_141, %c0_142] : memref<3x1x64xf32, #tpu.memory_space<vmem>>, vector<1x1x64xf32>
    %216 = vector.shape_cast %215 : vector<1x1x64xf32> to vector<1x64xf32>
    %c1_143 = arith.constant 1 : index
    %c0_144 = arith.constant 0 : index
    %c0_145 = arith.constant 0 : index
    %217 = vector.load %arg27[%c1_143, %c0_144, %c0_145] : memref<3x64x64xf32, #tpu.memory_space<vmem>>, vector<1x64x64xf32>
    %218 = vector.shape_cast %217 : vector<1x64x64xf32> to vector<64x64xf32>
    %c1_146 = arith.constant 1 : index
    %c0_147 = arith.constant 0 : index
    %c0_148 = arith.constant 0 : index
    %219 = vector.load %arg28[%c1_146, %c0_147, %c0_148] : memref<3x1x64xf32, #tpu.memory_space<vmem>>, vector<1x1x64xf32>
    %220 = vector.shape_cast %219 : vector<1x1x64xf32> to vector<1x64xf32>
    %221 = tpu.concatenate %172, %172, %172, %172 in 0 : vector<16x2xf32>, vector<16x2xf32>, vector<16x2xf32>, vector<16x2xf32> -> vector<64x2xf32>
    %222 = arith.subf %1, %221 : vector<64x2xf32>
    %223 = vector.broadcast %2 : vector<64x1xf32> to vector<64x2xf32>
    %224 = arith.mulf %222, %223 : vector<64x2xf32>
    %225 = arith.mulf %224, %224 : vector<64x2xf32>
    %cst_149 = arith.constant dense<0.000000e+00> : vector<64xf32>
    %226 = vector.multi_reduction <add>, %225, %cst_149 [1] : vector<64x2xf32> to vector<64xf32>
    %227 = vector.shape_cast %226 : vector<64xf32> to vector<64x1xf32>
    %228 = math.sqrt %227 : vector<64x1xf32>
    %cst_150 = arith.constant dense<0.000000e+00> : vector<16x64xf32>
    %229 = tpu.matmul %186, %188, %cst_150 {dimension_numbers = #tpu.dot_dimension_numbers<[1], [0], [0], [1], [0, 0, 1, 1], [], []>} : vector<16x64xf32>, vector<64x64xf32>, vector<16x64xf32> -> vector<16x64xf32>
    %230 = tpu.concatenate %229, %229, %229, %229 in 0 : vector<16x64xf32>, vector<16x64xf32>, vector<16x64xf32>, vector<16x64xf32> -> vector<64x64xf32>
    %231 = vector.broadcast %228 : vector<64x1xf32> to vector<64x64xf32>
    %232 = vector.broadcast %190 : vector<1x64xf32> to vector<64x64xf32>
    %233 = arith.mulf %231, %232 : vector<64x64xf32>
    %234 = arith.addf %230, %233 : vector<64x64xf32>
    %235 = vector.broadcast %192 : vector<1x64xf32> to vector<64x64xf32>
    %236 = arith.addf %234, %235 : vector<64x64xf32>
    %cst_151 = arith.constant 0.000000e+00 : f32
    %237 = vector.broadcast %cst_151 : f32 to vector<64x64xf32>
    %238 = arith.subf %237, %236 : vector<64x64xf32>
    %239 = math.exp %238 : vector<64x64xf32>
    %cst_152 = arith.constant 1.000000e+00 : f32
    %240 = vector.broadcast %cst_152 : f32 to vector<64x64xf32>
    %241 = arith.addf %240, %239 : vector<64x64xf32>
    %242 = arith.divf %236, %241 : vector<64x64xf32>
    %cst_153 = arith.constant dense<0.000000e+00> : vector<64x64xf32>
    %243 = tpu.matmul %242, %194, %cst_153 {dimension_numbers = #tpu.dot_dimension_numbers<[1], [0], [0], [1], [0, 0, 1, 1], [], []>} : vector<64x64xf32>, vector<64x64xf32>, vector<64x64xf32> -> vector<64x64xf32>
    %244 = vector.broadcast %196 : vector<1x64xf32> to vector<64x64xf32>
    %245 = arith.addf %243, %244 : vector<64x64xf32>
    %cst_154 = arith.constant 0.000000e+00 : f32
    %246 = vector.broadcast %cst_154 : f32 to vector<64x64xf32>
    %247 = arith.subf %246, %245 : vector<64x64xf32>
    %248 = math.exp %247 : vector<64x64xf32>
    %cst_155 = arith.constant 1.000000e+00 : f32
    %249 = vector.broadcast %cst_155 : f32 to vector<64x64xf32>
    %250 = arith.addf %249, %248 : vector<64x64xf32>
    %251 = arith.divf %245, %250 : vector<64x64xf32>
    %252 = vector.broadcast %2 : vector<64x1xf32> to vector<64x64xf32>
    %253 = arith.mulf %251, %252 : vector<64x64xf32>
    %cst_156 = arith.constant dense<0.000000e+00> : vector<64x64xf32>
    %254 = tpu.matmul %253, %198, %cst_156 {dimension_numbers = #tpu.dot_dimension_numbers<[1], [0], [0], [1], [0, 0, 1, 1], [], []>} : vector<64x64xf32>, vector<64x64xf32>, vector<64x64xf32> -> vector<64x64xf32>
    %255 = vector.broadcast %200 : vector<1x64xf32> to vector<64x64xf32>
    %256 = arith.addf %254, %255 : vector<64x64xf32>
    %cst_157 = arith.constant 0.000000e+00 : f32
    %257 = vector.broadcast %cst_157 : f32 to vector<64x64xf32>
    %258 = arith.subf %257, %256 : vector<64x64xf32>
    %259 = math.exp %258 : vector<64x64xf32>
    %cst_158 = arith.constant 1.000000e+00 : f32
    %260 = vector.broadcast %cst_158 : f32 to vector<64x64xf32>
    %261 = arith.addf %260, %259 : vector<64x64xf32>
    %262 = arith.divf %256, %261 : vector<64x64xf32>
    %263 = vector.broadcast %202 : vector<1x64xf32> to vector<64x64xf32>
    %264 = arith.mulf %262, %263 : vector<64x64xf32>
    %cst_159 = arith.constant dense<0.000000e+00> : vector<64xf32>
    %265 = vector.multi_reduction <add>, %264, %cst_159 [1] : vector<64x64xf32> to vector<64xf32>
    %266 = vector.shape_cast %265 : vector<64xf32> to vector<64x1xf32>
    %267 = vector.broadcast %204 : vector<1x1xf32> to vector<64x1xf32>
    %268 = arith.addf %266, %267 : vector<64x1xf32>
    %269 = vector.broadcast %268 : vector<64x1xf32> to vector<64x2xf32>
    %270 = arith.mulf %224, %269 : vector<64x2xf32>
    %271 = vector.extract_strided_slice %270 {offsets = [0, 0], sizes = [16, 2], strides = [1, 1]} : vector<64x2xf32> to vector<16x2xf32>
    %272 = vector.extract_strided_slice %253 {offsets = [0, 0], sizes = [16, 64], strides = [1, 1]} : vector<64x64xf32> to vector<16x64xf32>
    %273 = vector.extract_strided_slice %270 {offsets = [16, 0], sizes = [16, 2], strides = [1, 1]} : vector<64x2xf32> to vector<16x2xf32>
    %274 = arith.addf %271, %273 : vector<16x2xf32>
    %275 = vector.extract_strided_slice %253 {offsets = [16, 0], sizes = [16, 64], strides = [1, 1]} : vector<64x64xf32> to vector<16x64xf32>
    %276 = arith.addf %272, %275 : vector<16x64xf32>
    %277 = vector.extract_strided_slice %270 {offsets = [32, 0], sizes = [16, 2], strides = [1, 1]} : vector<64x2xf32> to vector<16x2xf32>
    %278 = arith.addf %274, %277 : vector<16x2xf32>
    %279 = vector.extract_strided_slice %253 {offsets = [32, 0], sizes = [16, 64], strides = [1, 1]} : vector<64x64xf32> to vector<16x64xf32>
    %280 = arith.addf %276, %279 : vector<16x64xf32>
    %281 = vector.extract_strided_slice %270 {offsets = [48, 0], sizes = [16, 2], strides = [1, 1]} : vector<64x2xf32> to vector<16x2xf32>
    %282 = arith.addf %278, %281 : vector<16x2xf32>
    %283 = vector.extract_strided_slice %253 {offsets = [48, 0], sizes = [16, 64], strides = [1, 1]} : vector<64x64xf32> to vector<16x64xf32>
    %284 = arith.addf %280, %283 : vector<16x64xf32>
    %285 = vector.broadcast %52 : vector<16x1xf32> to vector<16x2xf32>
    %286 = arith.mulf %285, %282 : vector<16x2xf32>
    %cst_160 = arith.constant dense<0.000000e+00> : vector<16x64xf32>
    %287 = tpu.matmul %186, %206, %cst_160 {dimension_numbers = #tpu.dot_dimension_numbers<[1], [0], [0], [1], [0, 0, 1, 1], [], []>} : vector<16x64xf32>, vector<64x64xf32>, vector<16x64xf32> -> vector<16x64xf32>
    %288 = vector.broadcast %208 : vector<1x64xf32> to vector<16x64xf32>
    %289 = arith.addf %287, %288 : vector<16x64xf32>
    %cst_161 = arith.constant 0.000000e+00 : f32
    %290 = vector.broadcast %cst_161 : f32 to vector<16x64xf32>
    %291 = arith.subf %290, %289 : vector<16x64xf32>
    %292 = math.exp %291 : vector<16x64xf32>
    %cst_162 = arith.constant 1.000000e+00 : f32
    %293 = vector.broadcast %cst_162 : f32 to vector<16x64xf32>
    %294 = arith.addf %293, %292 : vector<16x64xf32>
    %295 = arith.divf %289, %294 : vector<16x64xf32>
    %296 = vector.broadcast %210 : vector<1x64xf32> to vector<16x64xf32>
    %297 = arith.mulf %295, %296 : vector<16x64xf32>
    %cst_163 = arith.constant dense<0.000000e+00> : vector<16xf32>
    %298 = vector.multi_reduction <add>, %297, %cst_163 [1] : vector<16x64xf32> to vector<16xf32>
    %299 = vector.shape_cast %298 : vector<16xf32> to vector<16x1xf32>
    %300 = vector.broadcast %212 : vector<1x1xf32> to vector<16x1xf32>
    %301 = arith.addf %299, %300 : vector<16x1xf32>
    %302 = vector.broadcast %301 : vector<16x1xf32> to vector<16x2xf32>
    %303 = arith.mulf %302, %39 : vector<16x2xf32>
    %304 = arith.addf %303, %286 : vector<16x2xf32>
    %305 = arith.addf %171, %304 : vector<16x2xf32>
    %306 = arith.addf %172, %305 : vector<16x2xf32>
    %307 = tpu.concatenate %186, %284 in 1 : vector<16x64xf32>, vector<16x64xf32> -> vector<16x128xf32>
    %cst_164 = arith.constant dense<0.000000e+00> : vector<16x64xf32>
    %308 = tpu.matmul %307, %214, %cst_164 {dimension_numbers = #tpu.dot_dimension_numbers<[1], [0], [0], [1], [0, 0, 1, 1], [], []>} : vector<16x128xf32>, vector<128x64xf32>, vector<16x64xf32> -> vector<16x64xf32>
    %309 = vector.broadcast %216 : vector<1x64xf32> to vector<16x64xf32>
    %310 = arith.addf %308, %309 : vector<16x64xf32>
    %cst_165 = arith.constant 0.000000e+00 : f32
    %311 = vector.broadcast %cst_165 : f32 to vector<16x64xf32>
    %312 = arith.subf %311, %310 : vector<16x64xf32>
    %313 = math.exp %312 : vector<16x64xf32>
    %cst_166 = arith.constant 1.000000e+00 : f32
    %314 = vector.broadcast %cst_166 : f32 to vector<16x64xf32>
    %315 = arith.addf %314, %313 : vector<16x64xf32>
    %316 = arith.divf %310, %315 : vector<16x64xf32>
    %cst_167 = arith.constant dense<0.000000e+00> : vector<16x64xf32>
    %317 = tpu.matmul %316, %218, %cst_167 {dimension_numbers = #tpu.dot_dimension_numbers<[1], [0], [0], [1], [0, 0, 1, 1], [], []>} : vector<16x64xf32>, vector<64x64xf32>, vector<16x64xf32> -> vector<16x64xf32>
    %318 = arith.addf %186, %317 : vector<16x64xf32>
    %319 = vector.broadcast %220 : vector<1x64xf32> to vector<16x64xf32>
    %320 = arith.addf %318, %319 : vector<16x64xf32>
    %c2 = arith.constant 2 : index
    %c0_168 = arith.constant 0 : index
    %c0_169 = arith.constant 0 : index
    %321 = vector.load %arg12[%c2, %c0_168, %c0_169] : memref<3x64x64xf32, #tpu.memory_space<vmem>>, vector<1x64x64xf32>
    %322 = vector.shape_cast %321 : vector<1x64x64xf32> to vector<64x64xf32>
    %c2_170 = arith.constant 2 : index
    %c0_171 = arith.constant 0 : index
    %c0_172 = arith.constant 0 : index
    %323 = vector.load %arg13[%c2_170, %c0_171, %c0_172] : memref<3x1x64xf32, #tpu.memory_space<vmem>>, vector<1x1x64xf32>
    %324 = vector.shape_cast %323 : vector<1x1x64xf32> to vector<1x64xf32>
    %c2_173 = arith.constant 2 : index
    %c0_174 = arith.constant 0 : index
    %c0_175 = arith.constant 0 : index
    %325 = vector.load %arg14[%c2_173, %c0_174, %c0_175] : memref<3x1x64xf32, #tpu.memory_space<vmem>>, vector<1x1x64xf32>
    %326 = vector.shape_cast %325 : vector<1x1x64xf32> to vector<1x64xf32>
    %c2_176 = arith.constant 2 : index
    %c0_177 = arith.constant 0 : index
    %c0_178 = arith.constant 0 : index
    %327 = vector.load %arg15[%c2_176, %c0_177, %c0_178] : memref<3x64x64xf32, #tpu.memory_space<vmem>>, vector<1x64x64xf32>
    %328 = vector.shape_cast %327 : vector<1x64x64xf32> to vector<64x64xf32>
    %c2_179 = arith.constant 2 : index
    %c0_180 = arith.constant 0 : index
    %c0_181 = arith.constant 0 : index
    %329 = vector.load %arg16[%c2_179, %c0_180, %c0_181] : memref<3x1x64xf32, #tpu.memory_space<vmem>>, vector<1x1x64xf32>
    %330 = vector.shape_cast %329 : vector<1x1x64xf32> to vector<1x64xf32>
    %c2_182 = arith.constant 2 : index
    %c0_183 = arith.constant 0 : index
    %c0_184 = arith.constant 0 : index
    %331 = vector.load %arg25[%c2_182, %c0_183, %c0_184] : memref<3x128x64xf32, #tpu.memory_space<vmem>>, vector<1x128x64xf32>
    %332 = vector.shape_cast %331 : vector<1x128x64xf32> to vector<128x64xf32>
    %c2_185 = arith.constant 2 : index
    %c0_186 = arith.constant 0 : index
    %c0_187 = arith.constant 0 : index
    %333 = vector.load %arg26[%c2_185, %c0_186, %c0_187] : memref<3x1x64xf32, #tpu.memory_space<vmem>>, vector<1x1x64xf32>
    %334 = vector.shape_cast %333 : vector<1x1x64xf32> to vector<1x64xf32>
    %c2_188 = arith.constant 2 : index
    %c0_189 = arith.constant 0 : index
    %c0_190 = arith.constant 0 : index
    %335 = vector.load %arg27[%c2_188, %c0_189, %c0_190] : memref<3x64x64xf32, #tpu.memory_space<vmem>>, vector<1x64x64xf32>
    %336 = vector.shape_cast %335 : vector<1x64x64xf32> to vector<64x64xf32>
    %c2_191 = arith.constant 2 : index
    %c0_192 = arith.constant 0 : index
    %c0_193 = arith.constant 0 : index
    %337 = vector.load %arg28[%c2_191, %c0_192, %c0_193] : memref<3x1x64xf32, #tpu.memory_space<vmem>>, vector<1x1x64xf32>
    %338 = vector.shape_cast %337 : vector<1x1x64xf32> to vector<1x64xf32>
    %339 = tpu.concatenate %306, %306, %306, %306 in 0 : vector<16x2xf32>, vector<16x2xf32>, vector<16x2xf32>, vector<16x2xf32> -> vector<64x2xf32>
    %340 = arith.subf %1, %339 : vector<64x2xf32>
    %341 = vector.broadcast %2 : vector<64x1xf32> to vector<64x2xf32>
    %342 = arith.mulf %340, %341 : vector<64x2xf32>
    %343 = arith.mulf %342, %342 : vector<64x2xf32>
    %cst_194 = arith.constant dense<0.000000e+00> : vector<64xf32>
    %344 = vector.multi_reduction <add>, %343, %cst_194 [1] : vector<64x2xf32> to vector<64xf32>
    %345 = vector.shape_cast %344 : vector<64xf32> to vector<64x1xf32>
    %346 = math.sqrt %345 : vector<64x1xf32>
    %cst_195 = arith.constant dense<0.000000e+00> : vector<16x64xf32>
    %347 = tpu.matmul %320, %322, %cst_195 {dimension_numbers = #tpu.dot_dimension_numbers<[1], [0], [0], [1], [0, 0, 1, 1], [], []>} : vector<16x64xf32>, vector<64x64xf32>, vector<16x64xf32> -> vector<16x64xf32>
    %348 = tpu.concatenate %347, %347, %347, %347 in 0 : vector<16x64xf32>, vector<16x64xf32>, vector<16x64xf32>, vector<16x64xf32> -> vector<64x64xf32>
    %349 = vector.broadcast %346 : vector<64x1xf32> to vector<64x64xf32>
    %350 = vector.broadcast %324 : vector<1x64xf32> to vector<64x64xf32>
    %351 = arith.mulf %349, %350 : vector<64x64xf32>
    %352 = arith.addf %348, %351 : vector<64x64xf32>
    %353 = vector.broadcast %326 : vector<1x64xf32> to vector<64x64xf32>
    %354 = arith.addf %352, %353 : vector<64x64xf32>
    %cst_196 = arith.constant 0.000000e+00 : f32
    %355 = vector.broadcast %cst_196 : f32 to vector<64x64xf32>
    %356 = arith.subf %355, %354 : vector<64x64xf32>
    %357 = math.exp %356 : vector<64x64xf32>
    %cst_197 = arith.constant 1.000000e+00 : f32
    %358 = vector.broadcast %cst_197 : f32 to vector<64x64xf32>
    %359 = arith.addf %358, %357 : vector<64x64xf32>
    %360 = arith.divf %354, %359 : vector<64x64xf32>
    %cst_198 = arith.constant dense<0.000000e+00> : vector<64x64xf32>
    %361 = tpu.matmul %360, %328, %cst_198 {dimension_numbers = #tpu.dot_dimension_numbers<[1], [0], [0], [1], [0, 0, 1, 1], [], []>} : vector<64x64xf32>, vector<64x64xf32>, vector<64x64xf32> -> vector<64x64xf32>
    %362 = vector.broadcast %330 : vector<1x64xf32> to vector<64x64xf32>
    %363 = arith.addf %361, %362 : vector<64x64xf32>
    %cst_199 = arith.constant 0.000000e+00 : f32
    %364 = vector.broadcast %cst_199 : f32 to vector<64x64xf32>
    %365 = arith.subf %364, %363 : vector<64x64xf32>
    %366 = math.exp %365 : vector<64x64xf32>
    %cst_200 = arith.constant 1.000000e+00 : f32
    %367 = vector.broadcast %cst_200 : f32 to vector<64x64xf32>
    %368 = arith.addf %367, %366 : vector<64x64xf32>
    %369 = arith.divf %363, %368 : vector<64x64xf32>
    %370 = vector.broadcast %2 : vector<64x1xf32> to vector<64x64xf32>
    %371 = arith.mulf %369, %370 : vector<64x64xf32>
    %372 = vector.extract_strided_slice %371 {offsets = [0, 0], sizes = [16, 64], strides = [1, 1]} : vector<64x64xf32> to vector<16x64xf32>
    %373 = vector.extract_strided_slice %371 {offsets = [16, 0], sizes = [16, 64], strides = [1, 1]} : vector<64x64xf32> to vector<16x64xf32>
    %374 = arith.addf %372, %373 : vector<16x64xf32>
    %375 = vector.extract_strided_slice %371 {offsets = [32, 0], sizes = [16, 64], strides = [1, 1]} : vector<64x64xf32> to vector<16x64xf32>
    %376 = arith.addf %374, %375 : vector<16x64xf32>
    %377 = vector.extract_strided_slice %371 {offsets = [48, 0], sizes = [16, 64], strides = [1, 1]} : vector<64x64xf32> to vector<16x64xf32>
    %378 = arith.addf %376, %377 : vector<16x64xf32>
    %379 = tpu.concatenate %320, %378 in 1 : vector<16x64xf32>, vector<16x64xf32> -> vector<16x128xf32>
    %cst_201 = arith.constant dense<0.000000e+00> : vector<16x64xf32>
    %380 = tpu.matmul %379, %332, %cst_201 {dimension_numbers = #tpu.dot_dimension_numbers<[1], [0], [0], [1], [0, 0, 1, 1], [], []>} : vector<16x128xf32>, vector<128x64xf32>, vector<16x64xf32> -> vector<16x64xf32>
    %381 = vector.broadcast %334 : vector<1x64xf32> to vector<16x64xf32>
    %382 = arith.addf %380, %381 : vector<16x64xf32>
    %cst_202 = arith.constant 0.000000e+00 : f32
    %383 = vector.broadcast %cst_202 : f32 to vector<16x64xf32>
    %384 = arith.subf %383, %382 : vector<16x64xf32>
    %385 = math.exp %384 : vector<16x64xf32>
    %cst_203 = arith.constant 1.000000e+00 : f32
    %386 = vector.broadcast %cst_203 : f32 to vector<16x64xf32>
    %387 = arith.addf %386, %385 : vector<16x64xf32>
    %388 = arith.divf %382, %387 : vector<16x64xf32>
    %cst_204 = arith.constant dense<0.000000e+00> : vector<16x64xf32>
    %389 = tpu.matmul %388, %336, %cst_204 {dimension_numbers = #tpu.dot_dimension_numbers<[1], [0], [0], [1], [0, 0, 1, 1], [], []>} : vector<16x64xf32>, vector<64x64xf32>, vector<16x64xf32> -> vector<16x64xf32>
    %390 = arith.addf %320, %389 : vector<16x64xf32>
    %391 = vector.broadcast %338 : vector<1x64xf32> to vector<16x64xf32>
    %392 = arith.addf %390, %391 : vector<16x64xf32>
    %c0_205 = arith.constant 0 : index
    %c0_206 = arith.constant 0 : index
    %393 = vector.load %arg29[%c0_205, %c0_206] : memref<16x64xf32, #tpu.memory_space<vmem>>, vector<16x64xf32>
    tpu.vector_store %arg29[%c0_205, %c0_206], %392 {strides = array<i32>} : memref<16x64xf32, #tpu.memory_space<vmem>>, vector<16x64xf32>,
    return
  }
}

</mosaic_0001>

<llo_original>
// kernel: tpu_custom_call.1
$region0: #{tpu_custom_call.1}
  #allocation0 [shape = 'u32[]', space=smem, size = 0x4, offset = 0x4, fixed_abs, tag = 'smem constant byte address 0x4 - core index']
  #allocation1 [shape = 'u32[144,128]{1,0:T(1,128)}', space=vmem, size = 0x12000, scoped, tag = 'internal scratch']
  %s0 = inlined_call_operand.smem [shape: u32[30], index: -1, kind: input, shape index: {}]
  %s1 = sld [smem:[%s0]]
  %s2 = scalar_lea.smem %s0, 1
  %s3 = sld [smem:[%s2]]
  %s4 = scalar_lea.smem %s0, 2
  %s5 = sld [smem:[%s4]]
  %s6 = scalar_lea.smem %s0, 3
  %s7 = sld [smem:[%s6]]
  %s8 = scalar_lea.smem %s0, 4
  %s9 = sld [smem:[%s8]]
  %s10 = scalar_lea.smem %s0, 5
  %s11 = sld [smem:[%s10]]
  %s12 = scalar_lea.smem %s0, 6
  %s13 = sld [smem:[%s12]]
  %s14 = scalar_lea.smem %s0, 7
  %s15 = sld [smem:[%s14]]
  %s16 = scalar_lea.smem %s0, 8
  %s17 = sld [smem:[%s16]]
  %s18 = scalar_lea.smem %s0, 9
  %s19 = sld [smem:[%s18]]
  %s20 = scalar_lea.smem %s0, 10
  %s21 = sld [smem:[%s20]]
  %s22 = scalar_lea.smem %s0, 11
  %s23 = sld [smem:[%s22]]
  %s24 = scalar_lea.smem %s0, 12
  %s25 = sld [smem:[%s24]]
  %s26 = scalar_lea.smem %s0, 13
  %s27 = sld [smem:[%s26]]
  %s28 = scalar_lea.smem %s0, 14
  %s29 = sld [smem:[%s28]]
  %s30 = scalar_lea.smem %s0, 15
  %s31 = sld [smem:[%s30]]
  %s32 = scalar_lea.smem %s0, 16
  %s33 = sld [smem:[%s32]]
  %s34 = scalar_lea.smem %s0, 17
  %s35 = sld [smem:[%s34]]
  %s36 = scalar_lea.smem %s0, 18
  %s37 = sld [smem:[%s36]]
  %s38 = scalar_lea.smem %s0, 19
  %s39 = sld [smem:[%s38]]
  %s40 = scalar_lea.smem %s0, 20
  %s41 = sld [smem:[%s40]]
  %s42 = scalar_lea.smem %s0, 21
  %s43 = sld [smem:[%s42]]
  %s44 = scalar_lea.smem %s0, 22
  %s45 = sld [smem:[%s44]]
  %s46 = scalar_lea.smem %s0, 23
  %s47 = sld [smem:[%s46]]
  %s48 = scalar_lea.smem %s0, 24
  %s49 = sld [smem:[%s48]]
  %s50 = scalar_lea.smem %s0, 25
  %s51 = sld [smem:[%s50]]
  %s52 = scalar_lea.smem %s0, 26
  %s53 = sld [smem:[%s52]]
  %s54 = scalar_lea.smem %s0, 27
  %s55 = sld [smem:[%s54]]
  %s56 = scalar_lea.smem %s0, 28
  %s57 = sld [smem:[%s56]]
  %s58 = scalar_lea.smem %s0, 29
  %s59 = sld [smem:[%s58]]
  %s60 = sld [smem:[#allocation0]]
  $region166: #{tpu_custom_call.1} parent=0
    _
  %s62 = ssub.s32 1, %s60
  %s63 = scalar_select 0, %s62, %s60
  $region1: #{tpu_custom_call.1} parent=0
    #allocation2 [shape = 'u8[512]{0}', space=vmem, size = 0x400, scoped, tag = 'input window, operand 4, single buffered']
    #allocation3 [shape = 's32[1]{0}', space=sflag, size = 0x4, scoped, tag = 'scoped memory for tpu_custom_call.1']
    #allocation4 [shape = 's32[1]{0}', space=sflag, size = 0x4, scoped, tag = 'scoped memory for tpu_custom_call.1']
    #allocation5 [shape = 'u8[512]{0}', space=vmem, size = 0x400, scoped, tag = 'input window, operand 5, single buffered']
    #allocation6 [shape = 's32[1]{0}', space=sflag, size = 0x4, scoped, tag = 'scoped memory for tpu_custom_call.1']
    #allocation7 [shape = 'u8[512]{0}', space=vmem, size = 0x400, scoped, tag = 'input window, operand 6, single buffered']
    #allocation8 [shape = 'u8[512]{0}', space=vmem, size = 0x400, scoped, tag = 'input window, operand 7, single buffered']
    #allocation9 [shape = 's32[1]{0}', space=sflag, size = 0x4, scoped, tag = 'scoped memory for tpu_custom_call.1']
    #allocation10 [shape = 'u8[512]{0}', space=vmem, size = 0x400, scoped, tag = 'input window, operand 11, single buffered']
    #allocation11 [shape = 'u8[98304]{0}', space=vmem, size = 0x18000, scoped, tag = 'input window, operand 21, single buffered']
    #allocation12 [shape = 's32[1]{0}', space=sflag, size = 0x4, scoped, tag = 'scoped memory for tpu_custom_call.1']
    #allocation13 [shape = 'u8[1536]{0}', space=vmem, size = 0x800, scoped, tag = 'input window, operand 22, single buffered']
    #allocation14 [shape = 'u8[1536]{0}', space=vmem, size = 0x800, scoped, tag = 'input window, operand 23, single buffered']
    #allocation15 [shape = 's32[1]{0}', space=sflag, size = 0x4, scoped, tag = 'scoped memory for tpu_custom_call.1']
    #allocation16 [shape = 'u8[98304]{0}', space=vmem, size = 0x18000, scoped, tag = 'input window, operand 27, single buffered']
    #allocation17 [shape = 'u8[1536]{0}', space=vmem, size = 0x800, scoped, tag = 'input window, operand 28, single buffered']
    #allocation18 [shape = 's32[1]{0}', space=sflag, size = 0x4, scoped, tag = 'scoped memory for tpu_custom_call.1']
    #allocation19 [shape = 'u8[8192]{0}', space=vmem, size = 0x2000, scoped, tag = 'output window, operand 0, single buffered']
    %64 = vsyncpa [#allocation3], 0
    %65 = vsyncpa [#allocation6], 0
    %66 = vsyncpa [#allocation9], 0
    %67 = vsyncpa [#allocation12], 0
    %68 = vsyncpa [#allocation15], 0
    %69 = vsyncpa [#allocation18], 0
    %70 = vsyncpa [#allocation4], 0
    // Predicated region
    $region2: #{tpu_custom_call.1} parent=1 // pred_check
      _
    $region3: #{tpu_custom_call.1} parent=1 // pred_check_branch
      %72 = sbr.rel (0) target = $region5
    $region4: #{tpu_custom_call.1} parent=1 // pred_region
      _
    $region5: #{tpu_custom_call.1} parent=1 // pred_fallthru
      _
    // Predicated region
    $region6: #{tpu_custom_call.1} parent=1 // pred_check
      _
    $region7: #{tpu_custom_call.1} parent=1 // pred_check_branch
      %74 = sbr.rel (0) target = $region9
    $region8: #{tpu_custom_call.1} parent=1 // pred_region
      _
    $region9: #{tpu_custom_call.1} parent=1 // pred_fallthru
      _
    // Predicated region
    $region10: #{tpu_custom_call.1} parent=1 // pred_check
      _
    $region11: #{tpu_custom_call.1} parent=1 // pred_check_branch
      %76 = sbr.rel (0) target = $region13
    $region12: #{tpu_custom_call.1} parent=1 // pred_region
      _
    $region13: #{tpu_custom_call.1} parent=1 // pred_fallthru
      _
    // Predicated region
    $region14: #{tpu_custom_call.1} parent=1 // pred_check
      _
    $region15: #{tpu_custom_call.1} parent=1 // pred_check_branch
      %78 = sbr.rel (0) target = $region17
    $region16: #{tpu_custom_call.1} parent=1 // pred_region
      _
    $region17: #{tpu_custom_call.1} parent=1 // pred_fallthru
      _
    // Predicated region
    $region18: #{tpu_custom_call.1} parent=1 // pred_check
      _
    $region19: #{tpu_custom_call.1} parent=1 // pred_check_branch
      %80 = sbr.rel (0) target = $region21
    $region20: #{tpu_custom_call.1} parent=1 // pred_region
      %s82 = ssub.s32 16, 16
      %83 = vsyncadd [#allocation3], %s82
      %s85 = sshll.u32 [#allocation2], 4
      %s86 = int_to_ptr.vmem [resolvable:$true] %s85
      %88 = dma.hbm_to_vmem [thread:$0]  %s9, 16, %s86, [#allocation3]
    $region21: #{tpu_custom_call.1} parent=1 // pred_fallthru
      _
    // Predicated region
    $region22: #{tpu_custom_call.1} parent=1 // pred_check
      _
    $region23: #{tpu_custom_call.1} parent=1 // pred_check_branch
      %90 = sbr.rel (0) target = $region25
    $region24: #{tpu_custom_call.1} parent=1 // pred_region
      %s92 = ssub.s32 16, 16
      %93 = vsyncadd [#allocation6], %s92
      %s95 = sshll.u32 [#allocation5], 4
      %s96 = int_to_ptr.vmem [resolvable:$true] %s95
      %98 = dma.hbm_to_vmem [thread:$0]  %s11, 16, %s96, [#allocation6]
    $region25: #{tpu_custom_call.1} parent=1 // pred_fallthru
      _
    // Predicated region
    $region26: #{tpu_custom_call.1} parent=1 // pred_check
      _
    $region27: #{tpu_custom_call.1} parent=1 // pred_check_branch
      %100 = sbr.rel (0) target = $region29
    $region28: #{tpu_custom_call.1} parent=1 // pred_region
      %s102 = ssub.s32 16, 16
      %103 = vsyncadd [#allocation6], %s102
      %s105 = sshll.u32 [#allocation7], 4
      %s106 = int_to_ptr.vmem [resolvable:$true] %s105
      %108 = dma.hbm_to_vmem [thread:$0]  %s13, 16, %s106, [#allocation6]
    $region29: #{tpu_custom_call.1} parent=1 // pred_fallthru
      _
    // Predicated region
    $region30: #{tpu_custom_call.1} parent=1 // pred_check
      _
    $region31: #{tpu_custom_call.1} parent=1 // pred_check_branch
      %110 = sbr.rel (0) target = $region33
    $region32: #{tpu_custom_call.1} parent=1 // pred_region
      %s112 = ssub.s32 16, 16
      %113 = vsyncadd [#allocation9], %s112
      %s115 = sshll.u32 [#allocation8], 4
      %s116 = int_to_ptr.vmem [resolvable:$true] %s115
      %118 = dma.hbm_to_vmem [thread:$0]  %s15, 16, %s116, [#allocation9]
    $region33: #{tpu_custom_call.1} parent=1 // pred_fallthru
      _
    // Predicated region
    $region34: #{tpu_custom_call.1} parent=1 // pred_check
      _
    $region35: #{tpu_custom_call.1} parent=1 // pred_check_branch
      %120 = sbr.rel (0) target = $region37
    $region36: #{tpu_custom_call.1} parent=1 // pred_region
      _
    $region37: #{tpu_custom_call.1} parent=1 // pred_fallthru
      _
    // Predicated region
    $region38: #{tpu_custom_call.1} parent=1 // pred_check
      _
    $region39: #{tpu_custom_call.1} parent=1 // pred_check_branch
      %122 = sbr.rel (0) target = $region41
    $region40: #{tpu_custom_call.1} parent=1 // pred_region
      _
    $region41: #{tpu_custom_call.1} parent=1 // pred_fallthru
      _
    // Predicated region
    $region42: #{tpu_custom_call.1} parent=1 // pred_check
      _
    $region43: #{tpu_custom_call.1} parent=1 // pred_check_branch
      %124 = sbr.rel (0) target = $region45
    $region44: #{tpu_custom_call.1} parent=1 // pred_region
      _
    $region45: #{tpu_custom_call.1} parent=1 // pred_fallthru
      _
    // Predicated region
    $region46: #{tpu_custom_call.1} parent=1 // pred_check
      _
    $region47: #{tpu_custom_call.1} parent=1 // pred_check_branch
      %126 = sbr.rel (0) target = $region49
    $region48: #{tpu_custom_call.1} parent=1 // pred_region
      %s128 = ssub.s32 16, 16
      %129 = vsyncadd [#allocation9], %s128
      %s131 = sshll.u32 [#allocation10], 4
      %s132 = int_to_ptr.vmem [resolvable:$true] %s131
      %134 = dma.hbm_to_vmem [thread:$0]  %s23, 16, %s132, [#allocation9]
    $region49: #{tpu_custom_call.1} parent=1 // pred_fallthru
      _
    // Predicated region
    $region50: #{tpu_custom_call.1} parent=1 // pred_check
      _
    $region51: #{tpu_custom_call.1} parent=1 // pred_check_branch
      %136 = sbr.rel (0) target = $region53
    $region52: #{tpu_custom_call.1} parent=1 // pred_region
      _
    $region53: #{tpu_custom_call.1} parent=1 // pred_fallthru
      _
    // Predicated region
    $region54: #{tpu_custom_call.1} parent=1 // pred_check
      _
    $region55: #{tpu_custom_call.1} parent=1 // pred_check_branch
      %138 = sbr.rel (0) target = $region57
    $region56: #{tpu_custom_call.1} parent=1 // pred_region
      _
    $region57: #{tpu_custom_call.1} parent=1 // pred_fallthru
      _
    // Predicated region
    $region58: #{tpu_custom_call.1} parent=1 // pred_check
      _
    $region59: #{tpu_custom_call.1} parent=1 // pred_check_branch
      %140 = sbr.rel (0) target = $region61
    $region60: #{tpu_custom_call.1} parent=1 // pred_region
      _
    $region61: #{tpu_custom_call.1} parent=1 // pred_fallthru
      _
    // Predicated region
    $region62: #{tpu_custom_call.1} parent=1 // pred_check
      _
    $region63: #{tpu_custom_call.1} parent=1 // pred_check_branch
      %142 = sbr.rel (0) target = $region65
    $region64: #{tpu_custom_call.1} parent=1 // pred_region
      _
    $region65: #{tpu_custom_call.1} parent=1 // pred_fallthru
      _
    // Predicated region
    $region66: #{tpu_custom_call.1} parent=1 // pred_check
      _
    $region67: #{tpu_custom_call.1} parent=1 // pred_check_branch
      %144 = sbr.rel (0) target = $region69
    $region68: #{tpu_custom_call.1} parent=1 // pred_region
      _
    $region69: #{tpu_custom_call.1} parent=1 // pred_fallthru
      _
    // Predicated region
    $region70: #{tpu_custom_call.1} parent=1 // pred_check
      _
    $region71: #{tpu_custom_call.1} parent=1 // pred_check_branch
      %146 = sbr.rel (0) target = $region73
    $region72: #{tpu_custom_call.1} parent=1 // pred_region
      _
    $region73: #{tpu_custom_call.1} parent=1 // pred_fallthru
      _
    // Predicated region
    $region74: #{tpu_custom_call.1} parent=1 // pred_check
      _
    $region75: #{tpu_custom_call.1} parent=1 // pred_check_branch
      %148 = sbr.rel (0) target = $region77
    $region76: #{tpu_custom_call.1} parent=1 // pred_region
      _
    $region77: #{tpu_custom_call.1} parent=1 // pred_fallthru
      _
    // Predicated region
    $region78: #{tpu_custom_call.1} parent=1 // pred_check
      _
    $region79: #{tpu_custom_call.1} parent=1 // pred_check_branch
      %150 = sbr.rel (0) target = $region81
    $region80: #{tpu_custom_call.1} parent=1 // pred_region
      _
    $region81: #{tpu_custom_call.1} parent=1 // pred_fallthru
      _
    // Predicated region
    $region82: #{tpu_custom_call.1} parent=1 // pred_check
      _
    $region83: #{tpu_custom_call.1} parent=1 // pred_check_branch
      %152 = sbr.rel (0) target = $region85
    $region84: #{tpu_custom_call.1} parent=1 // pred_region
      _
    $region85: #{tpu_custom_call.1} parent=1 // pred_fallthru
      _
    // Predicated region
    $region86: #{tpu_custom_call.1} parent=1 // pred_check
      _
    $region87: #{tpu_custom_call.1} parent=1 // pred_check_branch
      %154 = sbr.rel (0) target = $region89
    $region88: #{tpu_custom_call.1} parent=1 // pred_region
      %s156 = ssub.s32 3072, 3072
      %157 = vsyncadd [#allocation12], %s156
      %s158 = sshll.u32 [#allocation11], 4
      %s159 = int_to_ptr.vmem [resolvable:$true] %s158
      %164 = dma.hbm_to_vmem [thread:$0]  %s43, 3072, %s159, [#allocation12], 128, 128, 8
    $region89: #{tpu_custom_call.1} parent=1 // pred_fallthru
      _
    // Predicated region
    $region90: #{tpu_custom_call.1} parent=1 // pred_check
      _
    $region91: #{tpu_custom_call.1} parent=1 // pred_check_branch
      %166 = sbr.rel (0) target = $region93
    $region92: #{tpu_custom_call.1} parent=1 // pred_region
      %s168 = ssub.s32 48, 48
      %169 = vsyncadd [#allocation12], %s168
      %s170 = sshll.u32 [#allocation13], 4
      %s171 = int_to_ptr.vmem [resolvable:$true] %s170
      %176 = dma.hbm_to_vmem [thread:$0]  %s45, 48, %s171, [#allocation12], 16, 16, 1
    $region93: #{tpu_custom_call.1} parent=1 // pred_fallthru
      _
    // Predicated region
    $region94: #{tpu_custom_call.1} parent=1 // pred_check
      _
    $region95: #{tpu_custom_call.1} parent=1 // pred_check_branch
      %178 = sbr.rel (0) target = $region97
    $region96: #{tpu_custom_call.1} parent=1 // pred_region
      %s180 = ssub.s32 48, 48
      %181 = vsyncadd [#allocation15], %s180
      %s182 = sshll.u32 [#allocation14], 4
      %s183 = int_to_ptr.vmem [resolvable:$true] %s182
      %188 = dma.hbm_to_vmem [thread:$0]  %s47, 48, %s183, [#allocation15], 16, 16, 1
    $region97: #{tpu_custom_call.1} parent=1 // pred_fallthru
      _
    // Predicated region
    $region98: #{tpu_custom_call.1} parent=1 // pred_check
      _
    $region99: #{tpu_custom_call.1} parent=1 // pred_check_branch
      %190 = sbr.rel (0) target = $region101
    $region100: #{tpu_custom_call.1} parent=1 // pred_region
      _
    $region101: #{tpu_custom_call.1} parent=1 // pred_fallthru
      _
    // Predicated region
    $region102: #{tpu_custom_call.1} parent=1 // pred_check
      _
    $region103: #{tpu_custom_call.1} parent=1 // pred_check_branch
      %192 = sbr.rel (0) target = $region105
    $region104: #{tpu_custom_call.1} parent=1 // pred_region
      _
    $region105: #{tpu_custom_call.1} parent=1 // pred_fallthru
      _
    // Predicated region
    $region106: #{tpu_custom_call.1} parent=1 // pred_check
      _
    $region107: #{tpu_custom_call.1} parent=1 // pred_check_branch
      %194 = sbr.rel (0) target = $region109
    $region108: #{tpu_custom_call.1} parent=1 // pred_region
      _
    $region109: #{tpu_custom_call.1} parent=1 // pred_fallthru
      _
    // Predicated region
    $region110: #{tpu_custom_call.1} parent=1 // pred_check
      _
    $region111: #{tpu_custom_call.1} parent=1 // pred_check_branch
      %196 = sbr.rel (0) target = $region113
    $region112: #{tpu_custom_call.1} parent=1 // pred_region
      %s198 = ssub.s32 3072, 3072
      %199 = vsyncadd [#allocation15], %s198
      %s200 = sshll.u32 [#allocation16], 4
      %s201 = int_to_ptr.vmem [resolvable:$true] %s200
      %206 = dma.hbm_to_vmem [thread:$0]  %s55, 3072, %s201, [#allocation15], 128, 128, 8
    $region113: #{tpu_custom_call.1} parent=1 // pred_fallthru
      _
    // Predicated region
    $region114: #{tpu_custom_call.1} parent=1 // pred_check
      _
    $region115: #{tpu_custom_call.1} parent=1 // pred_check_branch
      %208 = sbr.rel (0) target = $region117
    $region116: #{tpu_custom_call.1} parent=1 // pred_region
      %s210 = ssub.s32 48, 48
      %211 = vsyncadd [#allocation18], %s210
      %s212 = sshll.u32 [#allocation17], 4
      %s213 = int_to_ptr.vmem [resolvable:$true] %s212
      %218 = dma.hbm_to_vmem [thread:$0]  %s57, 48, %s213, [#allocation18], 16, 16, 1
    $region117: #{tpu_custom_call.1} parent=1 // pred_fallthru
      _
    // Predicated region
    $region118: #{tpu_custom_call.1} parent=1 // pred_check
      _
    $region119: #{tpu_custom_call.1} parent=1 // pred_check_branch
      %220 = sbr.rel (0) target = $region121
    $region120: #{tpu_custom_call.1} parent=1 // pred_region
      %221 = dma.done [#allocation3], 16
    $region121: #{tpu_custom_call.1} parent=1 // pred_fallthru
      _
    // Predicated region
    $region122: #{tpu_custom_call.1} parent=1 // pred_check
      _
    $region123: #{tpu_custom_call.1} parent=1 // pred_check_branch
      %223 = sbr.rel (0) target = $region125
    $region124: #{tpu_custom_call.1} parent=1 // pred_region
      %224 = dma.done [#allocation6], 16
    $region125: #{tpu_custom_call.1} parent=1 // pred_fallthru
      _
    // Predicated region
    $region126: #{tpu_custom_call.1} parent=1 // pred_check
      _
    $region127: #{tpu_custom_call.1} parent=1 // pred_check_branch
      %226 = sbr.rel (0) target = $region129
    $region128: #{tpu_custom_call.1} parent=1 // pred_region
      %227 = dma.done [#allocation6], 16
    $region129: #{tpu_custom_call.1} parent=1 // pred_fallthru
      _
    // Predicated region
    $region130: #{tpu_custom_call.1} parent=1 // pred_check
      _
    $region131: #{tpu_custom_call.1} parent=1 // pred_check_branch
      %229 = sbr.rel (0) target = $region133
    $region132: #{tpu_custom_call.1} parent=1 // pred_region
      %230 = dma.done [#allocation9], 16
    $region133: #{tpu_custom_call.1} parent=1 // pred_fallthru
      _
    // Predicated region
    $region134: #{tpu_custom_call.1} parent=1 // pred_check
      _
    $region135: #{tpu_custom_call.1} parent=1 // pred_check_branch
      %232 = sbr.rel (0) target = $region137
    $region136: #{tpu_custom_call.1} parent=1 // pred_region
      %233 = dma.done [#allocation9], 16
    $region137: #{tpu_custom_call.1} parent=1 // pred_fallthru
      _
    // Predicated region
    $region138: #{tpu_custom_call.1} parent=1 // pred_check
      _
    $region139: #{tpu_custom_call.1} parent=1 // pred_check_branch
      %235 = sbr.rel (0) target = $region141
    $region140: #{tpu_custom_call.1} parent=1 // pred_region
      %236 = dma.done [#allocation12], 3072
    $region141: #{tpu_custom_call.1} parent=1 // pred_fallthru
      _
    // Predicated region
    $region142: #{tpu_custom_call.1} parent=1 // pred_check
      _
    $region143: #{tpu_custom_call.1} parent=1 // pred_check_branch
      %238 = sbr.rel (0) target = $region145
    $region144: #{tpu_custom_call.1} parent=1 // pred_region
      %239 = dma.done [#allocation12], 48
    $region145: #{tpu_custom_call.1} parent=1 // pred_fallthru
      _
    // Predicated region
    $region146: #{tpu_custom_call.1} parent=1 // pred_check
      _
    $region147: #{tpu_custom_call.1} parent=1 // pred_check_branch
      %241 = sbr.rel (0) target = $region149
    $region148: #{tpu_custom_call.1} parent=1 // pred_region
      %242 = dma.done [#allocation15], 48
    $region149: #{tpu_custom_call.1} parent=1 // pred_fallthru
      _
    // Predicated region
    $region150: #{tpu_custom_call.1} parent=1 // pred_check
      _
    $region151: #{tpu_custom_call.1} parent=1 // pred_check_branch
      %244 = sbr.rel (0) target = $region153
    $region152: #{tpu_custom_call.1} parent=1 // pred_region
      %245 = dma.done [#allocation15], 3072
    $region153: #{tpu_custom_call.1} parent=1 // pred_fallthru
      _
    // Predicated region
    $region154: #{tpu_custom_call.1} parent=1 // pred_check
      _
    $region155: #{tpu_custom_call.1} parent=1 // pred_check_branch
      %247 = sbr.rel (0) target = $region157
    $region156: #{tpu_custom_call.1} parent=1 // pred_region
      %248 = dma.done [#allocation18], 48
    $region157: #{tpu_custom_call.1} parent=1 // pred_fallthru
      _
    %v249 = vld [vmem:[%s1] sm:$0xff]
    %v250 = vld [vmem:[%s1 + $0x8] sm:$0xff]
    %v251 = vld [vmem:[%s5] sm:$0xff]
    %v252 = vld [vmem:[%s5 + $0x8] sm:$0xff]
    %v253 = vld [vmem:[%s5 + $0x10] sm:$0xff]
    %v254 = vld [vmem:[%s5 + $0x18] sm:$0xff]
    %v255 = vld [vmem:[%s5 + $0x20] sm:$0xff]
    %v256 = vld [vmem:[%s5 + $0x28] sm:$0xff]
    %v257 = vld [vmem:[%s5 + $0x30] sm:$0xff]
    %v258 = vld [vmem:[%s5 + $0x38] sm:$0xff]
    %v259 = vld [vmem:[%s7] sm:$0xff]
    %v260 = vld [vmem:[%s7 + $0x8] sm:$0xff]
    %v261 = vld [vmem:[%s7 + $0x10] sm:$0xff]
    %v262 = vld [vmem:[%s7 + $0x18] sm:$0xff]
    %v263 = vld [vmem:[%s7 + $0x20] sm:$0xff]
    %v264 = vld [vmem:[%s7 + $0x28] sm:$0xff]
    %v265 = vld [vmem:[%s7 + $0x30] sm:$0xff]
    %v266 = vld [vmem:[%s7 + $0x38] sm:$0xff]
    %v267 = vmul.f32 %v249, %v249
    %v268 = vmul.f32 %v250, %v250
    %271 = vrot.lane.b32.xlu0 %v267, 126
    %v272 = vpop.permute.xlu0 %271
    %273 = vrot.lane.b32.xlu0 %v268, 126
    %v274 = vpop.permute.xlu0 %273
    %vm277 = vcmask 15360
    %v278 = vsel %vm277, %v272, 0.0
    %279 = vadd.xlane.f32.xlu0 %v278
    %v280 = vpop.xlane.xlu0 %279
    %v281 = vsel %vm277, %v274, 0.0
    %282 = vadd.xlane.f32.xlu0 %v281
    %v283 = vpop.xlane.xlu0 %282
    %v284 = vrsqrt.pop %v280
    %v285 = vmul.f32 %v280, %v284
    %vm286 = vcmp.eq.f32.partialorder %v280, inf
    %v287 = vsel %vm286, %v280, %v285
    %vm288 = vcmp.eq.f32.partialorder %v280, 0.0
    %v289 = vand.u32 %v280, 2147483648
    %v290 = vsel %vm288, %v289, %v287
    %v291 = vrsqrt.pop %v283
    %v292 = vmul.f32 %v283, %v291
    %vm293 = vcmp.eq.f32.partialorder %v283, inf
    %v294 = vsel %vm293, %v283, %v292
    %vm295 = vcmp.eq.f32.partialorder %v283, 0.0
    %v296 = vand.u32 %v283, 2147483648
    %v297 = vsel %vm295, %v296, %v294
    %298 = vrot.lane.b32.xlu0 %v267, 124
    %v299 = vpop.permute.xlu0 %298
    %300 = vrot.lane.b32.xlu0 %v268, 124
    %v301 = vpop.permute.xlu0 %300
    %v304 = vsel %vm277, %v299, 0.0
    %305 = vadd.xlane.f32.xlu0 %v304
    %v306 = vpop.xlane.xlu0 %305
    %v307 = vsel %vm277, %v301, 0.0
    %308 = vadd.xlane.f32.xlu0 %v307
    %v309 = vpop.xlane.xlu0 %308
    %v310 = vrsqrt.pop %v306
    %v311 = vmul.f32 %v306, %v310
    %vm312 = vcmp.eq.f32.partialorder %v306, inf
    %v313 = vsel %vm312, %v306, %v311
    %vm314 = vcmp.eq.f32.partialorder %v306, 0.0
    %v315 = vand.u32 %v306, 2147483648
    %v316 = vsel %vm314, %v315, %v313
    %v317 = vrsqrt.pop %v309
    %v318 = vmul.f32 %v309, %v317
    %vm319 = vcmp.eq.f32.partialorder %v309, inf
    %v320 = vsel %vm319, %v309, %v318
    %vm321 = vcmp.eq.f32.partialorder %v309, 0.0
    %v322 = vand.u32 %v309, 2147483648
    %v323 = vsel %vm321, %v322, %v320
    %v324 = vld [vmem:[#allocation2] sm:$0x1]
    %v326 = vlaneseq
    %v327 = vshrl.u32 %v326, 7
    %v328 = vsub.s32 0, %v327
    %v329 = vrot.slane %v324, %v328
    %v331 = vmul.f32 %v290, %v329
    %v332 = vmul.f32 %v297, %v329
    %v333 = vld [vmem:[#allocation5] sm:$0x1]
    %v335 = vlaneseq
    %v336 = vshrl.u32 %v335, 7
    %v337 = vsub.s32 0, %v336
    %v338 = vrot.slane %v333, %v337
    %v340 = vadd.f32 %v331, %v338
    %v341 = vadd.f32 %v332, %v338
    %v342 = vld [vmem:[#allocation7] sm:$0x1]
    %v344 = vlaneseq
    %v345 = vshrl.u32 %v344, 7
    %v346 = vsub.s32 0, %v345
    %v347 = vrot.slane %v342, %v346
    %v349 = vmul.f32 %v316, %v347
    %v350 = vmul.f32 %v323, %v347
    %v351 = vld [vmem:[#allocation8] sm:$0x1]
    %v353 = vlaneseq
    %v354 = vshrl.u32 %v353, 7
    %v355 = vsub.s32 0, %v354
    %v356 = vrot.slane %v351, %v355
    %v358 = vadd.f32 %v349, %v356
    %v359 = vadd.f32 %v350, %v356
    %v360 = vld [vmem:[%s17] sm:$0xff]
    %v361 = vld [vmem:[%s19] sm:$0xff]
    %vm362 = vcmask 64512
    %v364 = vsel %vm362, %v358, 0
    %v367 = vsel %vm362, %v359, 0
    %369 = vmatprep.subr.mxu0 0.0
    %370 = vmatpush1.msra.mxu0 0.0
    %371 = vmatprep.subr.mxu0 0.0
    %372 = vmatpush1.msra.mxu0 0.0
    %373 = vmatprep.subr.mxu0 0.0
    %374 = vmatpush1.msra.mxu0 0.0
    %375 = vmatprep.subr.mxu0 0.0
    %376 = vmatpush1.msra.mxu0 0.0
    %377 = vmatprep.subr.mxu0 0.0
    %378 = vmatpush1.msra.mxu0 0.0
    %379 = vmatprep.subr.mxu0 0.0
    %380 = vmatpush1.msra.mxu0 0.0
    %381 = vmatprep.subr.mxu0 0.0
    %382 = vmatpush1.msra.mxu0 0.0
    %383 = vmatprep.subr.mxu0 0.0
    %384 = vmatpush1.msra.mxu0 0.0
    %385 = vmatprep.subr.mxu0 0.0
    %386 = vmatpush1.msra.mxu0 0.0
    %387 = vmatprep.subr.mxu0 0.0
    %388 = vmatpush1.msra.mxu0 0.0
    %389 = vmatprep.subr.mxu0 0.0
    %390 = vmatpush1.msra.mxu0 0.0
    %391 = vmatprep.subr.mxu0 0.0
    %392 = vmatpush1.msra.mxu0 0.0
    %393 = vmatprep.subr.mxu0 0.0
    %394 = vmatpush1.msra.mxu0 0.0
    %395 = vmatprep.subr.mxu0 0.0
    %396 = vmatpush1.msra.mxu0 0.0
    %397 = vmatprep.subr.mxu0 0.0
    %398 = vmatpush1.msra.mxu0 0.0
    %399 = vmatprep.subr.mxu0 0.0
    %400 = vmatpush1.msra.mxu0 %v361
    %401 = vmatprep.subr.mxu0 0.0
    %402 = vmatpush2.msra.mxu0 0.0
    %403 = vmatprep.subr.mxu0 0.0
    %404 = vmatpush2.msra.mxu0 0.0
    %405 = vmatprep.subr.mxu0 0.0
    %406 = vmatpush2.msra.mxu0 0.0
    %407 = vmatprep.subr.mxu0 0.0
    %408 = vmatpush2.msra.mxu0 0.0
    %409 = vmatprep.subr.mxu0 0.0
    %410 = vmatpush2.msra.mxu0 0.0
    %411 = vmatprep.subr.mxu0 0.0
    %412 = vmatpush2.msra.mxu0 0.0
    %413 = vmatprep.subr.mxu0 0.0
    %414 = vmatpush2.msra.mxu0 0.0
    %415 = vmatprep.subr.mxu0 0.0
    %416 = vmatpush2.msra.mxu0 0.0
    %417 = vmatprep.subr.mxu0 0.0
    %418 = vmatpush2.msra.mxu0 0.0
    %419 = vmatprep.subr.mxu0 0.0
    %420 = vmatpush2.msra.mxu0 0.0
    %421 = vmatprep.subr.mxu0 0.0
    %422 = vmatpush2.msra.mxu0 0.0
    %423 = vmatprep.subr.mxu0 0.0
    %424 = vmatpush2.msra.mxu0 0.0
    %425 = vmatprep.subr.mxu0 0.0
    %426 = vmatpush2.msra.mxu0 0.0
    %427 = vmatprep.subr.mxu0 0.0
    %428 = vmatpush2.msra.mxu0 0.0
    %429 = vmatprep.subr.mxu0 0.0
    %430 = vmatpush2.msra.mxu0 0.0
    %431 = vmatprep.subr.mxu0 0.0
    %432 = vmatpush2.msra.mxu0 0.0
    %433 = vmatprep.mubr.f32.mxu0 0.0
    %434 = vmatmul.mubr.f32.gmra.mxu0 %v364
    %v435 = vpop.f32.mrf.mxu0
    %v436 = vadd.f32 0.0, %v435
    %v437 = vpop.f32.mrf.mxu0
    %438 = vmatprep.mubr.f32.mxu0 0.0
    %439 = vmatmul.mubr.f32.gmra.mxu0 %v367
    %v440 = vpop.f32.mrf.mxu0
    %v441 = vadd.f32 0.0, %v440
    %v442 = vpop.f32.mrf.mxu0
    %443 = vdwg.mxu0
    %v445 = vsel %vm362, %v340, 0
    %v448 = vsel %vm362, %v341, 0
    %450 = vmatprep.subr.mxu0 0.0
    %451 = vmatpush1.msra.mxu0 0.0
    %452 = vmatprep.subr.mxu0 0.0
    %453 = vmatpush1.msra.mxu0 0.0
    %454 = vmatprep.subr.mxu0 0.0
    %455 = vmatpush1.msra.mxu0 0.0
    %456 = vmatprep.subr.mxu0 0.0
    %457 = vmatpush1.msra.mxu0 0.0
    %458 = vmatprep.subr.mxu0 0.0
    %459 = vmatpush1.msra.mxu0 0.0
    %460 = vmatprep.subr.mxu0 0.0
    %461 = vmatpush1.msra.mxu0 0.0
    %462 = vmatprep.subr.mxu0 0.0
    %463 = vmatpush1.msra.mxu0 0.0
    %464 = vmatprep.subr.mxu0 0.0
    %465 = vmatpush1.msra.mxu0 0.0
    %466 = vmatprep.subr.mxu0 0.0
    %467 = vmatpush1.msra.mxu0 0.0
    %468 = vmatprep.subr.mxu0 0.0
    %469 = vmatpush1.msra.mxu0 0.0
    %470 = vmatprep.subr.mxu0 0.0
    %471 = vmatpush1.msra.mxu0 0.0
    %472 = vmatprep.subr.mxu0 0.0
    %473 = vmatpush1.msra.mxu0 0.0
    %474 = vmatprep.subr.mxu0 0.0
    %475 = vmatpush1.msra.mxu0 0.0
    %476 = vmatprep.subr.mxu0 0.0
    %477 = vmatpush1.msra.mxu0 0.0
    %478 = vmatprep.subr.mxu0 0.0
    %479 = vmatpush1.msra.mxu0 0.0
    %480 = vmatprep.subr.mxu0 0.0
    %481 = vmatpush1.msra.mxu0 %v360
    %482 = vmatprep.subr.mxu0 0.0
    %483 = vmatpush2.msra.mxu0 0.0
    %484 = vmatprep.subr.mxu0 0.0
    %485 = vmatpush2.msra.mxu0 0.0
    %486 = vmatprep.subr.mxu0 0.0
    %487 = vmatpush2.msra.mxu0 0.0
    %488 = vmatprep.subr.mxu0 0.0
    %489 = vmatpush2.msra.mxu0 0.0
    %490 = vmatprep.subr.mxu0 0.0
    %491 = vmatpush2.msra.mxu0 0.0
    %492 = vmatprep.subr.mxu0 0.0
    %493 = vmatpush2.msra.mxu0 0.0
    %494 = vmatprep.subr.mxu0 0.0
    %495 = vmatpush2.msra.mxu0 0.0
    %496 = vmatprep.subr.mxu0 0.0
    %497 = vmatpush2.msra.mxu0 0.0
    %498 = vmatprep.subr.mxu0 0.0
    %499 = vmatpush2.msra.mxu0 0.0
    %500 = vmatprep.subr.mxu0 0.0
    %501 = vmatpush2.msra.mxu0 0.0
    %502 = vmatprep.subr.mxu0 0.0
    %503 = vmatpush2.msra.mxu0 0.0
    %504 = vmatprep.subr.mxu0 0.0
    %505 = vmatpush2.msra.mxu0 0.0
    %506 = vmatprep.subr.mxu0 0.0
    %507 = vmatpush2.msra.mxu0 0.0
    %508 = vmatprep.subr.mxu0 0.0
    %509 = vmatpush2.msra.mxu0 0.0
    %510 = vmatprep.subr.mxu0 0.0
    %511 = vmatpush2.msra.mxu0 0.0
    %512 = vmatprep.subr.mxu0 0.0
    %513 = vmatpush2.msra.mxu0 0.0
    %514 = vmatprep.mubr.f32.mxu0 0.0
    %515 = vmatmul.mubr.f32.gmra.mxu0 %v445
    %v516 = vpop.f32.mrf.mxu0
    %v517 = vadd.f32 %v436, %v516
    %v518 = vpop.f32.mrf.mxu0
    %519 = vmatprep.mubr.f32.mxu0 0.0
    %520 = vmatmul.mubr.f32.gmra.mxu0 %v448
    %v521 = vpop.f32.mrf.mxu0
    %v522 = vadd.f32 %v441, %v521
    %v523 = vpop.f32.mrf.mxu0
    %524 = vdwg.mxu0
    %v525 = vld [vmem:[%s3] sm:$0xff]
    %v526 = vld [vmem:[%s3 + $0x8] sm:$0xff]
    %v527 = vld [vmem:[%s21] sm:$0x7]
    %vm528 = vcmask 23552
    %v530 = vsel %vm528, %v525, 0
    %v533 = vsel %vm528, %v526, 0
    %vm535 = vcmask 1042432
    %v537 = vsel %vm535, %v527, 0
    %539 = vmatprep.subr.mxu0 0.0
    %540 = vmatpush1.msra.mxu0 0.0
    %541 = vmatprep.subr.mxu0 0.0
    %542 = vmatpush1.msra.mxu0 0.0
    %543 = vmatprep.subr.mxu0 0.0
    %544 = vmatpush1.msra.mxu0 0.0
    %545 = vmatprep.subr.mxu0 0.0
    %546 = vmatpush1.msra.mxu0 0.0
    %547 = vmatprep.subr.mxu0 0.0
    %548 = vmatpush1.msra.mxu0 0.0
    %549 = vmatprep.subr.mxu0 0.0
    %550 = vmatpush1.msra.mxu0 0.0
    %551 = vmatprep.subr.mxu0 0.0
    %552 = vmatpush1.msra.mxu0 0.0
    %553 = vmatprep.subr.mxu0 0.0
    %554 = vmatpush1.msra.mxu0 0.0
    %555 = vmatprep.subr.mxu0 0.0
    %556 = vmatpush1.msra.mxu0 0.0
    %557 = vmatprep.subr.mxu0 0.0
    %558 = vmatpush1.msra.mxu0 0.0
    %559 = vmatprep.subr.mxu0 0.0
    %560 = vmatpush1.msra.mxu0 0.0
    %561 = vmatprep.subr.mxu0 0.0
    %562 = vmatpush1.msra.mxu0 0.0
    %563 = vmatprep.subr.mxu0 0.0
    %564 = vmatpush1.msra.mxu0 0.0
    %565 = vmatprep.subr.mxu0 0.0
    %566 = vmatpush1.msra.mxu0 0.0
    %567 = vmatprep.subr.mxu0 0.0
    %568 = vmatpush1.msra.mxu0 0.0
    %569 = vmatprep.subr.mxu0 0.0
    %570 = vmatpush1.msra.mxu0 %v537
    %571 = vmatprep.subr.mxu0 0.0
    %572 = vmatpush2.msra.mxu0 0.0
    %573 = vmatprep.subr.mxu0 0.0
    %574 = vmatpush2.msra.mxu0 0.0
    %575 = vmatprep.subr.mxu0 0.0
    %576 = vmatpush2.msra.mxu0 0.0
    %577 = vmatprep.subr.mxu0 0.0
    %578 = vmatpush2.msra.mxu0 0.0
    %579 = vmatprep.subr.mxu0 0.0
    %580 = vmatpush2.msra.mxu0 0.0
    %581 = vmatprep.subr.mxu0 0.0
    %582 = vmatpush2.msra.mxu0 0.0
    %583 = vmatprep.subr.mxu0 0.0
    %584 = vmatpush2.msra.mxu0 0.0
    %585 = vmatprep.subr.mxu0 0.0
    %586 = vmatpush2.msra.mxu0 0.0
    %587 = vmatprep.subr.mxu0 0.0
    %588 = vmatpush2.msra.mxu0 0.0
    %589 = vmatprep.subr.mxu0 0.0
    %590 = vmatpush2.msra.mxu0 0.0
    %591 = vmatprep.subr.mxu0 0.0
    %592 = vmatpush2.msra.mxu0 0.0
    %593 = vmatprep.subr.mxu0 0.0
    %594 = vmatpush2.msra.mxu0 0.0
    %595 = vmatprep.subr.mxu0 0.0
    %596 = vmatpush2.msra.mxu0 0.0
    %597 = vmatprep.subr.mxu0 0.0
    %598 = vmatpush2.msra.mxu0 0.0
    %599 = vmatprep.subr.mxu0 0.0
    %600 = vmatpush2.msra.mxu0 0.0
    %601 = vmatprep.subr.mxu0 0.0
    %602 = vmatpush2.msra.mxu0 0.0
    %603 = vmatprep.mubr.f32.mxu0 0.0
    %604 = vmatmul.mubr.f32.gmra.mxu0 %v530
    %v605 = vpop.f32.mrf.mxu0
    %v606 = vadd.f32 0.0, %v605
    %v607 = vpop.f32.mrf.mxu0
    %608 = vmatprep.mubr.f32.mxu0 0.0
    %609 = vmatmul.mubr.f32.gmra.mxu0 %v533
    %v610 = vpop.f32.mrf.mxu0
    %v611 = vadd.f32 0.0, %v610
    %v612 = vpop.f32.mrf.mxu0
    %613 = vdwg.mxu0
    %v614 = vadd.f32 %v517, %v606
    %v615 = vadd.f32 %v522, %v611
    %v616 = vld [vmem:[#allocation10] sm:$0x1]
    %v618 = vlaneseq
    %v619 = vshrl.u32 %v618, 7
    %v620 = vsub.s32 0, %v619
    %v621 = vrot.slane %v616, %v620
    %v623 = vadd.f32 %v614, %v621
    %v624 = vadd.f32 %v615, %v621
    %v625 = vadd.f32 %v259, %v261
    %v626 = vadd.f32 %v260, %v262
    %v627 = vadd.f32 %v625, %v263
    %v628 = vadd.f32 %v626, %v264
    %v629 = vadd.f32 %v627, %v265
    %v630 = vadd.f32 %v628, %v266
    %v631 = vadd.f32 %v629, 1e-06
    %v632 = vadd.f32 %v630, 1e-06
    %v633 = vrcp.pop %v631
    %v634 = vmul.f32 1.0, %v633
    %v635 = vrcp.pop %v632
    %v636 = vmul.f32 1.0, %v635
    %v637 = vld [vmem:[%s25] sm:$0xff]
    %v638 = vld [vmem:[%s25 + $0x8] sm:$0xff]
    %v639 = vld [vmem:[%s25 + $0x10] sm:$0xff]
    %v640 = vld [vmem:[%s25 + $0x18] sm:$0xff]
    %v641 = vld [vmem:[%s25 + $0x20] sm:$0xff]
    %v642 = vld [vmem:[%s25 + $0x28] sm:$0xff]
    %v643 = vld [vmem:[%s25 + $0x30] sm:$0xff]
    %v644 = vld [vmem:[%s25 + $0x38] sm:$0xff]
    %v645 = vld [vmem:[%s27] sm:$0x1]
    %v646 = vld [vmem:[%s29] sm:$0x1]
    %v647 = vld [vmem:[%s31] sm:$0xff]
    %v648 = vld [vmem:[%s31 + $0x8] sm:$0xff]
    %v649 = vld [vmem:[%s31 + $0x10] sm:$0xff]
    %v650 = vld [vmem:[%s31 + $0x18] sm:$0xff]
    %v651 = vld [vmem:[%s31 + $0x20] sm:$0xff]
    %v652 = vld [vmem:[%s31 + $0x28] sm:$0xff]
    %v653 = vld [vmem:[%s31 + $0x30] sm:$0xff]
    %v654 = vld [vmem:[%s31 + $0x38] sm:$0xff]
    %v655 = vld [vmem:[%s33] sm:$0x1]
    %v656 = vld [vmem:[%s35] sm:$0xff]
    %v657 = vld [vmem:[%s35 + $0x8] sm:$0xff]
    %v658 = vld [vmem:[%s35 + $0x10] sm:$0xff]
    %v659 = vld [vmem:[%s35 + $0x18] sm:$0xff]
    %v660 = vld [vmem:[%s35 + $0x20] sm:$0xff]
    %v661 = vld [vmem:[%s35 + $0x28] sm:$0xff]
    %v662 = vld [vmem:[%s35 + $0x30] sm:$0xff]
    %v663 = vld [vmem:[%s35 + $0x38] sm:$0xff]
    %v664 = vld [vmem:[%s37] sm:$0x1]
    %v665 = vld [vmem:[%s39] sm:$0x1]
    %v666 = vld [vmem:[%s41] sm:$0x1]
    %v667 = vld [vmem:[#allocation11] sm:$0xff]
    %v668 = vld [vmem:[#allocation11 + $0x8] sm:$0xff]
    %v669 = vld [vmem:[#allocation11 + $0x10] sm:$0xff]
    %v670 = vld [vmem:[#allocation11 + $0x18] sm:$0xff]
    %v671 = vld [vmem:[#allocation11 + $0x20] sm:$0xff]
    %v672 = vld [vmem:[#allocation11 + $0x28] sm:$0xff]
    %v673 = vld [vmem:[#allocation11 + $0x30] sm:$0xff]
    %v674 = vld [vmem:[#allocation11 + $0x38] sm:$0xff]
    %v675 = vld [vmem:[#allocation13] sm:$0x1]
    %v676 = vld [vmem:[#allocation14] sm:$0x1]
    %v677 = vld [vmem:[%s49] sm:$0x1]
    %v678 = vld [vmem:[%s51] sm:$0xff]
    %v679 = vld [vmem:[%s51 + $0x8] sm:$0xff]
    %v680 = vld [vmem:[%s51 + $0x10] sm:$0xff]
    %v681 = vld [vmem:[%s51 + $0x18] sm:$0xff]
    %v682 = vld [vmem:[%s51 + $0x20] sm:$0xff]
    %v683 = vld [vmem:[%s51 + $0x28] sm:$0xff]
    %v684 = vld [vmem:[%s51 + $0x30] sm:$0xff]
    %v685 = vld [vmem:[%s51 + $0x38] sm:$0xff]
    %v686 = vld [vmem:[%s51 + $0x40] sm:$0xff]
    %v687 = vld [vmem:[%s51 + $0x48] sm:$0xff]
    %v688 = vld [vmem:[%s51 + $0x50] sm:$0xff]
    %v689 = vld [vmem:[%s51 + $0x58] sm:$0xff]
    %v690 = vld [vmem:[%s51 + $0x60] sm:$0xff]
    %v691 = vld [vmem:[%s51 + $0x68] sm:$0xff]
    %v692 = vld [vmem:[%s51 + $0x70] sm:$0xff]
    %v693 = vld [vmem:[%s51 + $0x78] sm:$0xff]
    %v694 = vld [vmem:[%s53] sm:$0x1]
    %v695 = vld [vmem:[#allocation16] sm:$0xff]
    %v696 = vld [vmem:[#allocation16 + $0x8] sm:$0xff]
    %v697 = vld [vmem:[#allocation16 + $0x10] sm:$0xff]
    %v698 = vld [vmem:[#allocation16 + $0x18] sm:$0xff]
    %v699 = vld [vmem:[#allocation16 + $0x20] sm:$0xff]
    %v700 = vld [vmem:[#allocation16 + $0x28] sm:$0xff]
    %v701 = vld [vmem:[#allocation16 + $0x30] sm:$0xff]
    %v702 = vld [vmem:[#allocation16 + $0x38] sm:$0xff]
    %v703 = vld [vmem:[#allocation17] sm:$0x1]
    %v704 = vsub.f32 %v251, %v249
    %v705 = vsub.f32 %v252, %v250
    %v706 = vsub.f32 %v253, %v249
    %v707 = vsub.f32 %v254, %v250
    %v708 = vsub.f32 %v255, %v249
    %v709 = vsub.f32 %v256, %v250
    %v710 = vsub.f32 %v257, %v249
    %v711 = vsub.f32 %v258, %v250
    %713 = vset.pattern.permute.xlu0 0
    %714 = vperm.xlu0 %713, %v259
    %v715 = vpop.permute.xlu0 %714
    %718 = vset.pattern.permute.xlu0 0
    %719 = vperm.xlu0 %718, %v260
    %v720 = vpop.permute.xlu0 %719
    %723 = vset.pattern.permute.xlu0 0
    %724 = vperm.xlu0 %723, %v261
    %v725 = vpop.permute.xlu0 %724
    %728 = vset.pattern.permute.xlu0 0
    %729 = vperm.xlu0 %728, %v262
    %v730 = vpop.permute.xlu0 %729
    %733 = vset.pattern.permute.xlu0 0
    %734 = vperm.xlu0 %733, %v263
    %v735 = vpop.permute.xlu0 %734
    %738 = vset.pattern.permute.xlu0 0
    %739 = vperm.xlu0 %738, %v264
    %v740 = vpop.permute.xlu0 %739
    %743 = vset.pattern.permute.xlu0 0
    %744 = vperm.xlu0 %743, %v265
    %v745 = vpop.permute.xlu0 %744
    %748 = vset.pattern.permute.xlu0 0
    %749 = vperm.xlu0 %748, %v266
    %v750 = vpop.permute.xlu0 %749
    %v752 = vmul.f32 %v704, %v715
    %v753 = vmul.f32 %v705, %v720
    %v754 = vmul.f32 %v706, %v725
    %v755 = vmul.f32 %v707, %v730
    %v756 = vmul.f32 %v708, %v735
    %v757 = vmul.f32 %v709, %v740
    %v758 = vmul.f32 %v710, %v745
    %v759 = vmul.f32 %v711, %v750
    %v760 = vmul.f32 %v752, %v752
    %v761 = vmul.f32 %v753, %v753
    %v762 = vmul.f32 %v754, %v754
    %v763 = vmul.f32 %v755, %v755
    %v764 = vmul.f32 %v756, %v756
    %v765 = vmul.f32 %v757, %v757
    %v766 = vmul.f32 %v758, %v758
    %v767 = vmul.f32 %v759, %v759
    %v768 = vsel %vm277, %v760, 0.0
    %769 = vadd.xlane.f32.xlu0 %v768
    %v770 = vpop.xlane.xlu0 %769
    %v771 = vsel %vm277, %v761, 0.0
    %772 = vadd.xlane.f32.xlu0 %v771
    %v773 = vpop.xlane.xlu0 %772
    %v774 = vsel %vm277, %v762, 0.0
    %775 = vadd.xlane.f32.xlu0 %v774
    %v776 = vpop.xlane.xlu0 %775
    %v777 = vsel %vm277, %v763, 0.0
    %778 = vadd.xlane.f32.xlu0 %v777
    %v779 = vpop.xlane.xlu0 %778
    %v780 = vsel %vm277, %v764, 0.0
    %781 = vadd.xlane.f32.xlu0 %v780
    %v782 = vpop.xlane.xlu0 %781
    %v783 = vsel %vm277, %v765, 0.0
    %784 = vadd.xlane.f32.xlu0 %v783
    %v785 = vpop.xlane.xlu0 %784
    %v786 = vsel %vm277, %v766, 0.0
    %787 = vadd.xlane.f32.xlu0 %v786
    %v788 = vpop.xlane.xlu0 %787
    %v789 = vsel %vm277, %v767, 0.0
    %790 = vadd.xlane.f32.xlu0 %v789
    %v791 = vpop.xlane.xlu0 %790
    %v792 = vrsqrt.pop %v770
    %v793 = vmul.f32 %v770, %v792
    %vm794 = vcmp.eq.f32.partialorder %v770, inf
    %v795 = vsel %vm794, %v770, %v793
    %vm796 = vcmp.eq.f32.partialorder %v770, 0.0
    %v797 = vand.u32 %v770, 2147483648
    %v798 = vsel %vm796, %v797, %v795
    %v799 = vrsqrt.pop %v773
    %v800 = vmul.f32 %v773, %v799
    %vm801 = vcmp.eq.f32.partialorder %v773, inf
    %v802 = vsel %vm801, %v773, %v800
    %vm803 = vcmp.eq.f32.partialorder %v773, 0.0
    %v804 = vand.u32 %v773, 2147483648
    %v805 = vsel %vm803, %v804, %v802
    %v806 = vrsqrt.pop %v776
    %v807 = vmul.f32 %v776, %v806
    %vm808 = vcmp.eq.f32.partialorder %v776, inf
    %v809 = vsel %vm808, %v776, %v807
    %vm810 = vcmp.eq.f32.partialorder %v776, 0.0
    %v811 = vand.u32 %v776, 2147483648
    %v812 = vsel %vm810, %v811, %v809
    %v813 = vrsqrt.pop %v779
    %v814 = vmul.f32 %v779, %v813
    %vm815 = vcmp.eq.f32.partialorder %v779, inf
    %v816 = vsel %vm815, %v779, %v814
    %vm817 = vcmp.eq.f32.partialorder %v779, 0.0
    %v818 = vand.u32 %v779, 2147483648
    %v819 = vsel %vm817, %v818, %v816
    %v820 = vrsqrt.pop %v782
    %v821 = vmul.f32 %v782, %v820
    %vm822 = vcmp.eq.f32.partialorder %v782, inf
    %v823 = vsel %vm822, %v782, %v821
    %vm824 = vcmp.eq.f32.partialorder %v782, 0.0
    %v825 = vand.u32 %v782, 2147483648
    %v826 = vsel %vm824, %v825, %v823
    %v827 = vrsqrt.pop %v785
    %v828 = vmul.f32 %v785, %v827
    %vm829 = vcmp.eq.f32.partialorder %v785, inf
    %v830 = vsel %vm829, %v785, %v828
    %vm831 = vcmp.eq.f32.partialorder %v785, 0.0
    %v832 = vand.u32 %v785, 2147483648
    %v833 = vsel %vm831, %v832, %v830
    %v834 = vrsqrt.pop %v788
    %v835 = vmul.f32 %v788, %v834
    %vm836 = vcmp.eq.f32.partialorder %v788, inf
    %v837 = vsel %vm836, %v788, %v835
    %vm838 = vcmp.eq.f32.partialorder %v788, 0.0
    %v839 = vand.u32 %v788, 2147483648
    %v840 = vsel %vm838, %v839, %v837
    %v841 = vrsqrt.pop %v791
    %v842 = vmul.f32 %v791, %v841
    %vm843 = vcmp.eq.f32.partialorder %v791, inf
    %v844 = vsel %vm843, %v791, %v842
    %vm845 = vcmp.eq.f32.partialorder %v791, 0.0
    %v846 = vand.u32 %v791, 2147483648
    %v847 = vsel %vm845, %v846, %v844
    %vm848 = vcmask 523264
    %v850 = vsel %vm848, %v623, 0
    %v853 = vsel %vm848, %v624, 0
    %855 = vmatprep.subr.mxu0 0.0
    %856 = vmatpush1.msra.mxu0 0.0
    %857 = vmatprep.subr.mxu0 0.0
    %858 = vmatpush1.msra.mxu0 0.0
    %859 = vmatprep.subr.mxu0 0.0
    %860 = vmatpush1.msra.mxu0 0.0
    %861 = vmatprep.subr.mxu0 0.0
    %862 = vmatpush1.msra.mxu0 0.0
    %863 = vmatprep.subr.mxu0 0.0
    %864 = vmatpush1.msra.mxu0 0.0
    %865 = vmatprep.subr.mxu0 0.0
    %866 = vmatpush1.msra.mxu0 0.0
    %867 = vmatprep.subr.mxu0 0.0
    %868 = vmatpush1.msra.mxu0 0.0
    %869 = vmatprep.subr.mxu0 0.0
    %870 = vmatpush1.msra.mxu0 0.0
    %871 = vmatprep.subr.mxu0 0.0
    %872 = vmatpush1.msra.mxu0 %v644
    %873 = vmatprep.subr.mxu0 0.0
    %874 = vmatpush1.msra.mxu0 %v643
    %875 = vmatprep.subr.mxu0 0.0
    %876 = vmatpush1.msra.mxu0 %v642
    %877 = vmatprep.subr.mxu0 0.0
    %878 = vmatpush1.msra.mxu0 %v641
    %879 = vmatprep.subr.mxu0 0.0
    %880 = vmatpush1.msra.mxu0 %v640
    %881 = vmatprep.subr.mxu0 0.0
    %882 = vmatpush1.msra.mxu0 %v639
    %883 = vmatprep.subr.mxu0 0.0
    %884 = vmatpush1.msra.mxu0 %v638
    %885 = vmatprep.subr.mxu0 0.0
    %886 = vmatpush1.msra.mxu0 %v637
    %887 = vmatprep.subr.mxu0 0.0
    %888 = vmatpush2.msra.mxu0 0.0
    %889 = vmatprep.subr.mxu0 0.0
    %890 = vmatpush2.msra.mxu0 0.0
    %891 = vmatprep.subr.mxu0 0.0
    %892 = vmatpush2.msra.mxu0 0.0
    %893 = vmatprep.subr.mxu0 0.0
    %894 = vmatpush2.msra.mxu0 0.0
    %895 = vmatprep.subr.mxu0 0.0
    %896 = vmatpush2.msra.mxu0 0.0
    %897 = vmatprep.subr.mxu0 0.0
    %898 = vmatpush2.msra.mxu0 0.0
    %899 = vmatprep.subr.mxu0 0.0
    %900 = vmatpush2.msra.mxu0 0.0
    %901 = vmatprep.subr.mxu0 0.0
    %902 = vmatpush2.msra.mxu0 0.0
    %903 = vmatprep.subr.mxu0 0.0
    %904 = vmatpush2.msra.mxu0 0.0
    %905 = vmatprep.subr.mxu0 0.0
    %906 = vmatpush2.msra.mxu0 0.0
    %907 = vmatprep.subr.mxu0 0.0
    %908 = vmatpush2.msra.mxu0 0.0
    %909 = vmatprep.subr.mxu0 0.0
    %910 = vmatpush2.msra.mxu0 0.0
    %911 = vmatprep.subr.mxu0 0.0
    %912 = vmatpush2.msra.mxu0 0.0
    %913 = vmatprep.subr.mxu0 0.0
    %914 = vmatpush2.msra.mxu0 0.0
    %915 = vmatprep.subr.mxu0 0.0
    %916 = vmatpush2.msra.mxu0 0.0
    %917 = vmatprep.subr.mxu0 0.0
    %918 = vmatpush2.msra.mxu0 0.0
    %919 = vmatprep.mubr.f32.mxu0 0.0
    %920 = vmatmul.mubr.f32.gmra.mxu0 %v850
    %v921 = vpop.f32.mrf.mxu0
    %v922 = vadd.f32 0.0, %v921
    %v923 = vpop.f32.mrf.mxu0
    %924 = vmatprep.mubr.f32.mxu0 0.0
    %925 = vmatmul.mubr.f32.gmra.mxu0 %v853
    %v926 = vpop.f32.mrf.mxu0
    %v927 = vadd.f32 0.0, %v926
    %v928 = vpop.f32.mrf.mxu0
    %929 = vdwg.mxu0
    %v931 = vlaneseq
    %v932 = vshrl.u32 %v931, 7
    %v933 = vsub.s32 0, %v932
    %v934 = vrot.slane %v645, %v933
    %v936 = vmul.f32 %v798, %v934
    %v937 = vmul.f32 %v805, %v934
    %v938 = vmul.f32 %v812, %v934
    %v939 = vmul.f32 %v819, %v934
    %v940 = vmul.f32 %v826, %v934
    %v941 = vmul.f32 %v833, %v934
    %v942 = vmul.f32 %v840, %v934
    %v943 = vmul.f32 %v847, %v934
    %v944 = vadd.f32 %v922, %v936
    %v945 = vadd.f32 %v927, %v937
    %v946 = vadd.f32 %v922, %v938
    %v947 = vadd.f32 %v927, %v939
    %v948 = vadd.f32 %v922, %v940
    %v949 = vadd.f32 %v927, %v941
    %v950 = vadd.f32 %v922, %v942
    %v951 = vadd.f32 %v927, %v943
    %v953 = vlaneseq
    %v954 = vshrl.u32 %v953, 7
    %v955 = vsub.s32 0, %v954
    %v956 = vrot.slane %v646, %v955
    %v958 = vadd.f32 %v944, %v956
    %v959 = vadd.f32 %v945, %v956
    %v960 = vadd.f32 %v946, %v956
    %v961 = vadd.f32 %v947, %v956
    %v962 = vadd.f32 %v948, %v956
    %v963 = vadd.f32 %v949, %v956
    %v964 = vadd.f32 %v950, %v956
    %v965 = vadd.f32 %v951, %v956
    %v966 = vsub.f32 0.0, %v958
    %v967 = vsub.f32 0.0, %v959
    %v968 = vsub.f32 0.0, %v960
    %v969 = vsub.f32 0.0, %v961
    %v970 = vsub.f32 0.0, %v962
    %v971 = vsub.f32 0.0, %v963
    %v972 = vsub.f32 0.0, %v964
    %v973 = vsub.f32 0.0, %v965
    %v974 = vmul.f32 %v966, 1.442695
    %v975 = vpow.pop %v974
    %v976 = vmul.f32 %v967, 1.442695
    %v977 = vpow.pop %v976
    %v978 = vmul.f32 %v968, 1.442695
    %v979 = vpow.pop %v978
    %v980 = vmul.f32 %v969, 1.442695
    %v981 = vpow.pop %v980
    %v982 = vmul.f32 %v970, 1.442695
    %v983 = vpow.pop %v982
    %v984 = vmul.f32 %v971, 1.442695
    %v985 = vpow.pop %v984
    %v986 = vmul.f32 %v972, 1.442695
    %v987 = vpow.pop %v986
    %v988 = vmul.f32 %v973, 1.442695
    %v989 = vpow.pop %v988
    %v990 = vadd.f32 %v975, 1.0
    %v991 = vadd.f32 %v977, 1.0
    %v992 = vadd.f32 %v979, 1.0
    %v993 = vadd.f32 %v981, 1.0
    %v994 = vadd.f32 %v983, 1.0
    %v995 = vadd.f32 %v985, 1.0
    %v996 = vadd.f32 %v987, 1.0
    %v997 = vadd.f32 %v989, 1.0
    %v998 = vrcp.pop %v990
    %v999 = vmul.f32 %v958, %v998
    %v1000 = vrcp.pop %v991
    %v1001 = vmul.f32 %v959, %v1000
    %v1002 = vrcp.pop %v992
    %v1003 = vmul.f32 %v960, %v1002
    %v1004 = vrcp.pop %v993
    %v1005 = vmul.f32 %v961, %v1004
    %v1006 = vrcp.pop %v994
    %v1007 = vmul.f32 %v962, %v1006
    %v1008 = vrcp.pop %v995
    %v1009 = vmul.f32 %v963, %v1008
    %v1010 = vrcp.pop %v996
    %v1011 = vmul.f32 %v964, %v1010
    %v1012 = vrcp.pop %v997
    %v1013 = vmul.f32 %v965, %v1012
    %v1015 = vlaneseq
    %v1016 = vshrl.u32 %v1015, 7
    %v1017 = vsub.s32 0, %v1016
    %v1018 = vrot.slane %v655, %v1017
    %v1021 = vsel %vm848, %v999, 0
    %v1024 = vsel %vm848, %v1001, 0
    %v1027 = vsel %vm848, %v1003, 0
    %v1030 = vsel %vm848, %v1005, 0
    %v1033 = vsel %vm848, %v1007, 0
    %v1036 = vsel %vm848, %v1009, 0
    %v1039 = vsel %vm848, %v1011, 0
    %v1042 = vsel %vm848, %v1013, 0
    %1044 = vmatprep.subr.mxu0 0.0
    %1045 = vmatpush1.msra.mxu0 0.0
    %1046 = vmatprep.subr.mxu0 0.0
    %1047 = vmatpush1.msra.mxu0 0.0
    %1048 = vmatprep.subr.mxu0 0.0
    %1049 = vmatpush1.msra.mxu0 0.0
    %1050 = vmatprep.subr.mxu0 0.0
    %1051 = vmatpush1.msra.mxu0 0.0
    %1052 = vmatprep.subr.mxu0 0.0
    %1053 = vmatpush1.msra.mxu0 0.0
    %1054 = vmatprep.subr.mxu0 0.0
    %1055 = vmatpush1.msra.mxu0 0.0
    %1056 = vmatprep.subr.mxu0 0.0
    %1057 = vmatpush1.msra.mxu0 0.0
    %1058 = vmatprep.subr.mxu0 0.0
    %1059 = vmatpush1.msra.mxu0 0.0
    %1060 = vmatprep.subr.mxu0 0.0
    %1061 = vmatpush1.msra.mxu0 %v654
    %1062 = vmatprep.subr.mxu0 0.0
    %1063 = vmatpush1.msra.mxu0 %v653
    %1064 = vmatprep.subr.mxu0 0.0
    %1065 = vmatpush1.msra.mxu0 %v652
    %1066 = vmatprep.subr.mxu0 0.0
    %1067 = vmatpush1.msra.mxu0 %v651
    %1068 = vmatprep.subr.mxu0 0.0
    %1069 = vmatpush1.msra.mxu0 %v650
    %1070 = vmatprep.subr.mxu0 0.0
    %1071 = vmatpush1.msra.mxu0 %v649
    %1072 = vmatprep.subr.mxu0 0.0
    %1073 = vmatpush1.msra.mxu0 %v648
    %1074 = vmatprep.subr.mxu0 0.0
    %1075 = vmatpush1.msra.mxu0 %v647
    %1076 = vmatprep.subr.mxu0 0.0
    %1077 = vmatpush2.msra.mxu0 0.0
    %1078 = vmatprep.subr.mxu0 0.0
    %1079 = vmatpush2.msra.mxu0 0.0
    %1080 = vmatprep.subr.mxu0 0.0
    %1081 = vmatpush2.msra.mxu0 0.0
    %1082 = vmatprep.subr.mxu0 0.0
    %1083 = vmatpush2.msra.mxu0 0.0
    %1084 = vmatprep.subr.mxu0 0.0
    %1085 = vmatpush2.msra.mxu0 0.0
    %1086 = vmatprep.subr.mxu0 0.0
    %1087 = vmatpush2.msra.mxu0 0.0
    %1088 = vmatprep.subr.mxu0 0.0
    %1089 = vmatpush2.msra.mxu0 0.0
    %1090 = vmatprep.subr.mxu0 0.0
    %1091 = vmatpush2.msra.mxu0 0.0
    %1092 = vmatprep.subr.mxu0 0.0
    %1093 = vmatpush2.msra.mxu0 0.0
    %1094 = vmatprep.subr.mxu0 0.0
    %1095 = vmatpush2.msra.mxu0 0.0
    %1096 = vmatprep.subr.mxu0 0.0
    %1097 = vmatpush2.msra.mxu0 0.0
    %1098 = vmatprep.subr.mxu0 0.0
    %1099 = vmatpush2.msra.mxu0 0.0
    %1100 = vmatprep.subr.mxu0 0.0
    %1101 = vmatpush2.msra.mxu0 0.0
    %1102 = vmatprep.subr.mxu0 0.0
    %1103 = vmatpush2.msra.mxu0 0.0
    %1104 = vmatprep.subr.mxu0 0.0
    %1105 = vmatpush2.msra.mxu0 0.0
    %1106 = vmatprep.subr.mxu0 0.0
    %1107 = vmatpush2.msra.mxu0 0.0
    %1108 = vmatprep.mubr.f32.mxu0 0.0
    %1109 = vmatmul.mubr.f32.gmra.mxu0 %v1021
    %v1110 = vpop.f32.mrf.mxu0
    %v1111 = vadd.f32 %v1018, %v1110
    %v1112 = vpop.f32.mrf.mxu0
    %1113 = vmatprep.mubr.f32.mxu0 0.0
    %1114 = vmatmul.mubr.f32.gmra.mxu0 %v1024
    %v1115 = vpop.f32.mrf.mxu0
    %v1116 = vadd.f32 %v1018, %v1115
    %v1117 = vpop.f32.mrf.mxu0
    %1118 = vmatprep.mubr.f32.mxu0 0.0
    %1119 = vmatmul.mubr.f32.gmra.mxu0 %v1027
    %v1120 = vpop.f32.mrf.mxu0
    %v1121 = vadd.f32 %v1018, %v1120
    %v1122 = vpop.f32.mrf.mxu0
    %1123 = vmatprep.mubr.f32.mxu0 0.0
    %1124 = vmatmul.mubr.f32.gmra.mxu0 %v1030
    %v1125 = vpop.f32.mrf.mxu0
    %v1126 = vadd.f32 %v1018, %v1125
    %v1127 = vpop.f32.mrf.mxu0
    %1128 = vmatprep.mubr.f32.mxu0 0.0
    %1129 = vmatmul.mubr.f32.gmra.mxu0 %v1033
    %v1130 = vpop.f32.mrf.mxu0
    %v1131 = vadd.f32 %v1018, %v1130
    %v1132 = vpop.f32.mrf.mxu0
    %1133 = vmatprep.mubr.f32.mxu0 0.0
    %1134 = vmatmul.mubr.f32.gmra.mxu0 %v1036
    %v1135 = vpop.f32.mrf.mxu0
    %v1136 = vadd.f32 %v1018, %v1135
    %v1137 = vpop.f32.mrf.mxu0
    %1138 = vmatprep.mubr.f32.mxu0 0.0
    %1139 = vmatmul.mubr.f32.gmra.mxu0 %v1039
    %v1140 = vpop.f32.mrf.mxu0
    %v1141 = vadd.f32 %v1018, %v1140
    %v1142 = vpop.f32.mrf.mxu0
    %1143 = vmatprep.mubr.f32.mxu0 0.0
    %1144 = vmatmul.mubr.f32.gmra.mxu0 %v1042
    %v1145 = vpop.f32.mrf.mxu0
    %v1146 = vadd.f32 %v1018, %v1145
    %v1147 = vpop.f32.mrf.mxu0
    %1148 = vdwg.mxu0
    %v1149 = vsub.f32 0.0, %v1111
    %v1150 = vsub.f32 0.0, %v1116
    %v1151 = vsub.f32 0.0, %v1121
    %v1152 = vsub.f32 0.0, %v1126
    %v1153 = vsub.f32 0.0, %v1131
    %v1154 = vsub.f32 0.0, %v1136
    %v1155 = vsub.f32 0.0, %v1141
    %v1156 = vsub.f32 0.0, %v1146
    %v1157 = vmul.f32 %v1149, 1.442695
    %v1158 = vpow.pop %v1157
    %v1159 = vmul.f32 %v1150, 1.442695
    %v1160 = vpow.pop %v1159
    %v1161 = vmul.f32 %v1151, 1.442695
    %v1162 = vpow.pop %v1161
    %v1163 = vmul.f32 %v1152, 1.442695
    %v1164 = vpow.pop %v1163
    %v1165 = vmul.f32 %v1153, 1.442695
    %v1166 = vpow.pop %v1165
    %v1167 = vmul.f32 %v1154, 1.442695
    %v1168 = vpow.pop %v1167
    %v1169 = vmul.f32 %v1155, 1.442695
    %v1170 = vpow.pop %v1169
    %v1171 = vmul.f32 %v1156, 1.442695
    %v1172 = vpow.pop %v1171
    %v1173 = vadd.f32 %v1158, 1.0
    %v1174 = vadd.f32 %v1160, 1.0
    %v1175 = vadd.f32 %v1162, 1.0
    %v1176 = vadd.f32 %v1164, 1.0
    %v1177 = vadd.f32 %v1166, 1.0
    %v1178 = vadd.f32 %v1168, 1.0
    %v1179 = vadd.f32 %v1170, 1.0
    %v1180 = vadd.f32 %v1172, 1.0
    %v1181 = vrcp.pop %v1173
    %v1182 = vmul.f32 %v1111, %v1181
    %v1183 = vrcp.pop %v1174
    %v1184 = vmul.f32 %v1116, %v1183
    %v1185 = vrcp.pop %v1175
    %v1186 = vmul.f32 %v1121, %v1185
    %v1187 = vrcp.pop %v1176
    %v1188 = vmul.f32 %v1126, %v1187
    %v1189 = vrcp.pop %v1177
    %v1190 = vmul.f32 %v1131, %v1189
    %v1191 = vrcp.pop %v1178
    %v1192 = vmul.f32 %v1136, %v1191
    %v1193 = vrcp.pop %v1179
    %v1194 = vmul.f32 %v1141, %v1193
    %v1195 = vrcp.pop %v1180
    %v1196 = vmul.f32 %v1146, %v1195
    %v1197 = vmul.f32 %v1182, %v715
    %v1198 = vmul.f32 %v1184, %v720
    %v1199 = vmul.f32 %v1186, %v725
    %v1200 = vmul.f32 %v1188, %v730
    %v1201 = vmul.f32 %v1190, %v735
    %v1202 = vmul.f32 %v1192, %v740
    %v1203 = vmul.f32 %v1194, %v745
    %v1204 = vmul.f32 %v1196, %v750
    %v1206 = vlaneseq
    %v1207 = vshrl.u32 %v1206, 7
    %v1208 = vsub.s32 0, %v1207
    %v1209 = vrot.slane %v664, %v1208
    %v1212 = vsel %vm848, %v1197, 0
    %v1215 = vsel %vm848, %v1198, 0
    %v1218 = vsel %vm848, %v1199, 0
    %v1221 = vsel %vm848, %v1200, 0
    %v1224 = vsel %vm848, %v1201, 0
    %v1227 = vsel %vm848, %v1202, 0
    %v1230 = vsel %vm848, %v1203, 0
    %v1233 = vsel %vm848, %v1204, 0
    %1235 = vmatprep.subr.mxu0 0.0
    %1236 = vmatpush1.msra.mxu0 0.0
    %1237 = vmatprep.subr.mxu0 0.0
    %1238 = vmatpush1.msra.mxu0 0.0
    %1239 = vmatprep.subr.mxu0 0.0
    %1240 = vmatpush1.msra.mxu0 0.0
    %1241 = vmatprep.subr.mxu0 0.0
    %1242 = vmatpush1.msra.mxu0 0.0
    %1243 = vmatprep.subr.mxu0 0.0
    %1244 = vmatpush1.msra.mxu0 0.0
    %1245 = vmatprep.subr.mxu0 0.0
    %1246 = vmatpush1.msra.mxu0 0.0
    %1247 = vmatprep.subr.mxu0 0.0
    %1248 = vmatpush1.msra.mxu0 0.0
    %1249 = vmatprep.subr.mxu0 0.0
    %1250 = vmatpush1.msra.mxu0 0.0
    %1251 = vmatprep.subr.mxu0 0.0
    %1252 = vmatpush1.msra.mxu0 %v663
    %1253 = vmatprep.subr.mxu0 0.0
    %1254 = vmatpush1.msra.mxu0 %v662
    %1255 = vmatprep.subr.mxu0 0.0
    %1256 = vmatpush1.msra.mxu0 %v661
    %1257 = vmatprep.subr.mxu0 0.0
    %1258 = vmatpush1.msra.mxu0 %v660
    %1259 = vmatprep.subr.mxu0 0.0
    %1260 = vmatpush1.msra.mxu0 %v659
    %1261 = vmatprep.subr.mxu0 0.0
    %1262 = vmatpush1.msra.mxu0 %v658
    %1263 = vmatprep.subr.mxu0 0.0
    %1264 = vmatpush1.msra.mxu0 %v657
    %1265 = vmatprep.subr.mxu0 0.0
    %1266 = vmatpush1.msra.mxu0 %v656
    %1267 = vmatprep.subr.mxu0 0.0
    %1268 = vmatpush2.msra.mxu0 0.0
    %1269 = vmatprep.subr.mxu0 0.0
    %1270 = vmatpush2.msra.mxu0 0.0
    %1271 = vmatprep.subr.mxu0 0.0
    %1272 = vmatpush2.msra.mxu0 0.0
    %1273 = vmatprep.subr.mxu0 0.0
    %1274 = vmatpush2.msra.mxu0 0.0
    %1275 = vmatprep.subr.mxu0 0.0
    %1276 = vmatpush2.msra.mxu0 0.0
    %1277 = vmatprep.subr.mxu0 0.0
    %1278 = vmatpush2.msra.mxu0 0.0
    %1279 = vmatprep.subr.mxu0 0.0
    %1280 = vmatpush2.msra.mxu0 0.0
    %1281 = vmatprep.subr.mxu0 0.0
    %1282 = vmatpush2.msra.mxu0 0.0
    %1283 = vmatprep.subr.mxu0 0.0
    %1284 = vmatpush2.msra.mxu0 0.0
    %1285 = vmatprep.subr.mxu0 0.0
    %1286 = vmatpush2.msra.mxu0 0.0
    %1287 = vmatprep.subr.mxu0 0.0
    %1288 = vmatpush2.msra.mxu0 0.0
    %1289 = vmatprep.subr.mxu0 0.0
    %1290 = vmatpush2.msra.mxu0 0.0
    %1291 = vmatprep.subr.mxu0 0.0
    %1292 = vmatpush2.msra.mxu0 0.0
    %1293 = vmatprep.subr.mxu0 0.0
    %1294 = vmatpush2.msra.mxu0 0.0
    %1295 = vmatprep.subr.mxu0 0.0
    %1296 = vmatpush2.msra.mxu0 0.0
    %1297 = vmatprep.subr.mxu0 0.0
    %1298 = vmatpush2.msra.mxu0 0.0
    %1299 = vmatprep.mubr.f32.mxu0 0.0
    %1300 = vmatmul.mubr.f32.gmra.mxu0 %v1212
    %v1301 = vpop.f32.mrf.mxu0
    %v1302 = vadd.f32 %v1209, %v1301
    %v1303 = vpop.f32.mrf.mxu0
    %1304 = vmatprep.mubr.f32.mxu0 0.0
    %1305 = vmatmul.mubr.f32.gmra.mxu0 %v1215
    %v1306 = vpop.f32.mrf.mxu0
    %v1307 = vadd.f32 %v1209, %v1306
    %v1308 = vpop.f32.mrf.mxu0
    %1309 = vmatprep.mubr.f32.mxu0 0.0
    %1310 = vmatmul.mubr.f32.gmra.mxu0 %v1218
    %v1311 = vpop.f32.mrf.mxu0
    %v1312 = vadd.f32 %v1209, %v1311
    %v1313 = vpop.f32.mrf.mxu0
    %1314 = vmatprep.mubr.f32.mxu0 0.0
    %1315 = vmatmul.mubr.f32.gmra.mxu0 %v1221
    %v1316 = vpop.f32.mrf.mxu0
    %v1317 = vadd.f32 %v1209, %v1316
    %v1318 = vpop.f32.mrf.mxu0
    %1319 = vmatprep.mubr.f32.mxu0 0.0
    %1320 = vmatmul.mubr.f32.gmra.mxu0 %v1224
    %v1321 = vpop.f32.mrf.mxu0
    %v1322 = vadd.f32 %v1209, %v1321
    %v1323 = vpop.f32.mrf.mxu0
    %1324 = vmatprep.mubr.f32.mxu0 0.0
    %1325 = vmatmul.mubr.f32.gmra.mxu0 %v1227
    %v1326 = vpop.f32.mrf.mxu0
    %v1327 = vadd.f32 %v1209, %v1326
    %v1328 = vpop.f32.mrf.mxu0
    %1329 = vmatprep.mubr.f32.mxu0 0.0
    %1330 = vmatmul.mubr.f32.gmra.mxu0 %v1230
    %v1331 = vpop.f32.mrf.mxu0
    %v1332 = vadd.f32 %v1209, %v1331
    %v1333 = vpop.f32.mrf.mxu0
    %1334 = vmatprep.mubr.f32.mxu0 0.0
    %1335 = vmatmul.mubr.f32.gmra.mxu0 %v1233
    %v1336 = vpop.f32.mrf.mxu0
    %v1337 = vadd.f32 %v1209, %v1336
    %v1338 = vpop.f32.mrf.mxu0
    %1339 = vdwg.mxu0
    %v1340 = vsub.f32 0.0, %v1302
    %v1341 = vsub.f32 0.0, %v1307
    %v1342 = vsub.f32 0.0, %v1312
    %v1343 = vsub.f32 0.0, %v1317
    %v1344 = vsub.f32 0.0, %v1322
    %v1345 = vsub.f32 0.0, %v1327
    %v1346 = vsub.f32 0.0, %v1332
    %v1347 = vsub.f32 0.0, %v1337
    %v1348 = vmul.f32 %v1340, 1.442695
    %v1349 = vpow.pop %v1348
    %v1350 = vmul.f32 %v1341, 1.442695
    %v1351 = vpow.pop %v1350
    %v1352 = vmul.f32 %v1342, 1.442695
    %v1353 = vpow.pop %v1352
    %v1354 = vmul.f32 %v1343, 1.442695
    %v1355 = vpow.pop %v1354
    %v1356 = vmul.f32 %v1344, 1.442695
    %v1357 = vpow.pop %v1356
    %v1358 = vmul.f32 %v1345, 1.442695
    %v1359 = vpow.pop %v1358
    %v1360 = vmul.f32 %v1346, 1.442695
    %v1361 = vpow.pop %v1360
    %v1362 = vmul.f32 %v1347, 1.442695
    %v1363 = vpow.pop %v1362
    %v1364 = vadd.f32 %v1349, 1.0
    %v1365 = vadd.f32 %v1351, 1.0
    %v1366 = vadd.f32 %v1353, 1.0
    %v1367 = vadd.f32 %v1355, 1.0
    %v1368 = vadd.f32 %v1357, 1.0
    %v1369 = vadd.f32 %v1359, 1.0
    %v1370 = vadd.f32 %v1361, 1.0
    %v1371 = vadd.f32 %v1363, 1.0
    %v1372 = vrcp.pop %v1364
    %v1373 = vmul.f32 %v1302, %v1372
    %v1374 = vrcp.pop %v1365
    %v1375 = vmul.f32 %v1307, %v1374
    %v1376 = vrcp.pop %v1366
    %v1377 = vmul.f32 %v1312, %v1376
    %v1378 = vrcp.pop %v1367
    %v1379 = vmul.f32 %v1317, %v1378
    %v1380 = vrcp.pop %v1368
    %v1381 = vmul.f32 %v1322, %v1380
    %v1382 = vrcp.pop %v1369
    %v1383 = vmul.f32 %v1327, %v1382
    %v1384 = vrcp.pop %v1370
    %v1385 = vmul.f32 %v1332, %v1384
    %v1386 = vrcp.pop %v1371
    %v1387 = vmul.f32 %v1337, %v1386
    %v1389 = vlaneseq
    %v1390 = vshrl.u32 %v1389, 7
    %v1391 = vsub.s32 0, %v1390
    %v1392 = vrot.slane %v665, %v1391
    %v1394 = vmul.f32 %v1373, %v1392
    %v1395 = vmul.f32 %v1375, %v1392
    %v1396 = vmul.f32 %v1377, %v1392
    %v1397 = vmul.f32 %v1379, %v1392
    %v1398 = vmul.f32 %v1381, %v1392
    %v1399 = vmul.f32 %v1383, %v1392
    %v1400 = vmul.f32 %v1385, %v1392
    %v1401 = vmul.f32 %v1387, %v1392
    %v1402 = vsel %vm848, %v1394, 0.0
    %1403 = vadd.xlane.f32.xlu0 %v1402
    %v1404 = vpop.xlane.xlu0 %1403
    %v1405 = vsel %vm848, %v1395, 0.0
    %1406 = vadd.xlane.f32.xlu0 %v1405
    %v1407 = vpop.xlane.xlu0 %1406
    %v1408 = vsel %vm848, %v1396, 0.0
    %1409 = vadd.xlane.f32.xlu0 %v1408
    %v1410 = vpop.xlane.xlu0 %1409
    %v1411 = vsel %vm848, %v1397, 0.0
    %1412 = vadd.xlane.f32.xlu0 %v1411
    %v1413 = vpop.xlane.xlu0 %1412
    %v1414 = vsel %vm848, %v1398, 0.0
    %1415 = vadd.xlane.f32.xlu0 %v1414
    %v1416 = vpop.xlane.xlu0 %1415
    %v1417 = vsel %vm848, %v1399, 0.0
    %1418 = vadd.xlane.f32.xlu0 %v1417
    %v1419 = vpop.xlane.xlu0 %1418
    %v1420 = vsel %vm848, %v1400, 0.0
    %1421 = vadd.xlane.f32.xlu0 %v1420
    %v1422 = vpop.xlane.xlu0 %1421
    %v1423 = vsel %vm848, %v1401, 0.0
    %1424 = vadd.xlane.f32.xlu0 %v1423
    %v1425 = vpop.xlane.xlu0 %1424
    %v1427 = vlaneseq
    %v1428 = vshrl.u32 %v1427, 7
    %v1429 = vsub.s32 0, %v1428
    %v1430 = vrot.slane %v666, %v1429
    %v1432 = vadd.f32 %v1404, %v1430
    %v1433 = vadd.f32 %v1407, %v1430
    %v1434 = vadd.f32 %v1410, %v1430
    %v1435 = vadd.f32 %v1413, %v1430
    %v1436 = vadd.f32 %v1416, %v1430
    %v1437 = vadd.f32 %v1419, %v1430
    %v1438 = vadd.f32 %v1422, %v1430
    %v1439 = vadd.f32 %v1425, %v1430
    %1441 = vset.pattern.permute.xlu0 0
    %1442 = vperm.xlu0 %1441, %v1432
    %v1443 = vpop.permute.xlu0 %1442
    %1446 = vset.pattern.permute.xlu0 0
    %1447 = vperm.xlu0 %1446, %v1433
    %v1448 = vpop.permute.xlu0 %1447
    %1451 = vset.pattern.permute.xlu0 0
    %1452 = vperm.xlu0 %1451, %v1434
    %v1453 = vpop.permute.xlu0 %1452
    %1456 = vset.pattern.permute.xlu0 0
    %1457 = vperm.xlu0 %1456, %v1435
    %v1458 = vpop.permute.xlu0 %1457
    %1461 = vset.pattern.permute.xlu0 0
    %1462 = vperm.xlu0 %1461, %v1436
    %v1463 = vpop.permute.xlu0 %1462
    %1466 = vset.pattern.permute.xlu0 0
    %1467 = vperm.xlu0 %1466, %v1437
    %v1468 = vpop.permute.xlu0 %1467
    %1471 = vset.pattern.permute.xlu0 0
    %1472 = vperm.xlu0 %1471, %v1438
    %v1473 = vpop.permute.xlu0 %1472
    %1476 = vset.pattern.permute.xlu0 0
    %1477 = vperm.xlu0 %1476, %v1439
    %v1478 = vpop.permute.xlu0 %1477
    %v1480 = vmul.f32 %v752, %v1443
    %v1481 = vmul.f32 %v753, %v1448
    %v1482 = vmul.f32 %v754, %v1453
    %v1483 = vmul.f32 %v755, %v1458
    %v1484 = vmul.f32 %v756, %v1463
    %v1485 = vmul.f32 %v757, %v1468
    %v1486 = vmul.f32 %v758, %v1473
    %v1487 = vmul.f32 %v759, %v1478
    %v1488 = vadd.f32 %v1480, %v1482
    %v1489 = vadd.f32 %v1481, %v1483
    %v1490 = vadd.f32 %v1197, %v1199
    %v1491 = vadd.f32 %v1198, %v1200
    %v1492 = vadd.f32 %v1488, %v1484
    %v1493 = vadd.f32 %v1489, %v1485
    %v1494 = vadd.f32 %v1490, %v1201
    %v1495 = vadd.f32 %v1491, %v1202
    %v1496 = vadd.f32 %v1492, %v1486
    %v1497 = vadd.f32 %v1493, %v1487
    %v1498 = vadd.f32 %v1494, %v1203
    %v1499 = vadd.f32 %v1495, %v1204
    %1501 = vset.pattern.permute.xlu0 0
    %1502 = vperm.xlu0 %1501, %v634
    %v1503 = vpop.permute.xlu0 %1502
    %1506 = vset.pattern.permute.xlu0 0
    %1507 = vperm.xlu0 %1506, %v636
    %v1508 = vpop.permute.xlu0 %1507
    %v1510 = vmul.f32 %v1503, %v1496
    %v1511 = vmul.f32 %v1508, %v1497
    %v1513 = vlaneseq
    %v1514 = vshrl.u32 %v1513, 7
    %v1515 = vsub.s32 0, %v1514
    %v1516 = vrot.slane %v675, %v1515
    %1518 = vmatprep.subr.mxu0 0.0
    %1519 = vmatpush1.msra.mxu0 0.0
    %1520 = vmatprep.subr.mxu0 0.0
    %1521 = vmatpush1.msra.mxu0 0.0
    %1522 = vmatprep.subr.mxu0 0.0
    %1523 = vmatpush1.msra.mxu0 0.0
    %1524 = vmatprep.subr.mxu0 0.0
    %1525 = vmatpush1.msra.mxu0 0.0
    %1526 = vmatprep.subr.mxu0 0.0
    %1527 = vmatpush1.msra.mxu0 0.0
    %1528 = vmatprep.subr.mxu0 0.0
    %1529 = vmatpush1.msra.mxu0 0.0
    %1530 = vmatprep.subr.mxu0 0.0
    %1531 = vmatpush1.msra.mxu0 0.0
    %1532 = vmatprep.subr.mxu0 0.0
    %1533 = vmatpush1.msra.mxu0 0.0
    %1534 = vmatprep.subr.mxu0 0.0
    %1535 = vmatpush1.msra.mxu0 %v674
    %1536 = vmatprep.subr.mxu0 0.0
    %1537 = vmatpush1.msra.mxu0 %v673
    %1538 = vmatprep.subr.mxu0 0.0
    %1539 = vmatpush1.msra.mxu0 %v672
    %1540 = vmatprep.subr.mxu0 0.0
    %1541 = vmatpush1.msra.mxu0 %v671
    %1542 = vmatprep.subr.mxu0 0.0
    %1543 = vmatpush1.msra.mxu0 %v670
    %1544 = vmatprep.subr.mxu0 0.0
    %1545 = vmatpush1.msra.mxu0 %v669
    %1546 = vmatprep.subr.mxu0 0.0
    %1547 = vmatpush1.msra.mxu0 %v668
    %1548 = vmatprep.subr.mxu0 0.0
    %1549 = vmatpush1.msra.mxu0 %v667
    %1550 = vmatprep.subr.mxu0 0.0
    %1551 = vmatpush2.msra.mxu0 0.0
    %1552 = vmatprep.subr.mxu0 0.0
    %1553 = vmatpush2.msra.mxu0 0.0
    %1554 = vmatprep.subr.mxu0 0.0
    %1555 = vmatpush2.msra.mxu0 0.0
    %1556 = vmatprep.subr.mxu0 0.0
    %1557 = vmatpush2.msra.mxu0 0.0
    %1558 = vmatprep.subr.mxu0 0.0
    %1559 = vmatpush2.msra.mxu0 0.0
    %1560 = vmatprep.subr.mxu0 0.0
    %1561 = vmatpush2.msra.mxu0 0.0
    %1562 = vmatprep.subr.mxu0 0.0
    %1563 = vmatpush2.msra.mxu0 0.0
    %1564 = vmatprep.subr.mxu0 0.0
    %1565 = vmatpush2.msra.mxu0 0.0
    %1566 = vmatprep.subr.mxu0 0.0
    %1567 = vmatpush2.msra.mxu0 0.0
    %1568 = vmatprep.subr.mxu0 0.0
    %1569 = vmatpush2.msra.mxu0 0.0
    %1570 = vmatprep.subr.mxu0 0.0
    %1571 = vmatpush2.msra.mxu0 0.0
    %1572 = vmatprep.subr.mxu0 0.0
    %1573 = vmatpush2.msra.mxu0 0.0
    %1574 = vmatprep.subr.mxu0 0.0
    %1575 = vmatpush2.msra.mxu0 0.0
    %1576 = vmatprep.subr.mxu0 0.0
    %1577 = vmatpush2.msra.mxu0 0.0
    %1578 = vmatprep.subr.mxu0 0.0
    %1579 = vmatpush2.msra.mxu0 0.0
    %1580 = vmatprep.subr.mxu0 0.0
    %1581 = vmatpush2.msra.mxu0 0.0
    %1582 = vmatprep.mubr.f32.mxu0 0.0
    %1583 = vmatmul.mubr.f32.gmra.mxu0 %v850
    %v1584 = vpop.f32.mrf.mxu0
    %v1585 = vadd.f32 %v1516, %v1584
    %v1586 = vpop.f32.mrf.mxu0
    %1587 = vmatprep.mubr.f32.mxu0 0.0
    %1588 = vmatmul.mubr.f32.gmra.mxu0 %v853
    %v1589 = vpop.f32.mrf.mxu0
    %v1590 = vadd.f32 %v1516, %v1589
    %v1591 = vpop.f32.mrf.mxu0
    %1592 = vdwg.mxu0
    %v1593 = vsub.f32 0.0, %v1585
    %v1594 = vsub.f32 0.0, %v1590
    %v1595 = vmul.f32 %v1593, 1.442695
    %v1596 = vpow.pop %v1595
    %v1597 = vmul.f32 %v1594, 1.442695
    %v1598 = vpow.pop %v1597
    %v1599 = vadd.f32 %v1596, 1.0
    %v1600 = vadd.f32 %v1598, 1.0
    %v1601 = vrcp.pop %v1599
    %v1602 = vmul.f32 %v1585, %v1601
    %v1603 = vrcp.pop %v1600
    %v1604 = vmul.f32 %v1590, %v1603
    %v1606 = vlaneseq
    %v1607 = vshrl.u32 %v1606, 7
    %v1608 = vsub.s32 0, %v1607
    %v1609 = vrot.slane %v676, %v1608
    %v1611 = vmul.f32 %v1602, %v1609
    %v1612 = vmul.f32 %v1604, %v1609
    %v1613 = vsel %vm848, %v1611, 0.0
    %1614 = vadd.xlane.f32.xlu0 %v1613
    %v1615 = vpop.xlane.xlu0 %1614
    %v1616 = vsel %vm848, %v1612, 0.0
    %1617 = vadd.xlane.f32.xlu0 %v1616
    %v1618 = vpop.xlane.xlu0 %1617
    %v1620 = vlaneseq
    %v1621 = vshrl.u32 %v1620, 7
    %v1622 = vsub.s32 0, %v1621
    %v1623 = vrot.slane %v677, %v1622
    %v1625 = vadd.f32 %v1615, %v1623
    %v1626 = vadd.f32 %v1618, %v1623
    %1628 = vset.pattern.permute.xlu0 0
    %1629 = vperm.xlu0 %1628, %v1625
    %v1630 = vpop.permute.xlu0 %1629
    %1633 = vset.pattern.permute.xlu0 0
    %1634 = vperm.xlu0 %1633, %v1626
    %v1635 = vpop.permute.xlu0 %1634
    %v1637 = vmul.f32 %v1630, %v249
    %v1638 = vmul.f32 %v1635, %v250
    %1641 = vrot.lane.b32.xlu0 %v1510, 4
    %v1642 = vpop.permute.xlu0 %1641
    %1643 = vrot.lane.b32.xlu0 %v1511, 4
    %v1644 = vpop.permute.xlu0 %1643
    %v1647 = vadd.f32 %v1637, %v1642
    %v1648 = vadd.f32 %v1638, %v1644
    %1651 = vrot.lane.b32.xlu0 %v1647, 126
    %v1652 = vpop.permute.xlu0 %1651
    %1653 = vrot.lane.b32.xlu0 %v1648, 126
    %v1654 = vpop.permute.xlu0 %1653
    %v1657 = vadd.f32 %v249, %v1652
    %v1658 = vadd.f32 %v250, %v1654
    %1661 = vrot.lane.b32.xlu0 %v1657, 126
    %v1662 = vpop.permute.xlu0 %1661
    %1663 = vrot.lane.b32.xlu0 %v1658, 126
    %v1664 = vpop.permute.xlu0 %1663
    %v1667 = vadd.f32 %v249, %v1662
    %v1668 = vadd.f32 %v250, %v1664
    %1671 = vrot.lane.b32.xlu0 %v1498, 64
    %v1672 = vpop.permute.xlu0 %1671
    %1673 = vrot.lane.b32.xlu0 %v1499, 64
    %v1674 = vpop.permute.xlu0 %1673
    %v1677 = vsel %vm848, %v623, %v1672
    %v1678 = vsel %vm848, %v624, %v1674
    %v1680 = vlaneseq
    %v1681 = vshrl.u32 %v1680, 7
    %v1682 = vsub.s32 0, %v1681
    %v1683 = vrot.slane %v694, %v1682
    %1685 = vmatprep.subr.mxu0 0.0
    %1686 = vmatpush1.msra.mxu0 %v693
    %1687 = vmatprep.subr.mxu0 0.0
    %1688 = vmatpush1.msra.mxu0 %v692
    %1689 = vmatprep.subr.mxu0 0.0
    %1690 = vmatpush1.msra.mxu0 %v691
    %1691 = vmatprep.subr.mxu0 0.0
    %1692 = vmatpush1.msra.mxu0 %v690
    %1693 = vmatprep.subr.mxu0 0.0
    %1694 = vmatpush1.msra.mxu0 %v689
    %1695 = vmatprep.subr.mxu0 0.0
    %1696 = vmatpush1.msra.mxu0 %v688
    %1697 = vmatprep.subr.mxu0 0.0
    %1698 = vmatpush1.msra.mxu0 %v687
    %1699 = vmatprep.subr.mxu0 0.0
    %1700 = vmatpush1.msra.mxu0 %v686
    %1701 = vmatprep.subr.mxu0 0.0
    %1702 = vmatpush1.msra.mxu0 %v685
    %1703 = vmatprep.subr.mxu0 0.0
    %1704 = vmatpush1.msra.mxu0 %v684
    %1705 = vmatprep.subr.mxu0 0.0
    %1706 = vmatpush1.msra.mxu0 %v683
    %1707 = vmatprep.subr.mxu0 0.0
    %1708 = vmatpush1.msra.mxu0 %v682
    %1709 = vmatprep.subr.mxu0 0.0
    %1710 = vmatpush1.msra.mxu0 %v681
    %1711 = vmatprep.subr.mxu0 0.0
    %1712 = vmatpush1.msra.mxu0 %v680
    %1713 = vmatprep.subr.mxu0 0.0
    %1714 = vmatpush1.msra.mxu0 %v679
    %1715 = vmatprep.subr.mxu0 0.0
    %1716 = vmatpush1.msra.mxu0 %v678
    %1717 = vmatprep.subr.mxu0 0.0
    %1718 = vmatpush2.msra.mxu0 0.0
    %1719 = vmatprep.subr.mxu0 0.0
    %1720 = vmatpush2.msra.mxu0 0.0
    %1721 = vmatprep.subr.mxu0 0.0
    %1722 = vmatpush2.msra.mxu0 0.0
    %1723 = vmatprep.subr.mxu0 0.0
    %1724 = vmatpush2.msra.mxu0 0.0
    %1725 = vmatprep.subr.mxu0 0.0
    %1726 = vmatpush2.msra.mxu0 0.0
    %1727 = vmatprep.subr.mxu0 0.0
    %1728 = vmatpush2.msra.mxu0 0.0
    %1729 = vmatprep.subr.mxu0 0.0
    %1730 = vmatpush2.msra.mxu0 0.0
    %1731 = vmatprep.subr.mxu0 0.0
    %1732 = vmatpush2.msra.mxu0 0.0
    %1733 = vmatprep.subr.mxu0 0.0
    %1734 = vmatpush2.msra.mxu0 0.0
    %1735 = vmatprep.subr.mxu0 0.0
    %1736 = vmatpush2.msra.mxu0 0.0
    %1737 = vmatprep.subr.mxu0 0.0
    %1738 = vmatpush2.msra.mxu0 0.0
    %1739 = vmatprep.subr.mxu0 0.0
    %1740 = vmatpush2.msra.mxu0 0.0
    %1741 = vmatprep.subr.mxu0 0.0
    %1742 = vmatpush2.msra.mxu0 0.0
    %1743 = vmatprep.subr.mxu0 0.0
    %1744 = vmatpush2.msra.mxu0 0.0
    %1745 = vmatprep.subr.mxu0 0.0
    %1746 = vmatpush2.msra.mxu0 0.0
    %1747 = vmatprep.subr.mxu0 0.0
    %1748 = vmatpush2.msra.mxu0 0.0
    %1749 = vmatprep.mubr.f32.mxu0 0.0
    %1750 = vmatmul.mubr.f32.gmra.mxu0 %v1677
    %v1751 = vpop.f32.mrf.mxu0
    %v1752 = vadd.f32 %v1683, %v1751
    %v1753 = vpop.f32.mrf.mxu0
    %1754 = vmatprep.mubr.f32.mxu0 0.0
    %1755 = vmatmul.mubr.f32.gmra.mxu0 %v1678
    %v1756 = vpop.f32.mrf.mxu0
    %v1757 = vadd.f32 %v1683, %v1756
    %v1758 = vpop.f32.mrf.mxu0
    %1759 = vdwg.mxu0
    %v1760 = vsub.f32 0.0, %v1752
    %v1761 = vsub.f32 0.0, %v1757
    %v1762 = vmul.f32 %v1760, 1.442695
    %v1763 = vpow.pop %v1762
    %v1764 = vmul.f32 %v1761, 1.442695
    %v1765 = vpow.pop %v1764
    %v1766 = vadd.f32 %v1763, 1.0
    %v1767 = vadd.f32 %v1765, 1.0
    %v1768 = vrcp.pop %v1766
    %v1769 = vmul.f32 %v1752, %v1768
    %v1770 = vrcp.pop %v1767
    %v1771 = vmul.f32 %v1757, %v1770
    %v1773 = vsel %vm848, %v1769, 0
    %v1776 = vsel %vm848, %v1771, 0
    %1778 = vmatprep.subr.mxu0 0.0
    %1779 = vmatpush1.msra.mxu0 0.0
    %1780 = vmatprep.subr.mxu0 0.0
    %1781 = vmatpush1.msra.mxu0 0.0
    %1782 = vmatprep.subr.mxu0 0.0
    %1783 = vmatpush1.msra.mxu0 0.0
    %1784 = vmatprep.subr.mxu0 0.0
    %1785 = vmatpush1.msra.mxu0 0.0
    %1786 = vmatprep.subr.mxu0 0.0
    %1787 = vmatpush1.msra.mxu0 0.0
    %1788 = vmatprep.subr.mxu0 0.0
    %1789 = vmatpush1.msra.mxu0 0.0
    %1790 = vmatprep.subr.mxu0 0.0
    %1791 = vmatpush1.msra.mxu0 0.0
    %1792 = vmatprep.subr.mxu0 0.0
    %1793 = vmatpush1.msra.mxu0 0.0
    %1794 = vmatprep.subr.mxu0 0.0
    %1795 = vmatpush1.msra.mxu0 %v702
    %1796 = vmatprep.subr.mxu0 0.0
    %1797 = vmatpush1.msra.mxu0 %v701
    %1798 = vmatprep.subr.mxu0 0.0
    %1799 = vmatpush1.msra.mxu0 %v700
    %1800 = vmatprep.subr.mxu0 0.0
    %1801 = vmatpush1.msra.mxu0 %v699
    %1802 = vmatprep.subr.mxu0 0.0
    %1803 = vmatpush1.msra.mxu0 %v698
    %1804 = vmatprep.subr.mxu0 0.0
    %1805 = vmatpush1.msra.mxu0 %v697
    %1806 = vmatprep.subr.mxu0 0.0
    %1807 = vmatpush1.msra.mxu0 %v696
    %1808 = vmatprep.subr.mxu0 0.0
    %1809 = vmatpush1.msra.mxu0 %v695
    %1810 = vmatprep.subr.mxu0 0.0
    %1811 = vmatpush2.msra.mxu0 0.0
    %1812 = vmatprep.subr.mxu0 0.0
    %1813 = vmatpush2.msra.mxu0 0.0
    %1814 = vmatprep.subr.mxu0 0.0
    %1815 = vmatpush2.msra.mxu0 0.0
    %1816 = vmatprep.subr.mxu0 0.0
    %1817 = vmatpush2.msra.mxu0 0.0
    %1818 = vmatprep.subr.mxu0 0.0
    %1819 = vmatpush2.msra.mxu0 0.0
    %1820 = vmatprep.subr.mxu0 0.0
    %1821 = vmatpush2.msra.mxu0 0.0
    %1822 = vmatprep.subr.mxu0 0.0
    %1823 = vmatpush2.msra.mxu0 0.0
    %1824 = vmatprep.subr.mxu0 0.0
    %1825 = vmatpush2.msra.mxu0 0.0
    %1826 = vmatprep.subr.mxu0 0.0
    %1827 = vmatpush2.msra.mxu0 0.0
    %1828 = vmatprep.subr.mxu0 0.0
    %1829 = vmatpush2.msra.mxu0 0.0
    %1830 = vmatprep.subr.mxu0 0.0
    %1831 = vmatpush2.msra.mxu0 0.0
    %1832 = vmatprep.subr.mxu0 0.0
    %1833 = vmatpush2.msra.mxu0 0.0
    %1834 = vmatprep.subr.mxu0 0.0
    %1835 = vmatpush2.msra.mxu0 0.0
    %1836 = vmatprep.subr.mxu0 0.0
    %1837 = vmatpush2.msra.mxu0 0.0
    %1838 = vmatprep.subr.mxu0 0.0
    %1839 = vmatpush2.msra.mxu0 0.0
    %1840 = vmatprep.subr.mxu0 0.0
    %1841 = vmatpush2.msra.mxu0 0.0
    %1842 = vmatprep.mubr.f32.mxu0 0.0
    %1843 = vmatmul.mubr.f32.gmra.mxu0 %v1773
    %v1844 = vpop.f32.mrf.mxu0
    %v1845 = vadd.f32 0.0, %v1844
    %v1846 = vpop.f32.mrf.mxu0
    %1847 = vmatprep.mubr.f32.mxu0 0.0
    %1848 = vmatmul.mubr.f32.gmra.mxu0 %v1776
    %v1849 = vpop.f32.mrf.mxu0
    %v1850 = vadd.f32 0.0, %v1849
    %v1851 = vpop.f32.mrf.mxu0
    %1852 = vdwg.mxu0
    %v1853 = vadd.f32 %v623, %v1845
    %v1854 = vadd.f32 %v624, %v1850
    %v1856 = vlaneseq
    %v1857 = vshrl.u32 %v1856, 7
    %v1858 = vsub.s32 0, %v1857
    %v1859 = vrot.slane %v703, %v1858
    %v1861 = vadd.f32 %v1853, %v1859
    %v1862 = vadd.f32 %v1854, %v1859
    %s1863 = scalar_lea.vmem %s25, 64
    %v1864 = vld [vmem:[%s1863] sm:$0xff]
    %v1865 = vld [vmem:[%s1863 + $0x8] sm:$0xff]
    %v1866 = vld [vmem:[%s1863 + $0x10] sm:$0xff]
    %v1867 = vld [vmem:[%s1863 + $0x18] sm:$0xff]
    %v1868 = vld [vmem:[%s1863 + $0x20] sm:$0xff]
    %v1869 = vld [vmem:[%s1863 + $0x28] sm:$0xff]
    %v1870 = vld [vmem:[%s1863 + $0x30] sm:$0xff]
    %v1871 = vld [vmem:[%s1863 + $0x38] sm:$0xff]
    %s1872 = scalar_lea.vmem %s27, 1
    %v1873 = vld [vmem:[%s1872] sm:$0x1]
    %s1874 = scalar_lea.vmem %s29, 1
    %v1875 = vld [vmem:[%s1874] sm:$0x1]
    %s1876 = scalar_lea.vmem %s31, 64
    %v1877 = vld [vmem:[%s1876] sm:$0xff]
    %v1878 = vld [vmem:[%s1876 + $0x8] sm:$0xff]
    %v1879 = vld [vmem:[%s1876 + $0x10] sm:$0xff]
    %v1880 = vld [vmem:[%s1876 + $0x18] sm:$0xff]
    %v1881 = vld [vmem:[%s1876 + $0x20] sm:$0xff]
    %v1882 = vld [vmem:[%s1876 + $0x28] sm:$0xff]
    %v1883 = vld [vmem:[%s1876 + $0x30] sm:$0xff]
    %v1884 = vld [vmem:[%s1876 + $0x38] sm:$0xff]
    %s1885 = scalar_lea.vmem %s33, 1
    %v1886 = vld [vmem:[%s1885] sm:$0x1]
    %s1887 = scalar_lea.vmem %s35, 64
    %v1888 = vld [vmem:[%s1887] sm:$0xff]
    %v1889 = vld [vmem:[%s1887 + $0x8] sm:$0xff]
    %v1890 = vld [vmem:[%s1887 + $0x10] sm:$0xff]
    %v1891 = vld [vmem:[%s1887 + $0x18] sm:$0xff]
    %v1892 = vld [vmem:[%s1887 + $0x20] sm:$0xff]
    %v1893 = vld [vmem:[%s1887 + $0x28] sm:$0xff]
    %v1894 = vld [vmem:[%s1887 + $0x30] sm:$0xff]
    %v1895 = vld [vmem:[%s1887 + $0x38] sm:$0xff]
    %s1896 = scalar_lea.vmem %s37, 1
    %v1897 = vld [vmem:[%s1896] sm:$0x1]
    %s1898 = scalar_lea.vmem %s39, 1
    %v1899 = vld [vmem:[%s1898] sm:$0x1]
    %s1900 = scalar_lea.vmem %s41, 1
    %v1901 = vld [vmem:[%s1900] sm:$0x1]
    %s1902 = scalar_lea.vmem [#allocation11], 64
    %v1903 = vld [vmem:[%s1902] sm:$0xff]
    %v1904 = vld [vmem:[%s1902 + $0x8] sm:$0xff]
    %v1905 = vld [vmem:[%s1902 + $0x10] sm:$0xff]
    %v1906 = vld [vmem:[%s1902 + $0x18] sm:$0xff]
    %v1907 = vld [vmem:[%s1902 + $0x20] sm:$0xff]
    %v1908 = vld [vmem:[%s1902 + $0x28] sm:$0xff]
    %v1909 = vld [vmem:[%s1902 + $0x30] sm:$0xff]
    %v1910 = vld [vmem:[%s1902 + $0x38] sm:$0xff]
    %s1911 = scalar_lea.vmem [#allocation13], 1
    %v1912 = vld [vmem:[%s1911] sm:$0x1]
    %s1913 = scalar_lea.vmem [#allocation14], 1
    %v1914 = vld [vmem:[%s1913] sm:$0x1]
    %s1915 = scalar_lea.vmem %s49, 1
    %v1916 = vld [vmem:[%s1915] sm:$0x1]
    %s1917 = scalar_lea.vmem %s51, 128
    %v1918 = vld [vmem:[%s1917] sm:$0xff]
    %v1919 = vld [vmem:[%s1917 + $0x8] sm:$0xff]
    %v1920 = vld [vmem:[%s1917 + $0x10] sm:$0xff]
    %v1921 = vld [vmem:[%s1917 + $0x18] sm:$0xff]
    %v1922 = vld [vmem:[%s1917 + $0x20] sm:$0xff]
    %v1923 = vld [vmem:[%s1917 + $0x28] sm:$0xff]
    %v1924 = vld [vmem:[%s1917 + $0x30] sm:$0xff]
    %v1925 = vld [vmem:[%s1917 + $0x38] sm:$0xff]
    %v1926 = vld [vmem:[%s1917 + $0x40] sm:$0xff]
    %v1927 = vld [vmem:[%s1917 + $0x48] sm:$0xff]
    %v1928 = vld [vmem:[%s1917 + $0x50] sm:$0xff]
    %v1929 = vld [vmem:[%s1917 + $0x58] sm:$0xff]
    %v1930 = vld [vmem:[%s1917 + $0x60] sm:$0xff]
    %v1931 = vld [vmem:[%s1917 + $0x68] sm:$0xff]
    %v1932 = vld [vmem:[%s1917 + $0x70] sm:$0xff]
    %v1933 = vld [vmem:[%s1917 + $0x78] sm:$0xff]
    %s1934 = scalar_lea.vmem %s53, 1
    %v1935 = vld [vmem:[%s1934] sm:$0x1]
    %s1936 = scalar_lea.vmem [#allocation16], 64
    %v1937 = vld [vmem:[%s1936] sm:$0xff]
    %v1938 = vld [vmem:[%s1936 + $0x8] sm:$0xff]
    %v1939 = vld [vmem:[%s1936 + $0x10] sm:$0xff]
    %v1940 = vld [vmem:[%s1936 + $0x18] sm:$0xff]
    %v1941 = vld [vmem:[%s1936 + $0x20] sm:$0xff]
    %v1942 = vld [vmem:[%s1936 + $0x28] sm:$0xff]
    %v1943 = vld [vmem:[%s1936 + $0x30] sm:$0xff]
    %v1944 = vld [vmem:[%s1936 + $0x38] sm:$0xff]
    %s1945 = scalar_lea.vmem [#allocation17], 1
    %v1946 = vld [vmem:[%s1945] sm:$0x1]
    %v1947 = vsub.f32 %v251, %v1667
    %v1948 = vsub.f32 %v252, %v1668
    %v1949 = vsub.f32 %v253, %v1667
    %v1950 = vsub.f32 %v254, %v1668
    %v1951 = vsub.f32 %v255, %v1667
    %v1952 = vsub.f32 %v256, %v1668
    %v1953 = vsub.f32 %v257, %v1667
    %v1954 = vsub.f32 %v258, %v1668
    %v1955 = vmul.f32 %v1947, %v715
    %v1956 = vmul.f32 %v1948, %v720
    %v1957 = vmul.f32 %v1949, %v725
    %v1958 = vmul.f32 %v1950, %v730
    %v1959 = vmul.f32 %v1951, %v735
    %v1960 = vmul.f32 %v1952, %v740
    %v1961 = vmul.f32 %v1953, %v745
    %v1962 = vmul.f32 %v1954, %v750
    %v1963 = vmul.f32 %v1955, %v1955
    %v1964 = vmul.f32 %v1956, %v1956
    %v1965 = vmul.f32 %v1957, %v1957
    %v1966 = vmul.f32 %v1958, %v1958
    %v1967 = vmul.f32 %v1959, %v1959
    %v1968 = vmul.f32 %v1960, %v1960
    %v1969 = vmul.f32 %v1961, %v1961
    %v1970 = vmul.f32 %v1962, %v1962
    %v1971 = vsel %vm277, %v1963, 0.0
    %1972 = vadd.xlane.f32.xlu0 %v1971
    %v1973 = vpop.xlane.xlu0 %1972
    %v1974 = vsel %vm277, %v1964, 0.0
    %1975 = vadd.xlane.f32.xlu0 %v1974
    %v1976 = vpop.xlane.xlu0 %1975
    %v1977 = vsel %vm277, %v1965, 0.0
    %1978 = vadd.xlane.f32.xlu0 %v1977
    %v1979 = vpop.xlane.xlu0 %1978
    %v1980 = vsel %vm277, %v1966, 0.0
    %1981 = vadd.xlane.f32.xlu0 %v1980
    %v1982 = vpop.xlane.xlu0 %1981
    %v1983 = vsel %vm277, %v1967, 0.0
    %1984 = vadd.xlane.f32.xlu0 %v1983
    %v1985 = vpop.xlane.xlu0 %1984
    %v1986 = vsel %vm277, %v1968, 0.0
    %1987 = vadd.xlane.f32.xlu0 %v1986
    %v1988 = vpop.xlane.xlu0 %1987
    %v1989 = vsel %vm277, %v1969, 0.0
    %1990 = vadd.xlane.f32.xlu0 %v1989
    %v1991 = vpop.xlane.xlu0 %1990
    %v1992 = vsel %vm277, %v1970, 0.0
    %1993 = vadd.xlane.f32.xlu0 %v1992
    %v1994 = vpop.xlane.xlu0 %1993
    %v1995 = vrsqrt.pop %v1973
    %v1996 = vmul.f32 %v1973, %v1995
    %vm1997 = vcmp.eq.f32.partialorder %v1973, inf
    %v1998 = vsel %vm1997, %v1973, %v1996
    %vm1999 = vcmp.eq.f32.partialorder %v1973, 0.0
    %v2000 = vand.u32 %v1973, 2147483648
    %v2001 = vsel %vm1999, %v2000, %v1998
    %v2002 = vrsqrt.pop %v1976
    %v2003 = vmul.f32 %v1976, %v2002
    %vm2004 = vcmp.eq.f32.partialorder %v1976, inf
    %v2005 = vsel %vm2004, %v1976, %v2003
    %vm2006 = vcmp.eq.f32.partialorder %v1976, 0.0
    %v2007 = vand.u32 %v1976, 2147483648
    %v2008 = vsel %vm2006, %v2007, %v2005
    %v2009 = vrsqrt.pop %v1979
    %v2010 = vmul.f32 %v1979, %v2009
    %vm2011 = vcmp.eq.f32.partialorder %v1979, inf
    %v2012 = vsel %vm2011, %v1979, %v2010
    %vm2013 = vcmp.eq.f32.partialorder %v1979, 0.0
    %v2014 = vand.u32 %v1979, 2147483648
    %v2015 = vsel %vm2013, %v2014, %v2012
    %v2016 = vrsqrt.pop %v1982
    %v2017 = vmul.f32 %v1982, %v2016
    %vm2018 = vcmp.eq.f32.partialorder %v1982, inf
    %v2019 = vsel %vm2018, %v1982, %v2017
    %vm2020 = vcmp.eq.f32.partialorder %v1982, 0.0
    %v2021 = vand.u32 %v1982, 2147483648
    %v2022 = vsel %vm2020, %v2021, %v2019
    %v2023 = vrsqrt.pop %v1985
    %v2024 = vmul.f32 %v1985, %v2023
    %vm2025 = vcmp.eq.f32.partialorder %v1985, inf
    %v2026 = vsel %vm2025, %v1985, %v2024
    %vm2027 = vcmp.eq.f32.partialorder %v1985, 0.0
    %v2028 = vand.u32 %v1985, 2147483648
    %v2029 = vsel %vm2027, %v2028, %v2026
    %v2030 = vrsqrt.pop %v1988
    %v2031 = vmul.f32 %v1988, %v2030
    %vm2032 = vcmp.eq.f32.partialorder %v1988, inf
    %v2033 = vsel %vm2032, %v1988, %v2031
    %vm2034 = vcmp.eq.f32.partialorder %v1988, 0.0
    %v2035 = vand.u32 %v1988, 2147483648
    %v2036 = vsel %vm2034, %v2035, %v2033
    %v2037 = vrsqrt.pop %v1991
    %v2038 = vmul.f32 %v1991, %v2037
    %vm2039 = vcmp.eq.f32.partialorder %v1991, inf
    %v2040 = vsel %vm2039, %v1991, %v2038
    %vm2041 = vcmp.eq.f32.partialorder %v1991, 0.0
    %v2042 = vand.u32 %v1991, 2147483648
    %v2043 = vsel %vm2041, %v2042, %v2040
    %v2044 = vrsqrt.pop %v1994
    %v2045 = vmul.f32 %v1994, %v2044
    %vm2046 = vcmp.eq.f32.partialorder %v1994, inf
    %v2047 = vsel %vm2046, %v1994, %v2045
    %vm2048 = vcmp.eq.f32.partialorder %v1994, 0.0
    %v2049 = vand.u32 %v1994, 2147483648
    %v2050 = vsel %vm2048, %v2049, %v2047
    %v2052 = vsel %vm848, %v1861, 0
    %v2055 = vsel %vm848, %v1862, 0
    %2057 = vmatprep.subr.mxu0 0.0
    %2058 = vmatpush1.msra.mxu0 0.0
    %2059 = vmatprep.subr.mxu0 0.0
    %2060 = vmatpush1.msra.mxu0 0.0
    %2061 = vmatprep.subr.mxu0 0.0
    %2062 = vmatpush1.msra.mxu0 0.0
    %2063 = vmatprep.subr.mxu0 0.0
    %2064 = vmatpush1.msra.mxu0 0.0
    %2065 = vmatprep.subr.mxu0 0.0
    %2066 = vmatpush1.msra.mxu0 0.0
    %2067 = vmatprep.subr.mxu0 0.0
    %2068 = vmatpush1.msra.mxu0 0.0
    %2069 = vmatprep.subr.mxu0 0.0
    %2070 = vmatpush1.msra.mxu0 0.0
    %2071 = vmatprep.subr.mxu0 0.0
    %2072 = vmatpush1.msra.mxu0 0.0
    %2073 = vmatprep.subr.mxu0 0.0
    %2074 = vmatpush1.msra.mxu0 %v1871
    %2075 = vmatprep.subr.mxu0 0.0
    %2076 = vmatpush1.msra.mxu0 %v1870
    %2077 = vmatprep.subr.mxu0 0.0
    %2078 = vmatpush1.msra.mxu0 %v1869
    %2079 = vmatprep.subr.mxu0 0.0
    %2080 = vmatpush1.msra.mxu0 %v1868
    %2081 = vmatprep.subr.mxu0 0.0
    %2082 = vmatpush1.msra.mxu0 %v1867
    %2083 = vmatprep.subr.mxu0 0.0
    %2084 = vmatpush1.msra.mxu0 %v1866
    %2085 = vmatprep.subr.mxu0 0.0
    %2086 = vmatpush1.msra.mxu0 %v1865
    %2087 = vmatprep.subr.mxu0 0.0
    %2088 = vmatpush1.msra.mxu0 %v1864
    %2089 = vmatprep.subr.mxu0 0.0
    %2090 = vmatpush2.msra.mxu0 0.0
    %2091 = vmatprep.subr.mxu0 0.0
    %2092 = vmatpush2.msra.mxu0 0.0
    %2093 = vmatprep.subr.mxu0 0.0
    %2094 = vmatpush2.msra.mxu0 0.0
    %2095 = vmatprep.subr.mxu0 0.0
    %2096 = vmatpush2.msra.mxu0 0.0
    %2097 = vmatprep.subr.mxu0 0.0
    %2098 = vmatpush2.msra.mxu0 0.0
    %2099 = vmatprep.subr.mxu0 0.0
    %2100 = vmatpush2.msra.mxu0 0.0
    %2101 = vmatprep.subr.mxu0 0.0
    %2102 = vmatpush2.msra.mxu0 0.0
    %2103 = vmatprep.subr.mxu0 0.0
    %2104 = vmatpush2.msra.mxu0 0.0
    %2105 = vmatprep.subr.mxu0 0.0
    %2106 = vmatpush2.msra.mxu0 0.0
    %2107 = vmatprep.subr.mxu0 0.0
    %2108 = vmatpush2.msra.mxu0 0.0
    %2109 = vmatprep.subr.mxu0 0.0
    %2110 = vmatpush2.msra.mxu0 0.0
    %2111 = vmatprep.subr.mxu0 0.0
    %2112 = vmatpush2.msra.mxu0 0.0
    %2113 = vmatprep.subr.mxu0 0.0
    %2114 = vmatpush2.msra.mxu0 0.0
    %2115 = vmatprep.subr.mxu0 0.0
    %2116 = vmatpush2.msra.mxu0 0.0
    %2117 = vmatprep.subr.mxu0 0.0
    %2118 = vmatpush2.msra.mxu0 0.0
    %2119 = vmatprep.subr.mxu0 0.0
    %2120 = vmatpush2.msra.mxu0 0.0
    %2121 = vmatprep.mubr.f32.mxu0 0.0
    %2122 = vmatmul.mubr.f32.gmra.mxu0 %v2052
    %v2123 = vpop.f32.mrf.mxu0
    %v2124 = vadd.f32 0.0, %v2123
    %v2125 = vpop.f32.mrf.mxu0
    %2126 = vmatprep.mubr.f32.mxu0 0.0
    %2127 = vmatmul.mubr.f32.gmra.mxu0 %v2055
    %v2128 = vpop.f32.mrf.mxu0
    %v2129 = vadd.f32 0.0, %v2128
    %v2130 = vpop.f32.mrf.mxu0
    %2131 = vdwg.mxu0
    %v2133 = vlaneseq
    %v2134 = vshrl.u32 %v2133, 7
    %v2135 = vsub.s32 0, %v2134
    %v2136 = vrot.slane %v1873, %v2135
    %v2138 = vmul.f32 %v2001, %v2136
    %v2139 = vmul.f32 %v2008, %v2136
    %v2140 = vmul.f32 %v2015, %v2136
    %v2141 = vmul.f32 %v2022, %v2136
    %v2142 = vmul.f32 %v2029, %v2136
    %v2143 = vmul.f32 %v2036, %v2136
    %v2144 = vmul.f32 %v2043, %v2136
    %v2145 = vmul.f32 %v2050, %v2136
    %v2146 = vadd.f32 %v2124, %v2138
    %v2147 = vadd.f32 %v2129, %v2139
    %v2148 = vadd.f32 %v2124, %v2140
    %v2149 = vadd.f32 %v2129, %v2141
    %v2150 = vadd.f32 %v2124, %v2142
    %v2151 = vadd.f32 %v2129, %v2143
    %v2152 = vadd.f32 %v2124, %v2144
    %v2153 = vadd.f32 %v2129, %v2145
    %v2155 = vlaneseq
    %v2156 = vshrl.u32 %v2155, 7
    %v2157 = vsub.s32 0, %v2156
    %v2158 = vrot.slane %v1875, %v2157
    %v2160 = vadd.f32 %v2146, %v2158
    %v2161 = vadd.f32 %v2147, %v2158
    %v2162 = vadd.f32 %v2148, %v2158
    %v2163 = vadd.f32 %v2149, %v2158
    %v2164 = vadd.f32 %v2150, %v2158
    %v2165 = vadd.f32 %v2151, %v2158
    %v2166 = vadd.f32 %v2152, %v2158
    %v2167 = vadd.f32 %v2153, %v2158
    %v2168 = vsub.f32 0.0, %v2160
    %v2169 = vsub.f32 0.0, %v2161
    %v2170 = vsub.f32 0.0, %v2162
    %v2171 = vsub.f32 0.0, %v2163
    %v2172 = vsub.f32 0.0, %v2164
    %v2173 = vsub.f32 0.0, %v2165
    %v2174 = vsub.f32 0.0, %v2166
    %v2175 = vsub.f32 0.0, %v2167
    %v2176 = vmul.f32 %v2168, 1.442695
    %v2177 = vpow.pop %v2176
    %v2178 = vmul.f32 %v2169, 1.442695
    %v2179 = vpow.pop %v2178
    %v2180 = vmul.f32 %v2170, 1.442695
    %v2181 = vpow.pop %v2180
    %v2182 = vmul.f32 %v2171, 1.442695
    %v2183 = vpow.pop %v2182
    %v2184 = vmul.f32 %v2172, 1.442695
    %v2185 = vpow.pop %v2184
    %v2186 = vmul.f32 %v2173, 1.442695
    %v2187 = vpow.pop %v2186
    %v2188 = vmul.f32 %v2174, 1.442695
    %v2189 = vpow.pop %v2188
    %v2190 = vmul.f32 %v2175, 1.442695
    %v2191 = vpow.pop %v2190
    %v2192 = vadd.f32 %v2177, 1.0
    %v2193 = vadd.f32 %v2179, 1.0
    %v2194 = vadd.f32 %v2181, 1.0
    %v2195 = vadd.f32 %v2183, 1.0
    %v2196 = vadd.f32 %v2185, 1.0
    %v2197 = vadd.f32 %v2187, 1.0
    %v2198 = vadd.f32 %v2189, 1.0
    %v2199 = vadd.f32 %v2191, 1.0
    %v2200 = vrcp.pop %v2192
    %v2201 = vmul.f32 %v2160, %v2200
    %v2202 = vrcp.pop %v2193
    %v2203 = vmul.f32 %v2161, %v2202
    %v2204 = vrcp.pop %v2194
    %v2205 = vmul.f32 %v2162, %v2204
    %v2206 = vrcp.pop %v2195
    %v2207 = vmul.f32 %v2163, %v2206
    %v2208 = vrcp.pop %v2196
    %v2209 = vmul.f32 %v2164, %v2208
    %v2210 = vrcp.pop %v2197
    %v2211 = vmul.f32 %v2165, %v2210
    %v2212 = vrcp.pop %v2198
    %v2213 = vmul.f32 %v2166, %v2212
    %v2214 = vrcp.pop %v2199
    %v2215 = vmul.f32 %v2167, %v2214
    %v2217 = vlaneseq
    %v2218 = vshrl.u32 %v2217, 7
    %v2219 = vsub.s32 0, %v2218
    %v2220 = vrot.slane %v1886, %v2219
    %v2223 = vsel %vm848, %v2201, 0
    %v2226 = vsel %vm848, %v2203, 0
    %v2229 = vsel %vm848, %v2205, 0
    %v2232 = vsel %vm848, %v2207, 0
    %v2235 = vsel %vm848, %v2209, 0
    %v2238 = vsel %vm848, %v2211, 0
    %v2241 = vsel %vm848, %v2213, 0
    %v2244 = vsel %vm848, %v2215, 0
    %2246 = vmatprep.subr.mxu0 0.0
    %2247 = vmatpush1.msra.mxu0 0.0
    %2248 = vmatprep.subr.mxu0 0.0
    %2249 = vmatpush1.msra.mxu0 0.0
    %2250 = vmatprep.subr.mxu0 0.0
    %2251 = vmatpush1.msra.mxu0 0.0
    %2252 = vmatprep.subr.mxu0 0.0
    %2253 = vmatpush1.msra.mxu0 0.0
    %2254 = vmatprep.subr.mxu0 0.0
    %2255 = vmatpush1.msra.mxu0 0.0
    %2256 = vmatprep.subr.mxu0 0.0
    %2257 = vmatpush1.msra.mxu0 0.0
    %2258 = vmatprep.subr.mxu0 0.0
    %2259 = vmatpush1.msra.mxu0 0.0
    %2260 = vmatprep.subr.mxu0 0.0
    %2261 = vmatpush1.msra.mxu0 0.0
    %2262 = vmatprep.subr.mxu0 0.0
    %2263 = vmatpush1.msra.mxu0 %v1884
    %2264 = vmatprep.subr.mxu0 0.0
    %2265 = vmatpush1.msra.mxu0 %v1883
    %2266 = vmatprep.subr.mxu0 0.0
    %2267 = vmatpush1.msra.mxu0 %v1882
    %2268 = vmatprep.subr.mxu0 0.0
    %2269 = vmatpush1.msra.mxu0 %v1881
    %2270 = vmatprep.subr.mxu0 0.0
    %2271 = vmatpush1.msra.mxu0 %v1880
    %2272 = vmatprep.subr.mxu0 0.0
    %2273 = vmatpush1.msra.mxu0 %v1879
    %2274 = vmatprep.subr.mxu0 0.0
    %2275 = vmatpush1.msra.mxu0 %v1878
    %2276 = vmatprep.subr.mxu0 0.0
    %2277 = vmatpush1.msra.mxu0 %v1877
    %2278 = vmatprep.subr.mxu0 0.0
    %2279 = vmatpush2.msra.mxu0 0.0
    %2280 = vmatprep.subr.mxu0 0.0
    %2281 = vmatpush2.msra.mxu0 0.0
    %2282 = vmatprep.subr.mxu0 0.0
    %2283 = vmatpush2.msra.mxu0 0.0
    %2284 = vmatprep.subr.mxu0 0.0
    %2285 = vmatpush2.msra.mxu0 0.0
    %2286 = vmatprep.subr.mxu0 0.0
    %2287 = vmatpush2.msra.mxu0 0.0
    %2288 = vmatprep.subr.mxu0 0.0
    %2289 = vmatpush2.msra.mxu0 0.0
    %2290 = vmatprep.subr.mxu0 0.0
    %2291 = vmatpush2.msra.mxu0 0.0
    %2292 = vmatprep.subr.mxu0 0.0
    %2293 = vmatpush2.msra.mxu0 0.0
    %2294 = vmatprep.subr.mxu0 0.0
    %2295 = vmatpush2.msra.mxu0 0.0
    %2296 = vmatprep.subr.mxu0 0.0
    %2297 = vmatpush2.msra.mxu0 0.0
    %2298 = vmatprep.subr.mxu0 0.0
    %2299 = vmatpush2.msra.mxu0 0.0
    %2300 = vmatprep.subr.mxu0 0.0
    %2301 = vmatpush2.msra.mxu0 0.0
    %2302 = vmatprep.subr.mxu0 0.0
    %2303 = vmatpush2.msra.mxu0 0.0
    %2304 = vmatprep.subr.mxu0 0.0
    %2305 = vmatpush2.msra.mxu0 0.0
    %2306 = vmatprep.subr.mxu0 0.0
    %2307 = vmatpush2.msra.mxu0 0.0
    %2308 = vmatprep.subr.mxu0 0.0
    %2309 = vmatpush2.msra.mxu0 0.0
    %2310 = vmatprep.mubr.f32.mxu0 0.0
    %2311 = vmatmul.mubr.f32.gmra.mxu0 %v2223
    %v2312 = vpop.f32.mrf.mxu0
    %v2313 = vadd.f32 %v2220, %v2312
    %v2314 = vpop.f32.mrf.mxu0
    %2315 = vmatprep.mubr.f32.mxu0 0.0
    %2316 = vmatmul.mubr.f32.gmra.mxu0 %v2226
    %v2317 = vpop.f32.mrf.mxu0
    %v2318 = vadd.f32 %v2220, %v2317
    %v2319 = vpop.f32.mrf.mxu0
    %2320 = vmatprep.mubr.f32.mxu0 0.0
    %2321 = vmatmul.mubr.f32.gmra.mxu0 %v2229
    %v2322 = vpop.f32.mrf.mxu0
    %v2323 = vadd.f32 %v2220, %v2322
    %v2324 = vpop.f32.mrf.mxu0
    %2325 = vmatprep.mubr.f32.mxu0 0.0
    %2326 = vmatmul.mubr.f32.gmra.mxu0 %v2232
    %v2327 = vpop.f32.mrf.mxu0
    %v2328 = vadd.f32 %v2220, %v2327
    %v2329 = vpop.f32.mrf.mxu0
    %2330 = vmatprep.mubr.f32.mxu0 0.0
    %2331 = vmatmul.mubr.f32.gmra.mxu0 %v2235
    %v2332 = vpop.f32.mrf.mxu0
    %v2333 = vadd.f32 %v2220, %v2332
    %v2334 = vpop.f32.mrf.mxu0
    %2335 = vmatprep.mubr.f32.mxu0 0.0
    %2336 = vmatmul.mubr.f32.gmra.mxu0 %v2238
    %v2337 = vpop.f32.mrf.mxu0
    %v2338 = vadd.f32 %v2220, %v2337
    %v2339 = vpop.f32.mrf.mxu0
    %2340 = vmatprep.mubr.f32.mxu0 0.0
    %2341 = vmatmul.mubr.f32.gmra.mxu0 %v2241
    %v2342 = vpop.f32.mrf.mxu0
    %v2343 = vadd.f32 %v2220, %v2342
    %v2344 = vpop.f32.mrf.mxu0
    %2345 = vmatprep.mubr.f32.mxu0 0.0
    %2346 = vmatmul.mubr.f32.gmra.mxu0 %v2244
    %v2347 = vpop.f32.mrf.mxu0
    %v2348 = vadd.f32 %v2220, %v2347
    %v2349 = vpop.f32.mrf.mxu0
    %2350 = vdwg.mxu0
    %v2351 = vsub.f32 0.0, %v2313
    %v2352 = vsub.f32 0.0, %v2318
    %v2353 = vsub.f32 0.0, %v2323
    %v2354 = vsub.f32 0.0, %v2328
    %v2355 = vsub.f32 0.0, %v2333
    %v2356 = vsub.f32 0.0, %v2338
    %v2357 = vsub.f32 0.0, %v2343
    %v2358 = vsub.f32 0.0, %v2348
    %v2359 = vmul.f32 %v2351, 1.442695
    %v2360 = vpow.pop %v2359
    %v2361 = vmul.f32 %v2352, 1.442695
    %v2362 = vpow.pop %v2361
    %v2363 = vmul.f32 %v2353, 1.442695
    %v2364 = vpow.pop %v2363
    %v2365 = vmul.f32 %v2354, 1.442695
    %v2366 = vpow.pop %v2365
    %v2367 = vmul.f32 %v2355, 1.442695
    %v2368 = vpow.pop %v2367
    %v2369 = vmul.f32 %v2356, 1.442695
    %v2370 = vpow.pop %v2369
    %v2371 = vmul.f32 %v2357, 1.442695
    %v2372 = vpow.pop %v2371
    %v2373 = vmul.f32 %v2358, 1.442695
    %v2374 = vpow.pop %v2373
    %v2375 = vadd.f32 %v2360, 1.0
    %v2376 = vadd.f32 %v2362, 1.0
    %v2377 = vadd.f32 %v2364, 1.0
    %v2378 = vadd.f32 %v2366, 1.0
    %v2379 = vadd.f32 %v2368, 1.0
    %v2380 = vadd.f32 %v2370, 1.0
    %v2381 = vadd.f32 %v2372, 1.0
    %v2382 = vadd.f32 %v2374, 1.0
    %v2383 = vrcp.pop %v2375
    %v2384 = vmul.f32 %v2313, %v2383
    %v2385 = vrcp.pop %v2376
    %v2386 = vmul.f32 %v2318, %v2385
    %v2387 = vrcp.pop %v2377
    %v2388 = vmul.f32 %v2323, %v2387
    %v2389 = vrcp.pop %v2378
    %v2390 = vmul.f32 %v2328, %v2389
    %v2391 = vrcp.pop %v2379
    %v2392 = vmul.f32 %v2333, %v2391
    %v2393 = vrcp.pop %v2380
    %v2394 = vmul.f32 %v2338, %v2393
    %v2395 = vrcp.pop %v2381
    %v2396 = vmul.f32 %v2343, %v2395
    %v2397 = vrcp.pop %v2382
    %v2398 = vmul.f32 %v2348, %v2397
    %v2399 = vmul.f32 %v2384, %v715
    %v2400 = vmul.f32 %v2386, %v720
    %v2401 = vmul.f32 %v2388, %v725
    %v2402 = vmul.f32 %v2390, %v730
    %v2403 = vmul.f32 %v2392, %v735
    %v2404 = vmul.f32 %v2394, %v740
    %v2405 = vmul.f32 %v2396, %v745
    %v2406 = vmul.f32 %v2398, %v750
    %v2408 = vlaneseq
    %v2409 = vshrl.u32 %v2408, 7
    %v2410 = vsub.s32 0, %v2409
    %v2411 = vrot.slane %v1897, %v2410
    %v2414 = vsel %vm848, %v2399, 0
    %v2417 = vsel %vm848, %v2400, 0
    %v2420 = vsel %vm848, %v2401, 0
    %v2423 = vsel %vm848, %v2402, 0
    %v2426 = vsel %vm848, %v2403, 0
    %v2429 = vsel %vm848, %v2404, 0
    %v2432 = vsel %vm848, %v2405, 0
    %v2435 = vsel %vm848, %v2406, 0
    %2437 = vmatprep.subr.mxu0 0.0
    %2438 = vmatpush1.msra.mxu0 0.0
    %2439 = vmatprep.subr.mxu0 0.0
    %2440 = vmatpush1.msra.mxu0 0.0
    %2441 = vmatprep.subr.mxu0 0.0
    %2442 = vmatpush1.msra.mxu0 0.0
    %2443 = vmatprep.subr.mxu0 0.0
    %2444 = vmatpush1.msra.mxu0 0.0
    %2445 = vmatprep.subr.mxu0 0.0
    %2446 = vmatpush1.msra.mxu0 0.0
    %2447 = vmatprep.subr.mxu0 0.0
    %2448 = vmatpush1.msra.mxu0 0.0
    %2449 = vmatprep.subr.mxu0 0.0
    %2450 = vmatpush1.msra.mxu0 0.0
    %2451 = vmatprep.subr.mxu0 0.0
    %2452 = vmatpush1.msra.mxu0 0.0
    %2453 = vmatprep.subr.mxu0 0.0
    %2454 = vmatpush1.msra.mxu0 %v1895
    %2455 = vmatprep.subr.mxu0 0.0
    %2456 = vmatpush1.msra.mxu0 %v1894
    %2457 = vmatprep.subr.mxu0 0.0
    %2458 = vmatpush1.msra.mxu0 %v1893
    %2459 = vmatprep.subr.mxu0 0.0
    %2460 = vmatpush1.msra.mxu0 %v1892
    %2461 = vmatprep.subr.mxu0 0.0
    %2462 = vmatpush1.msra.mxu0 %v1891
    %2463 = vmatprep.subr.mxu0 0.0
    %2464 = vmatpush1.msra.mxu0 %v1890
    %2465 = vmatprep.subr.mxu0 0.0
    %2466 = vmatpush1.msra.mxu0 %v1889
    %2467 = vmatprep.subr.mxu0 0.0
    %2468 = vmatpush1.msra.mxu0 %v1888
    %2469 = vmatprep.subr.mxu0 0.0
    %2470 = vmatpush2.msra.mxu0 0.0
    %2471 = vmatprep.subr.mxu0 0.0
    %2472 = vmatpush2.msra.mxu0 0.0
    %2473 = vmatprep.subr.mxu0 0.0
    %2474 = vmatpush2.msra.mxu0 0.0
    %2475 = vmatprep.subr.mxu0 0.0
    %2476 = vmatpush2.msra.mxu0 0.0
    %2477 = vmatprep.subr.mxu0 0.0
    %2478 = vmatpush2.msra.mxu0 0.0
    %2479 = vmatprep.subr.mxu0 0.0
    %2480 = vmatpush2.msra.mxu0 0.0
    %2481 = vmatprep.subr.mxu0 0.0
    %2482 = vmatpush2.msra.mxu0 0.0
    %2483 = vmatprep.subr.mxu0 0.0
    %2484 = vmatpush2.msra.mxu0 0.0
    %2485 = vmatprep.subr.mxu0 0.0
    %2486 = vmatpush2.msra.mxu0 0.0
    %2487 = vmatprep.subr.mxu0 0.0
    %2488 = vmatpush2.msra.mxu0 0.0
    %2489 = vmatprep.subr.mxu0 0.0
    %2490 = vmatpush2.msra.mxu0 0.0
    %2491 = vmatprep.subr.mxu0 0.0
    %2492 = vmatpush2.msra.mxu0 0.0
    %2493 = vmatprep.subr.mxu0 0.0
    %2494 = vmatpush2.msra.mxu0 0.0
    %2495 = vmatprep.subr.mxu0 0.0
    %2496 = vmatpush2.msra.mxu0 0.0
    %2497 = vmatprep.subr.mxu0 0.0
    %2498 = vmatpush2.msra.mxu0 0.0
    %2499 = vmatprep.subr.mxu0 0.0
    %2500 = vmatpush2.msra.mxu0 0.0
    %2501 = vmatprep.mubr.f32.mxu0 0.0
    %2502 = vmatmul.mubr.f32.gmra.mxu0 %v2414
    %v2503 = vpop.f32.mrf.mxu0
    %v2504 = vadd.f32 %v2411, %v2503
    %v2505 = vpop.f32.mrf.mxu0
    %2506 = vmatprep.mubr.f32.mxu0 0.0
    %2507 = vmatmul.mubr.f32.gmra.mxu0 %v2417
    %v2508 = vpop.f32.mrf.mxu0
    %v2509 = vadd.f32 %v2411, %v2508
    %v2510 = vpop.f32.mrf.mxu0
    %2511 = vmatprep.mubr.f32.mxu0 0.0
    %2512 = vmatmul.mubr.f32.gmra.mxu0 %v2420
    %v2513 = vpop.f32.mrf.mxu0
    %v2514 = vadd.f32 %v2411, %v2513
    %v2515 = vpop.f32.mrf.mxu0
    %2516 = vmatprep.mubr.f32.mxu0 0.0
    %2517 = vmatmul.mubr.f32.gmra.mxu0 %v2423
    %v2518 = vpop.f32.mrf.mxu0
    %v2519 = vadd.f32 %v2411, %v2518
    %v2520 = vpop.f32.mrf.mxu0
    %2521 = vmatprep.mubr.f32.mxu0 0.0
    %2522 = vmatmul.mubr.f32.gmra.mxu0 %v2426
    %v2523 = vpop.f32.mrf.mxu0
    %v2524 = vadd.f32 %v2411, %v2523
    %v2525 = vpop.f32.mrf.mxu0
    %2526 = vmatprep.mubr.f32.mxu0 0.0
    %2527 = vmatmul.mubr.f32.gmra.mxu0 %v2429
    %v2528 = vpop.f32.mrf.mxu0
    %v2529 = vadd.f32 %v2411, %v2528
    %v2530 = vpop.f32.mrf.mxu0
    %2531 = vmatprep.mubr.f32.mxu0 0.0
    %2532 = vmatmul.mubr.f32.gmra.mxu0 %v2432
    %v2533 = vpop.f32.mrf.mxu0
    %v2534 = vadd.f32 %v2411, %v2533
    %v2535 = vpop.f32.mrf.mxu0
    %2536 = vmatprep.mubr.f32.mxu0 0.0
    %2537 = vmatmul.mubr.f32.gmra.mxu0 %v2435
    %v2538 = vpop.f32.mrf.mxu0
    %v2539 = vadd.f32 %v2411, %v2538
    %v2540 = vpop.f32.mrf.mxu0
    %2541 = vdwg.mxu0
    %v2542 = vsub.f32 0.0, %v2504
    %v2543 = vsub.f32 0.0, %v2509
    %v2544 = vsub.f32 0.0, %v2514
    %v2545 = vsub.f32 0.0, %v2519
    %v2546 = vsub.f32 0.0, %v2524
    %v2547 = vsub.f32 0.0, %v2529
    %v2548 = vsub.f32 0.0, %v2534
    %v2549 = vsub.f32 0.0, %v2539
    %v2550 = vmul.f32 %v2542, 1.442695
    %v2551 = vpow.pop %v2550
    %v2552 = vmul.f32 %v2543, 1.442695
    %v2553 = vpow.pop %v2552
    %v2554 = vmul.f32 %v2544, 1.442695
    %v2555 = vpow.pop %v2554
    %v2556 = vmul.f32 %v2545, 1.442695
    %v2557 = vpow.pop %v2556
    %v2558 = vmul.f32 %v2546, 1.442695
    %v2559 = vpow.pop %v2558
    %v2560 = vmul.f32 %v2547, 1.442695
    %v2561 = vpow.pop %v2560
    %v2562 = vmul.f32 %v2548, 1.442695
    %v2563 = vpow.pop %v2562
    %v2564 = vmul.f32 %v2549, 1.442695
    %v2565 = vpow.pop %v2564
    %v2566 = vadd.f32 %v2551, 1.0
    %v2567 = vadd.f32 %v2553, 1.0
    %v2568 = vadd.f32 %v2555, 1.0
    %v2569 = vadd.f32 %v2557, 1.0
    %v2570 = vadd.f32 %v2559, 1.0
    %v2571 = vadd.f32 %v2561, 1.0
    %v2572 = vadd.f32 %v2563, 1.0
    %v2573 = vadd.f32 %v2565, 1.0
    %v2574 = vrcp.pop %v2566
    %v2575 = vmul.f32 %v2504, %v2574
    %v2576 = vrcp.pop %v2567
    %v2577 = vmul.f32 %v2509, %v2576
    %v2578 = vrcp.pop %v2568
    %v2579 = vmul.f32 %v2514, %v2578
    %v2580 = vrcp.pop %v2569
    %v2581 = vmul.f32 %v2519, %v2580
    %v2582 = vrcp.pop %v2570
    %v2583 = vmul.f32 %v2524, %v2582
    %v2584 = vrcp.pop %v2571
    %v2585 = vmul.f32 %v2529, %v2584
    %v2586 = vrcp.pop %v2572
    %v2587 = vmul.f32 %v2534, %v2586
    %v2588 = vrcp.pop %v2573
    %v2589 = vmul.f32 %v2539, %v2588
    %v2591 = vlaneseq
    %v2592 = vshrl.u32 %v2591, 7
    %v2593 = vsub.s32 0, %v2592
    %v2594 = vrot.slane %v1899, %v2593
    %v2596 = vmul.f32 %v2575, %v2594
    %v2597 = vmul.f32 %v2577, %v2594
    %v2598 = vmul.f32 %v2579, %v2594
    %v2599 = vmul.f32 %v2581, %v2594
    %v2600 = vmul.f32 %v2583, %v2594
    %v2601 = vmul.f32 %v2585, %v2594
    %v2602 = vmul.f32 %v2587, %v2594
    %v2603 = vmul.f32 %v2589, %v2594
    %v2604 = vsel %vm848, %v2596, 0.0
    %2605 = vadd.xlane.f32.xlu0 %v2604
    %v2606 = vpop.xlane.xlu0 %2605
    %v2607 = vsel %vm848, %v2597, 0.0
    %2608 = vadd.xlane.f32.xlu0 %v2607
    %v2609 = vpop.xlane.xlu0 %2608
    %v2610 = vsel %vm848, %v2598, 0.0
    %2611 = vadd.xlane.f32.xlu0 %v2610
    %v2612 = vpop.xlane.xlu0 %2611
    %v2613 = vsel %vm848, %v2599, 0.0
    %2614 = vadd.xlane.f32.xlu0 %v2613
    %v2615 = vpop.xlane.xlu0 %2614
    %v2616 = vsel %vm848, %v2600, 0.0
    %2617 = vadd.xlane.f32.xlu0 %v2616
    %v2618 = vpop.xlane.xlu0 %2617
    %v2619 = vsel %vm848, %v2601, 0.0
    %2620 = vadd.xlane.f32.xlu0 %v2619
    %v2621 = vpop.xlane.xlu0 %2620
    %v2622 = vsel %vm848, %v2602, 0.0
    %2623 = vadd.xlane.f32.xlu0 %v2622
    %v2624 = vpop.xlane.xlu0 %2623
    %v2625 = vsel %vm848, %v2603, 0.0
    %2626 = vadd.xlane.f32.xlu0 %v2625
    %v2627 = vpop.xlane.xlu0 %2626
    %v2629 = vlaneseq
    %v2630 = vshrl.u32 %v2629, 7
    %v2631 = vsub.s32 0, %v2630
    %v2632 = vrot.slane %v1901, %v2631
    %v2634 = vadd.f32 %v2606, %v2632
    %v2635 = vadd.f32 %v2609, %v2632
    %v2636 = vadd.f32 %v2612, %v2632
    %v2637 = vadd.f32 %v2615, %v2632
    %v2638 = vadd.f32 %v2618, %v2632
    %v2639 = vadd.f32 %v2621, %v2632
    %v2640 = vadd.f32 %v2624, %v2632
    %v2641 = vadd.f32 %v2627, %v2632
    %2643 = vset.pattern.permute.xlu0 0
    %2644 = vperm.xlu0 %2643, %v2634
    %v2645 = vpop.permute.xlu0 %2644
    %2648 = vset.pattern.permute.xlu0 0
    %2649 = vperm.xlu0 %2648, %v2635
    %v2650 = vpop.permute.xlu0 %2649
    %2653 = vset.pattern.permute.xlu0 0
    %2654 = vperm.xlu0 %2653, %v2636
    %v2655 = vpop.permute.xlu0 %2654
    %2658 = vset.pattern.permute.xlu0 0
    %2659 = vperm.xlu0 %2658, %v2637
    %v2660 = vpop.permute.xlu0 %2659
    %2663 = vset.pattern.permute.xlu0 0
    %2664 = vperm.xlu0 %2663, %v2638
    %v2665 = vpop.permute.xlu0 %2664
    %2668 = vset.pattern.permute.xlu0 0
    %2669 = vperm.xlu0 %2668, %v2639
    %v2670 = vpop.permute.xlu0 %2669
    %2673 = vset.pattern.permute.xlu0 0
    %2674 = vperm.xlu0 %2673, %v2640
    %v2675 = vpop.permute.xlu0 %2674
    %2678 = vset.pattern.permute.xlu0 0
    %2679 = vperm.xlu0 %2678, %v2641
    %v2680 = vpop.permute.xlu0 %2679
    %v2682 = vmul.f32 %v1955, %v2645
    %v2683 = vmul.f32 %v1956, %v2650
    %v2684 = vmul.f32 %v1957, %v2655
    %v2685 = vmul.f32 %v1958, %v2660
    %v2686 = vmul.f32 %v1959, %v2665
    %v2687 = vmul.f32 %v1960, %v2670
    %v2688 = vmul.f32 %v1961, %v2675
    %v2689 = vmul.f32 %v1962, %v2680
    %v2690 = vadd.f32 %v2682, %v2684
    %v2691 = vadd.f32 %v2683, %v2685
    %v2692 = vadd.f32 %v2399, %v2401
    %v2693 = vadd.f32 %v2400, %v2402
    %v2694 = vadd.f32 %v2690, %v2686
    %v2695 = vadd.f32 %v2691, %v2687
    %v2696 = vadd.f32 %v2692, %v2403
    %v2697 = vadd.f32 %v2693, %v2404
    %v2698 = vadd.f32 %v2694, %v2688
    %v2699 = vadd.f32 %v2695, %v2689
    %v2700 = vadd.f32 %v2696, %v2405
    %v2701 = vadd.f32 %v2697, %v2406
    %v2702 = vmul.f32 %v1503, %v2698
    %v2703 = vmul.f32 %v1508, %v2699
    %v2705 = vlaneseq
    %v2706 = vshrl.u32 %v2705, 7
    %v2707 = vsub.s32 0, %v2706
    %v2708 = vrot.slane %v1912, %v2707
    %2710 = vmatprep.subr.mxu0 0.0
    %2711 = vmatpush1.msra.mxu0 0.0
    %2712 = vmatprep.subr.mxu0 0.0
    %2713 = vmatpush1.msra.mxu0 0.0
    %2714 = vmatprep.subr.mxu0 0.0
    %2715 = vmatpush1.msra.mxu0 0.0
    %2716 = vmatprep.subr.mxu0 0.0
    %2717 = vmatpush1.msra.mxu0 0.0
    %2718 = vmatprep.subr.mxu0 0.0
    %2719 = vmatpush1.msra.mxu0 0.0
    %2720 = vmatprep.subr.mxu0 0.0
    %2721 = vmatpush1.msra.mxu0 0.0
    %2722 = vmatprep.subr.mxu0 0.0
    %2723 = vmatpush1.msra.mxu0 0.0
    %2724 = vmatprep.subr.mxu0 0.0
    %2725 = vmatpush1.msra.mxu0 0.0
    %2726 = vmatprep.subr.mxu0 0.0
    %2727 = vmatpush1.msra.mxu0 %v1910
    %2728 = vmatprep.subr.mxu0 0.0
    %2729 = vmatpush1.msra.mxu0 %v1909
    %2730 = vmatprep.subr.mxu0 0.0
    %2731 = vmatpush1.msra.mxu0 %v1908
    %2732 = vmatprep.subr.mxu0 0.0
    %2733 = vmatpush1.msra.mxu0 %v1907
    %2734 = vmatprep.subr.mxu0 0.0
    %2735 = vmatpush1.msra.mxu0 %v1906
    %2736 = vmatprep.subr.mxu0 0.0
    %2737 = vmatpush1.msra.mxu0 %v1905
    %2738 = vmatprep.subr.mxu0 0.0
    %2739 = vmatpush1.msra.mxu0 %v1904
    %2740 = vmatprep.subr.mxu0 0.0
    %2741 = vmatpush1.msra.mxu0 %v1903
    %2742 = vmatprep.subr.mxu0 0.0
    %2743 = vmatpush2.msra.mxu0 0.0
    %2744 = vmatprep.subr.mxu0 0.0
    %2745 = vmatpush2.msra.mxu0 0.0
    %2746 = vmatprep.subr.mxu0 0.0
    %2747 = vmatpush2.msra.mxu0 0.0
    %2748 = vmatprep.subr.mxu0 0.0
    %2749 = vmatpush2.msra.mxu0 0.0
    %2750 = vmatprep.subr.mxu0 0.0
    %2751 = vmatpush2.msra.mxu0 0.0
    %2752 = vmatprep.subr.mxu0 0.0
    %2753 = vmatpush2.msra.mxu0 0.0
    %2754 = vmatprep.subr.mxu0 0.0
    %2755 = vmatpush2.msra.mxu0 0.0
    %2756 = vmatprep.subr.mxu0 0.0
    %2757 = vmatpush2.msra.mxu0 0.0
    %2758 = vmatprep.subr.mxu0 0.0
    %2759 = vmatpush2.msra.mxu0 0.0
    %2760 = vmatprep.subr.mxu0 0.0
    %2761 = vmatpush2.msra.mxu0 0.0
    %2762 = vmatprep.subr.mxu0 0.0
    %2763 = vmatpush2.msra.mxu0 0.0
    %2764 = vmatprep.subr.mxu0 0.0
    %2765 = vmatpush2.msra.mxu0 0.0
    %2766 = vmatprep.subr.mxu0 0.0
    %2767 = vmatpush2.msra.mxu0 0.0
    %2768 = vmatprep.subr.mxu0 0.0
    %2769 = vmatpush2.msra.mxu0 0.0
    %2770 = vmatprep.subr.mxu0 0.0
    %2771 = vmatpush2.msra.mxu0 0.0
    %2772 = vmatprep.subr.mxu0 0.0
    %2773 = vmatpush2.msra.mxu0 0.0
    %2774 = vmatprep.mubr.f32.mxu0 0.0
    %2775 = vmatmul.mubr.f32.gmra.mxu0 %v2052
    %v2776 = vpop.f32.mrf.mxu0
    %v2777 = vadd.f32 %v2708, %v2776
    %v2778 = vpop.f32.mrf.mxu0
    %2779 = vmatprep.mubr.f32.mxu0 0.0
    %2780 = vmatmul.mubr.f32.gmra.mxu0 %v2055
    %v2781 = vpop.f32.mrf.mxu0
    %v2782 = vadd.f32 %v2708, %v2781
    %v2783 = vpop.f32.mrf.mxu0
    %2784 = vdwg.mxu0
    %v2785 = vsub.f32 0.0, %v2777
    %v2786 = vsub.f32 0.0, %v2782
    %v2787 = vmul.f32 %v2785, 1.442695
    %v2788 = vpow.pop %v2787
    %v2789 = vmul.f32 %v2786, 1.442695
    %v2790 = vpow.pop %v2789
    %v2791 = vadd.f32 %v2788, 1.0
    %v2792 = vadd.f32 %v2790, 1.0
    %v2793 = vrcp.pop %v2791
    %v2794 = vmul.f32 %v2777, %v2793
    %v2795 = vrcp.pop %v2792
    %v2796 = vmul.f32 %v2782, %v2795
    %v2798 = vlaneseq
    %v2799 = vshrl.u32 %v2798, 7
    %v2800 = vsub.s32 0, %v2799
    %v2801 = vrot.slane %v1914, %v2800
    %v2803 = vmul.f32 %v2794, %v2801
    %v2804 = vmul.f32 %v2796, %v2801
    %v2805 = vsel %vm848, %v2803, 0.0
    %2806 = vadd.xlane.f32.xlu0 %v2805
    %v2807 = vpop.xlane.xlu0 %2806
    %v2808 = vsel %vm848, %v2804, 0.0
    %2809 = vadd.xlane.f32.xlu0 %v2808
    %v2810 = vpop.xlane.xlu0 %2809
    %v2812 = vlaneseq
    %v2813 = vshrl.u32 %v2812, 7
    %v2814 = vsub.s32 0, %v2813
    %v2815 = vrot.slane %v1916, %v2814
    %v2817 = vadd.f32 %v2807, %v2815
    %v2818 = vadd.f32 %v2810, %v2815
    %2820 = vset.pattern.permute.xlu0 0
    %2821 = vperm.xlu0 %2820, %v2817
    %v2822 = vpop.permute.xlu0 %2821
    %2825 = vset.pattern.permute.xlu0 0
    %2826 = vperm.xlu0 %2825, %v2818
    %v2827 = vpop.permute.xlu0 %2826
    %v2829 = vmul.f32 %v2822, %v249
    %v2830 = vmul.f32 %v2827, %v250
    %2833 = vrot.lane.b32.xlu0 %v2702, 4
    %v2834 = vpop.permute.xlu0 %2833
    %2835 = vrot.lane.b32.xlu0 %v2703, 4
    %v2836 = vpop.permute.xlu0 %2835
    %v2839 = vadd.f32 %v2829, %v2834
    %v2840 = vadd.f32 %v2830, %v2836
    %2843 = vrot.lane.b32.xlu0 %v2839, 126
    %v2844 = vpop.permute.xlu0 %2843
    %2845 = vrot.lane.b32.xlu0 %v2840, 126
    %v2846 = vpop.permute.xlu0 %2845
    %v2849 = vadd.f32 %v1657, %v2844
    %v2850 = vadd.f32 %v1658, %v2846
    %2853 = vrot.lane.b32.xlu0 %v2849, 126
    %v2854 = vpop.permute.xlu0 %2853
    %2855 = vrot.lane.b32.xlu0 %v2850, 126
    %v2856 = vpop.permute.xlu0 %2855
    %v2859 = vadd.f32 %v1667, %v2854
    %v2860 = vadd.f32 %v1668, %v2856
    %2863 = vrot.lane.b32.xlu0 %v2700, 64
    %v2864 = vpop.permute.xlu0 %2863
    %2865 = vrot.lane.b32.xlu0 %v2701, 64
    %v2866 = vpop.permute.xlu0 %2865
    %v2869 = vsel %vm848, %v1861, %v2864
    %v2870 = vsel %vm848, %v1862, %v2866
    %v2872 = vlaneseq
    %v2873 = vshrl.u32 %v2872, 7
    %v2874 = vsub.s32 0, %v2873
    %v2875 = vrot.slane %v1935, %v2874
    %2877 = vmatprep.subr.mxu0 0.0
    %2878 = vmatpush1.msra.mxu0 %v1933
    %2879 = vmatprep.subr.mxu0 0.0
    %2880 = vmatpush1.msra.mxu0 %v1932
    %2881 = vmatprep.subr.mxu0 0.0
    %2882 = vmatpush1.msra.mxu0 %v1931
    %2883 = vmatprep.subr.mxu0 0.0
    %2884 = vmatpush1.msra.mxu0 %v1930
    %2885 = vmatprep.subr.mxu0 0.0
    %2886 = vmatpush1.msra.mxu0 %v1929
    %2887 = vmatprep.subr.mxu0 0.0
    %2888 = vmatpush1.msra.mxu0 %v1928
    %2889 = vmatprep.subr.mxu0 0.0
    %2890 = vmatpush1.msra.mxu0 %v1927
    %2891 = vmatprep.subr.mxu0 0.0
    %2892 = vmatpush1.msra.mxu0 %v1926
    %2893 = vmatprep.subr.mxu0 0.0
    %2894 = vmatpush1.msra.mxu0 %v1925
    %2895 = vmatprep.subr.mxu0 0.0
    %2896 = vmatpush1.msra.mxu0 %v1924
    %2897 = vmatprep.subr.mxu0 0.0
    %2898 = vmatpush1.msra.mxu0 %v1923
    %2899 = vmatprep.subr.mxu0 0.0
    %2900 = vmatpush1.msra.mxu0 %v1922
    %2901 = vmatprep.subr.mxu0 0.0
    %2902 = vmatpush1.msra.mxu0 %v1921
    %2903 = vmatprep.subr.mxu0 0.0
    %2904 = vmatpush1.msra.mxu0 %v1920
    %2905 = vmatprep.subr.mxu0 0.0
    %2906 = vmatpush1.msra.mxu0 %v1919
    %2907 = vmatprep.subr.mxu0 0.0
    %2908 = vmatpush1.msra.mxu0 %v1918
    %2909 = vmatprep.subr.mxu0 0.0
    %2910 = vmatpush2.msra.mxu0 0.0
    %2911 = vmatprep.subr.mxu0 0.0
    %2912 = vmatpush2.msra.mxu0 0.0
    %2913 = vmatprep.subr.mxu0 0.0
    %2914 = vmatpush2.msra.mxu0 0.0
    %2915 = vmatprep.subr.mxu0 0.0
    %2916 = vmatpush2.msra.mxu0 0.0
    %2917 = vmatprep.subr.mxu0 0.0
    %2918 = vmatpush2.msra.mxu0 0.0
    %2919 = vmatprep.subr.mxu0 0.0
    %2920 = vmatpush2.msra.mxu0 0.0
    %2921 = vmatprep.subr.mxu0 0.0
    %2922 = vmatpush2.msra.mxu0 0.0
    %2923 = vmatprep.subr.mxu0 0.0
    %2924 = vmatpush2.msra.mxu0 0.0
    %2925 = vmatprep.subr.mxu0 0.0
    %2926 = vmatpush2.msra.mxu0 0.0
    %2927 = vmatprep.subr.mxu0 0.0
    %2928 = vmatpush2.msra.mxu0 0.0
    %2929 = vmatprep.subr.mxu0 0.0
    %2930 = vmatpush2.msra.mxu0 0.0
    %2931 = vmatprep.subr.mxu0 0.0
    %2932 = vmatpush2.msra.mxu0 0.0
    %2933 = vmatprep.subr.mxu0 0.0
    %2934 = vmatpush2.msra.mxu0 0.0
    %2935 = vmatprep.subr.mxu0 0.0
    %2936 = vmatpush2.msra.mxu0 0.0
    %2937 = vmatprep.subr.mxu0 0.0
    %2938 = vmatpush2.msra.mxu0 0.0
    %2939 = vmatprep.subr.mxu0 0.0
    %2940 = vmatpush2.msra.mxu0 0.0
    %2941 = vmatprep.mubr.f32.mxu0 0.0
    %2942 = vmatmul.mubr.f32.gmra.mxu0 %v2869
    %v2943 = vpop.f32.mrf.mxu0
    %v2944 = vadd.f32 %v2875, %v2943
    %v2945 = vpop.f32.mrf.mxu0
    %2946 = vmatprep.mubr.f32.mxu0 0.0
    %2947 = vmatmul.mubr.f32.gmra.mxu0 %v2870
    %v2948 = vpop.f32.mrf.mxu0
    %v2949 = vadd.f32 %v2875, %v2948
    %v2950 = vpop.f32.mrf.mxu0
    %2951 = vdwg.mxu0
    %v2952 = vsub.f32 0.0, %v2944
    %v2953 = vsub.f32 0.0, %v2949
    %v2954 = vmul.f32 %v2952, 1.442695
    %v2955 = vpow.pop %v2954
    %v2956 = vmul.f32 %v2953, 1.442695
    %v2957 = vpow.pop %v2956
    %v2958 = vadd.f32 %v2955, 1.0
    %v2959 = vadd.f32 %v2957, 1.0
    %v2960 = vrcp.pop %v2958
    %v2961 = vmul.f32 %v2944, %v2960
    %v2962 = vrcp.pop %v2959
    %v2963 = vmul.f32 %v2949, %v2962
    %v2965 = vsel %vm848, %v2961, 0
    %v2968 = vsel %vm848, %v2963, 0
    %2970 = vmatprep.subr.mxu0 0.0
    %2971 = vmatpush1.msra.mxu0 0.0
    %2972 = vmatprep.subr.mxu0 0.0
    %2973 = vmatpush1.msra.mxu0 0.0
    %2974 = vmatprep.subr.mxu0 0.0
    %2975 = vmatpush1.msra.mxu0 0.0
    %2976 = vmatprep.subr.mxu0 0.0
    %2977 = vmatpush1.msra.mxu0 0.0
    %2978 = vmatprep.subr.mxu0 0.0
    %2979 = vmatpush1.msra.mxu0 0.0
    %2980 = vmatprep.subr.mxu0 0.0
    %2981 = vmatpush1.msra.mxu0 0.0
    %2982 = vmatprep.subr.mxu0 0.0
    %2983 = vmatpush1.msra.mxu0 0.0
    %2984 = vmatprep.subr.mxu0 0.0
    %2985 = vmatpush1.msra.mxu0 0.0
    %2986 = vmatprep.subr.mxu0 0.0
    %2987 = vmatpush1.msra.mxu0 %v1944
    %2988 = vmatprep.subr.mxu0 0.0
    %2989 = vmatpush1.msra.mxu0 %v1943
    %2990 = vmatprep.subr.mxu0 0.0
    %2991 = vmatpush1.msra.mxu0 %v1942
    %2992 = vmatprep.subr.mxu0 0.0
    %2993 = vmatpush1.msra.mxu0 %v1941
    %2994 = vmatprep.subr.mxu0 0.0
    %2995 = vmatpush1.msra.mxu0 %v1940
    %2996 = vmatprep.subr.mxu0 0.0
    %2997 = vmatpush1.msra.mxu0 %v1939
    %2998 = vmatprep.subr.mxu0 0.0
    %2999 = vmatpush1.msra.mxu0 %v1938
    %3000 = vmatprep.subr.mxu0 0.0
    %3001 = vmatpush1.msra.mxu0 %v1937
    %3002 = vmatprep.subr.mxu0 0.0
    %3003 = vmatpush2.msra.mxu0 0.0
    %3004 = vmatprep.subr.mxu0 0.0
    %3005 = vmatpush2.msra.mxu0 0.0
    %3006 = vmatprep.subr.mxu0 0.0
    %3007 = vmatpush2.msra.mxu0 0.0
    %3008 = vmatprep.subr.mxu0 0.0
    %3009 = vmatpush2.msra.mxu0 0.0
    %3010 = vmatprep.subr.mxu0 0.0
    %3011 = vmatpush2.msra.mxu0 0.0
    %3012 = vmatprep.subr.mxu0 0.0
    %3013 = vmatpush2.msra.mxu0 0.0
    %3014 = vmatprep.subr.mxu0 0.0
    %3015 = vmatpush2.msra.mxu0 0.0
    %3016 = vmatprep.subr.mxu0 0.0
    %3017 = vmatpush2.msra.mxu0 0.0
    %3018 = vmatprep.subr.mxu0 0.0
    %3019 = vmatpush2.msra.mxu0 0.0
    %3020 = vmatprep.subr.mxu0 0.0
    %3021 = vmatpush2.msra.mxu0 0.0
    %3022 = vmatprep.subr.mxu0 0.0
    %3023 = vmatpush2.msra.mxu0 0.0
    %3024 = vmatprep.subr.mxu0 0.0
    %3025 = vmatpush2.msra.mxu0 0.0
    %3026 = vmatprep.subr.mxu0 0.0
    %3027 = vmatpush2.msra.mxu0 0.0
    %3028 = vmatprep.subr.mxu0 0.0
    %3029 = vmatpush2.msra.mxu0 0.0
    %3030 = vmatprep.subr.mxu0 0.0
    %3031 = vmatpush2.msra.mxu0 0.0
    %3032 = vmatprep.subr.mxu0 0.0
    %3033 = vmatpush2.msra.mxu0 0.0
    %3034 = vmatprep.mubr.f32.mxu0 0.0
    %3035 = vmatmul.mubr.f32.gmra.mxu0 %v2965
    %v3036 = vpop.f32.mrf.mxu0
    %v3037 = vadd.f32 0.0, %v3036
    %v3038 = vpop.f32.mrf.mxu0
    %3039 = vmatprep.mubr.f32.mxu0 0.0
    %3040 = vmatmul.mubr.f32.gmra.mxu0 %v2968
    %v3041 = vpop.f32.mrf.mxu0
    %v3042 = vadd.f32 0.0, %v3041
    %v3043 = vpop.f32.mrf.mxu0
    %3044 = vdwg.mxu0
    %v3045 = vadd.f32 %v1861, %v3037
    %v3046 = vadd.f32 %v1862, %v3042
    %v3048 = vlaneseq
    %v3049 = vshrl.u32 %v3048, 7
    %v3050 = vsub.s32 0, %v3049
    %v3051 = vrot.slane %v1946, %v3050
    %v3053 = vadd.f32 %v3045, %v3051
    %v3054 = vadd.f32 %v3046, %v3051
    %s3055 = scalar_lea.vmem %s25, 128
    %v3056 = vld [vmem:[%s3055] sm:$0xff]
    %v3057 = vld [vmem:[%s3055 + $0x8] sm:$0xff]
    %v3058 = vld [vmem:[%s3055 + $0x10] sm:$0xff]
    %v3059 = vld [vmem:[%s3055 + $0x18] sm:$0xff]
    %v3060 = vld [vmem:[%s3055 + $0x20] sm:$0xff]
    %v3061 = vld [vmem:[%s3055 + $0x28] sm:$0xff]
    %v3062 = vld [vmem:[%s3055 + $0x30] sm:$0xff]
    %v3063 = vld [vmem:[%s3055 + $0x38] sm:$0xff]
    %s3064 = scalar_lea.vmem %s27, 2
    %v3065 = vld [vmem:[%s3064] sm:$0x1]
    %s3066 = scalar_lea.vmem %s29, 2
    %v3067 = vld [vmem:[%s3066] sm:$0x1]
    %s3068 = scalar_lea.vmem %s31, 128
    %v3069 = vld [vmem:[%s3068] sm:$0xff]
    %v3070 = vld [vmem:[%s3068 + $0x8] sm:$0xff]
    %v3071 = vld [vmem:[%s3068 + $0x10] sm:$0xff]
    %v3072 = vld [vmem:[%s3068 + $0x18] sm:$0xff]
    %v3073 = vld [vmem:[%s3068 + $0x20] sm:$0xff]
    %v3074 = vld [vmem:[%s3068 + $0x28] sm:$0xff]
    %v3075 = vld [vmem:[%s3068 + $0x30] sm:$0xff]
    %v3076 = vld [vmem:[%s3068 + $0x38] sm:$0xff]
    %s3077 = scalar_lea.vmem %s33, 2
    %v3078 = vld [vmem:[%s3077] sm:$0x1]
    %s3079 = scalar_lea.vmem %s51, 256
    %v3080 = vld [vmem:[%s3079] sm:$0xff]
    %v3081 = vld [vmem:[%s3079 + $0x8] sm:$0xff]
    %v3082 = vld [vmem:[%s3079 + $0x10] sm:$0xff]
    %v3083 = vld [vmem:[%s3079 + $0x18] sm:$0xff]
    %v3084 = vld [vmem:[%s3079 + $0x20] sm:$0xff]
    %v3085 = vld [vmem:[%s3079 + $0x28] sm:$0xff]
    %v3086 = vld [vmem:[%s3079 + $0x30] sm:$0xff]
    %v3087 = vld [vmem:[%s3079 + $0x38] sm:$0xff]
    %v3088 = vld [vmem:[%s3079 + $0x40] sm:$0xff]
    %v3089 = vld [vmem:[%s3079 + $0x48] sm:$0xff]
    %v3090 = vld [vmem:[%s3079 + $0x50] sm:$0xff]
    %v3091 = vld [vmem:[%s3079 + $0x58] sm:$0xff]
    %v3092 = vld [vmem:[%s3079 + $0x60] sm:$0xff]
    %v3093 = vld [vmem:[%s3079 + $0x68] sm:$0xff]
    %v3094 = vld [vmem:[%s3079 + $0x70] sm:$0xff]
    %v3095 = vld [vmem:[%s3079 + $0x78] sm:$0xff]
    %s3096 = scalar_lea.vmem %s53, 2
    %v3097 = vld [vmem:[%s3096] sm:$0x1]
    %s3098 = scalar_lea.vmem [#allocation16], 128
    %v3099 = vld [vmem:[%s3098] sm:$0xff]
    %v3100 = vld [vmem:[%s3098 + $0x8] sm:$0xff]
    %v3101 = vld [vmem:[%s3098 + $0x10] sm:$0xff]
    %v3102 = vld [vmem:[%s3098 + $0x18] sm:$0xff]
    %v3103 = vld [vmem:[%s3098 + $0x20] sm:$0xff]
    %v3104 = vld [vmem:[%s3098 + $0x28] sm:$0xff]
    %v3105 = vld [vmem:[%s3098 + $0x30] sm:$0xff]
    %v3106 = vld [vmem:[%s3098 + $0x38] sm:$0xff]
    %s3107 = scalar_lea.vmem [#allocation17], 2
    %v3108 = vld [vmem:[%s3107] sm:$0x1]
    %v3109 = vsub.f32 %v251, %v2859
    %v3110 = vsub.f32 %v252, %v2860
    %v3111 = vsub.f32 %v253, %v2859
    %v3112 = vsub.f32 %v254, %v2860
    %v3113 = vsub.f32 %v255, %v2859
    %v3114 = vsub.f32 %v256, %v2860
    %v3115 = vsub.f32 %v257, %v2859
    %v3116 = vsub.f32 %v258, %v2860
    %v3117 = vmul.f32 %v3109, %v715
    %v3118 = vmul.f32 %v3110, %v720
    %v3119 = vmul.f32 %v3111, %v725
    %v3120 = vmul.f32 %v3112, %v730
    %v3121 = vmul.f32 %v3113, %v735
    %v3122 = vmul.f32 %v3114, %v740
    %v3123 = vmul.f32 %v3115, %v745
    %v3124 = vmul.f32 %v3116, %v750
    %v3125 = vmul.f32 %v3117, %v3117
    %v3126 = vmul.f32 %v3118, %v3118
    %v3127 = vmul.f32 %v3119, %v3119
    %v3128 = vmul.f32 %v3120, %v3120
    %v3129 = vmul.f32 %v3121, %v3121
    %v3130 = vmul.f32 %v3122, %v3122
    %v3131 = vmul.f32 %v3123, %v3123
    %v3132 = vmul.f32 %v3124, %v3124
    %v3133 = vsel %vm277, %v3125, 0.0
    %3134 = vadd.xlane.f32.xlu0 %v3133
    %v3135 = vpop.xlane.xlu0 %3134
    %v3136 = vsel %vm277, %v3126, 0.0
    %3137 = vadd.xlane.f32.xlu0 %v3136
    %v3138 = vpop.xlane.xlu0 %3137
    %v3139 = vsel %vm277, %v3127, 0.0
    %3140 = vadd.xlane.f32.xlu0 %v3139
    %v3141 = vpop.xlane.xlu0 %3140
    %v3142 = vsel %vm277, %v3128, 0.0
    %3143 = vadd.xlane.f32.xlu0 %v3142
    %v3144 = vpop.xlane.xlu0 %3143
    %v3145 = vsel %vm277, %v3129, 0.0
    %3146 = vadd.xlane.f32.xlu0 %v3145
    %v3147 = vpop.xlane.xlu0 %3146
    %v3148 = vsel %vm277, %v3130, 0.0
    %3149 = vadd.xlane.f32.xlu0 %v3148
    %v3150 = vpop.xlane.xlu0 %3149
    %v3151 = vsel %vm277, %v3131, 0.0
    %3152 = vadd.xlane.f32.xlu0 %v3151
    %v3153 = vpop.xlane.xlu0 %3152
    %v3154 = vsel %vm277, %v3132, 0.0
    %3155 = vadd.xlane.f32.xlu0 %v3154
    %v3156 = vpop.xlane.xlu0 %3155
    %v3157 = vrsqrt.pop %v3135
    %v3158 = vmul.f32 %v3135, %v3157
    %vm3159 = vcmp.eq.f32.partialorder %v3135, inf
    %v3160 = vsel %vm3159, %v3135, %v3158
    %vm3161 = vcmp.eq.f32.partialorder %v3135, 0.0
    %v3162 = vand.u32 %v3135, 2147483648
    %v3163 = vsel %vm3161, %v3162, %v3160
    %v3164 = vrsqrt.pop %v3138
    %v3165 = vmul.f32 %v3138, %v3164
    %vm3166 = vcmp.eq.f32.partialorder %v3138, inf
    %v3167 = vsel %vm3166, %v3138, %v3165
    %vm3168 = vcmp.eq.f32.partialorder %v3138, 0.0
    %v3169 = vand.u32 %v3138, 2147483648
    %v3170 = vsel %vm3168, %v3169, %v3167
    %v3171 = vrsqrt.pop %v3141
    %v3172 = vmul.f32 %v3141, %v3171
    %vm3173 = vcmp.eq.f32.partialorder %v3141, inf
    %v3174 = vsel %vm3173, %v3141, %v3172
    %vm3175 = vcmp.eq.f32.partialorder %v3141, 0.0
    %v3176 = vand.u32 %v3141, 2147483648
    %v3177 = vsel %vm3175, %v3176, %v3174
    %v3178 = vrsqrt.pop %v3144
    %v3179 = vmul.f32 %v3144, %v3178
    %vm3180 = vcmp.eq.f32.partialorder %v3144, inf
    %v3181 = vsel %vm3180, %v3144, %v3179
    %vm3182 = vcmp.eq.f32.partialorder %v3144, 0.0
    %v3183 = vand.u32 %v3144, 2147483648
    %v3184 = vsel %vm3182, %v3183, %v3181
    %v3185 = vrsqrt.pop %v3147
    %v3186 = vmul.f32 %v3147, %v3185
    %vm3187 = vcmp.eq.f32.partialorder %v3147, inf
    %v3188 = vsel %vm3187, %v3147, %v3186
    %vm3189 = vcmp.eq.f32.partialorder %v3147, 0.0
    %v3190 = vand.u32 %v3147, 2147483648
    %v3191 = vsel %vm3189, %v3190, %v3188
    %v3192 = vrsqrt.pop %v3150
    %v3193 = vmul.f32 %v3150, %v3192
    %vm3194 = vcmp.eq.f32.partialorder %v3150, inf
    %v3195 = vsel %vm3194, %v3150, %v3193
    %vm3196 = vcmp.eq.f32.partialorder %v3150, 0.0
    %v3197 = vand.u32 %v3150, 2147483648
    %v3198 = vsel %vm3196, %v3197, %v3195
    %v3199 = vrsqrt.pop %v3153
    %v3200 = vmul.f32 %v3153, %v3199
    %vm3201 = vcmp.eq.f32.partialorder %v3153, inf
    %v3202 = vsel %vm3201, %v3153, %v3200
    %vm3203 = vcmp.eq.f32.partialorder %v3153, 0.0
    %v3204 = vand.u32 %v3153, 2147483648
    %v3205 = vsel %vm3203, %v3204, %v3202
    %v3206 = vrsqrt.pop %v3156
    %v3207 = vmul.f32 %v3156, %v3206
    %vm3208 = vcmp.eq.f32.partialorder %v3156, inf
    %v3209 = vsel %vm3208, %v3156, %v3207
    %vm3210 = vcmp.eq.f32.partialorder %v3156, 0.0
    %v3211 = vand.u32 %v3156, 2147483648
    %v3212 = vsel %vm3210, %v3211, %v3209
    %v3214 = vsel %vm848, %v3053, 0
    %v3217 = vsel %vm848, %v3054, 0
    %3219 = vmatprep.subr.mxu0 0.0
    %3220 = vmatpush1.msra.mxu0 0.0
    %3221 = vmatprep.subr.mxu0 0.0
    %3222 = vmatpush1.msra.mxu0 0.0
    %3223 = vmatprep.subr.mxu0 0.0
    %3224 = vmatpush1.msra.mxu0 0.0
    %3225 = vmatprep.subr.mxu0 0.0
    %3226 = vmatpush1.msra.mxu0 0.0
    %3227 = vmatprep.subr.mxu0 0.0
    %3228 = vmatpush1.msra.mxu0 0.0
    %3229 = vmatprep.subr.mxu0 0.0
    %3230 = vmatpush1.msra.mxu0 0.0
    %3231 = vmatprep.subr.mxu0 0.0
    %3232 = vmatpush1.msra.mxu0 0.0
    %3233 = vmatprep.subr.mxu0 0.0
    %3234 = vmatpush1.msra.mxu0 0.0
    %3235 = vmatprep.subr.mxu0 0.0
    %3236 = vmatpush1.msra.mxu0 %v3063
    %3237 = vmatprep.subr.mxu0 0.0
    %3238 = vmatpush1.msra.mxu0 %v3062
    %3239 = vmatprep.subr.mxu0 0.0
    %3240 = vmatpush1.msra.mxu0 %v3061
    %3241 = vmatprep.subr.mxu0 0.0
    %3242 = vmatpush1.msra.mxu0 %v3060
    %3243 = vmatprep.subr.mxu0 0.0
    %3244 = vmatpush1.msra.mxu0 %v3059
    %3245 = vmatprep.subr.mxu0 0.0
    %3246 = vmatpush1.msra.mxu0 %v3058
    %3247 = vmatprep.subr.mxu0 0.0
    %3248 = vmatpush1.msra.mxu0 %v3057
    %3249 = vmatprep.subr.mxu0 0.0
    %3250 = vmatpush1.msra.mxu0 %v3056
    %3251 = vmatprep.subr.mxu0 0.0
    %3252 = vmatpush2.msra.mxu0 0.0
    %3253 = vmatprep.subr.mxu0 0.0
    %3254 = vmatpush2.msra.mxu0 0.0
    %3255 = vmatprep.subr.mxu0 0.0
    %3256 = vmatpush2.msra.mxu0 0.0
    %3257 = vmatprep.subr.mxu0 0.0
    %3258 = vmatpush2.msra.mxu0 0.0
    %3259 = vmatprep.subr.mxu0 0.0
    %3260 = vmatpush2.msra.mxu0 0.0
    %3261 = vmatprep.subr.mxu0 0.0
    %3262 = vmatpush2.msra.mxu0 0.0
    %3263 = vmatprep.subr.mxu0 0.0
    %3264 = vmatpush2.msra.mxu0 0.0
    %3265 = vmatprep.subr.mxu0 0.0
    %3266 = vmatpush2.msra.mxu0 0.0
    %3267 = vmatprep.subr.mxu0 0.0
    %3268 = vmatpush2.msra.mxu0 0.0
    %3269 = vmatprep.subr.mxu0 0.0
    %3270 = vmatpush2.msra.mxu0 0.0
    %3271 = vmatprep.subr.mxu0 0.0
    %3272 = vmatpush2.msra.mxu0 0.0
    %3273 = vmatprep.subr.mxu0 0.0
    %3274 = vmatpush2.msra.mxu0 0.0
    %3275 = vmatprep.subr.mxu0 0.0
    %3276 = vmatpush2.msra.mxu0 0.0
    %3277 = vmatprep.subr.mxu0 0.0
    %3278 = vmatpush2.msra.mxu0 0.0
    %3279 = vmatprep.subr.mxu0 0.0
    %3280 = vmatpush2.msra.mxu0 0.0
    %3281 = vmatprep.subr.mxu0 0.0
    %3282 = vmatpush2.msra.mxu0 0.0
    %3283 = vmatprep.mubr.f32.mxu0 0.0
    %3284 = vmatmul.mubr.f32.gmra.mxu0 %v3214
    %v3285 = vpop.f32.mrf.mxu0
    %v3286 = vadd.f32 0.0, %v3285
    %v3287 = vpop.f32.mrf.mxu0
    %3288 = vmatprep.mubr.f32.mxu0 0.0
    %3289 = vmatmul.mubr.f32.gmra.mxu0 %v3217
    %v3290 = vpop.f32.mrf.mxu0
    %v3291 = vadd.f32 0.0, %v3290
    %v3292 = vpop.f32.mrf.mxu0
    %3293 = vdwg.mxu0
    %v3295 = vlaneseq
    %v3296 = vshrl.u32 %v3295, 7
    %v3297 = vsub.s32 0, %v3296
    %v3298 = vrot.slane %v3065, %v3297
    %v3300 = vmul.f32 %v3163, %v3298
    %v3301 = vmul.f32 %v3170, %v3298
    %v3302 = vmul.f32 %v3177, %v3298
    %v3303 = vmul.f32 %v3184, %v3298
    %v3304 = vmul.f32 %v3191, %v3298
    %v3305 = vmul.f32 %v3198, %v3298
    %v3306 = vmul.f32 %v3205, %v3298
    %v3307 = vmul.f32 %v3212, %v3298
    %v3308 = vadd.f32 %v3286, %v3300
    %v3309 = vadd.f32 %v3291, %v3301
    %v3310 = vadd.f32 %v3286, %v3302
    %v3311 = vadd.f32 %v3291, %v3303
    %v3312 = vadd.f32 %v3286, %v3304
    %v3313 = vadd.f32 %v3291, %v3305
    %v3314 = vadd.f32 %v3286, %v3306
    %v3315 = vadd.f32 %v3291, %v3307
    %v3317 = vlaneseq
    %v3318 = vshrl.u32 %v3317, 7
    %v3319 = vsub.s32 0, %v3318
    %v3320 = vrot.slane %v3067, %v3319
    %v3322 = vadd.f32 %v3308, %v3320
    %v3323 = vadd.f32 %v3309, %v3320
    %v3324 = vadd.f32 %v3310, %v3320
    %v3325 = vadd.f32 %v3311, %v3320
    %v3326 = vadd.f32 %v3312, %v3320
    %v3327 = vadd.f32 %v3313, %v3320
    %v3328 = vadd.f32 %v3314, %v3320
    %v3329 = vadd.f32 %v3315, %v3320
    %v3330 = vsub.f32 0.0, %v3322
    %v3331 = vsub.f32 0.0, %v3323
    %v3332 = vsub.f32 0.0, %v3324
    %v3333 = vsub.f32 0.0, %v3325
    %v3334 = vsub.f32 0.0, %v3326
    %v3335 = vsub.f32 0.0, %v3327
    %v3336 = vsub.f32 0.0, %v3328
    %v3337 = vsub.f32 0.0, %v3329
    %v3338 = vmul.f32 %v3330, 1.442695
    %v3339 = vpow.pop %v3338
    %v3340 = vmul.f32 %v3331, 1.442695
    %v3341 = vpow.pop %v3340
    %v3342 = vmul.f32 %v3332, 1.442695
    %v3343 = vpow.pop %v3342
    %v3344 = vmul.f32 %v3333, 1.442695
    %v3345 = vpow.pop %v3344
    %v3346 = vmul.f32 %v3334, 1.442695
    %v3347 = vpow.pop %v3346
    %v3348 = vmul.f32 %v3335, 1.442695
    %v3349 = vpow.pop %v3348
    %v3350 = vmul.f32 %v3336, 1.442695
    %v3351 = vpow.pop %v3350
    %v3352 = vmul.f32 %v3337, 1.442695
    %v3353 = vpow.pop %v3352
    %v3354 = vadd.f32 %v3339, 1.0
    %v3355 = vadd.f32 %v3341, 1.0
    %v3356 = vadd.f32 %v3343, 1.0
    %v3357 = vadd.f32 %v3345, 1.0
    %v3358 = vadd.f32 %v3347, 1.0
    %v3359 = vadd.f32 %v3349, 1.0
    %v3360 = vadd.f32 %v3351, 1.0
    %v3361 = vadd.f32 %v3353, 1.0
    %v3362 = vrcp.pop %v3354
    %v3363 = vmul.f32 %v3322, %v3362
    %v3364 = vrcp.pop %v3355
    %v3365 = vmul.f32 %v3323, %v3364
    %v3366 = vrcp.pop %v3356
    %v3367 = vmul.f32 %v3324, %v3366
    %v3368 = vrcp.pop %v3357
    %v3369 = vmul.f32 %v3325, %v3368
    %v3370 = vrcp.pop %v3358
    %v3371 = vmul.f32 %v3326, %v3370
    %v3372 = vrcp.pop %v3359
    %v3373 = vmul.f32 %v3327, %v3372
    %v3374 = vrcp.pop %v3360
    %v3375 = vmul.f32 %v3328, %v3374
    %v3376 = vrcp.pop %v3361
    %v3377 = vmul.f32 %v3329, %v3376
    %v3379 = vlaneseq
    %v3380 = vshrl.u32 %v3379, 7
    %v3381 = vsub.s32 0, %v3380
    %v3382 = vrot.slane %v3078, %v3381
    %v3385 = vsel %vm848, %v3363, 0
    %v3388 = vsel %vm848, %v3365, 0
    %v3391 = vsel %vm848, %v3367, 0
    %v3394 = vsel %vm848, %v3369, 0
    %v3397 = vsel %vm848, %v3371, 0
    %v3400 = vsel %vm848, %v3373, 0
    %v3403 = vsel %vm848, %v3375, 0
    %v3406 = vsel %vm848, %v3377, 0
    %3408 = vmatprep.subr.mxu0 0.0
    %3409 = vmatpush1.msra.mxu0 0.0
    %3410 = vmatprep.subr.mxu0 0.0
    %3411 = vmatpush1.msra.mxu0 0.0
    %3412 = vmatprep.subr.mxu0 0.0
    %3413 = vmatpush1.msra.mxu0 0.0
    %3414 = vmatprep.subr.mxu0 0.0
    %3415 = vmatpush1.msra.mxu0 0.0
    %3416 = vmatprep.subr.mxu0 0.0
    %3417 = vmatpush1.msra.mxu0 0.0
    %3418 = vmatprep.subr.mxu0 0.0
    %3419 = vmatpush1.msra.mxu0 0.0
    %3420 = vmatprep.subr.mxu0 0.0
    %3421 = vmatpush1.msra.mxu0 0.0
    %3422 = vmatprep.subr.mxu0 0.0
    %3423 = vmatpush1.msra.mxu0 0.0
    %3424 = vmatprep.subr.mxu0 0.0
    %3425 = vmatpush1.msra.mxu0 %v3076
    %3426 = vmatprep.subr.mxu0 0.0
    %3427 = vmatpush1.msra.mxu0 %v3075
    %3428 = vmatprep.subr.mxu0 0.0
    %3429 = vmatpush1.msra.mxu0 %v3074
    %3430 = vmatprep.subr.mxu0 0.0
    %3431 = vmatpush1.msra.mxu0 %v3073
    %3432 = vmatprep.subr.mxu0 0.0
    %3433 = vmatpush1.msra.mxu0 %v3072
    %3434 = vmatprep.subr.mxu0 0.0
    %3435 = vmatpush1.msra.mxu0 %v3071
    %3436 = vmatprep.subr.mxu0 0.0
    %3437 = vmatpush1.msra.mxu0 %v3070
    %3438 = vmatprep.subr.mxu0 0.0
    %3439 = vmatpush1.msra.mxu0 %v3069
    %3440 = vmatprep.subr.mxu0 0.0
    %3441 = vmatpush2.msra.mxu0 0.0
    %3442 = vmatprep.subr.mxu0 0.0
    %3443 = vmatpush2.msra.mxu0 0.0
    %3444 = vmatprep.subr.mxu0 0.0
    %3445 = vmatpush2.msra.mxu0 0.0
    %3446 = vmatprep.subr.mxu0 0.0
    %3447 = vmatpush2.msra.mxu0 0.0
    %3448 = vmatprep.subr.mxu0 0.0
    %3449 = vmatpush2.msra.mxu0 0.0
    %3450 = vmatprep.subr.mxu0 0.0
    %3451 = vmatpush2.msra.mxu0 0.0
    %3452 = vmatprep.subr.mxu0 0.0
    %3453 = vmatpush2.msra.mxu0 0.0
    %3454 = vmatprep.subr.mxu0 0.0
    %3455 = vmatpush2.msra.mxu0 0.0
    %3456 = vmatprep.subr.mxu0 0.0
    %3457 = vmatpush2.msra.mxu0 0.0
    %3458 = vmatprep.subr.mxu0 0.0
    %3459 = vmatpush2.msra.mxu0 0.0
    %3460 = vmatprep.subr.mxu0 0.0
    %3461 = vmatpush2.msra.mxu0 0.0
    %3462 = vmatprep.subr.mxu0 0.0
    %3463 = vmatpush2.msra.mxu0 0.0
    %3464 = vmatprep.subr.mxu0 0.0
    %3465 = vmatpush2.msra.mxu0 0.0
    %3466 = vmatprep.subr.mxu0 0.0
    %3467 = vmatpush2.msra.mxu0 0.0
    %3468 = vmatprep.subr.mxu0 0.0
    %3469 = vmatpush2.msra.mxu0 0.0
    %3470 = vmatprep.subr.mxu0 0.0
    %3471 = vmatpush2.msra.mxu0 0.0
    %3472 = vmatprep.mubr.f32.mxu0 0.0
    %3473 = vmatmul.mubr.f32.gmra.mxu0 %v3385
    %v3474 = vpop.f32.mrf.mxu0
    %v3475 = vadd.f32 %v3382, %v3474
    %v3476 = vpop.f32.mrf.mxu0
    %3477 = vmatprep.mubr.f32.mxu0 0.0
    %3478 = vmatmul.mubr.f32.gmra.mxu0 %v3388
    %v3479 = vpop.f32.mrf.mxu0
    %v3480 = vadd.f32 %v3382, %v3479
    %v3481 = vpop.f32.mrf.mxu0
    %3482 = vmatprep.mubr.f32.mxu0 0.0
    %3483 = vmatmul.mubr.f32.gmra.mxu0 %v3391
    %v3484 = vpop.f32.mrf.mxu0
    %v3485 = vadd.f32 %v3382, %v3484
    %v3486 = vpop.f32.mrf.mxu0
    %3487 = vmatprep.mubr.f32.mxu0 0.0
    %3488 = vmatmul.mubr.f32.gmra.mxu0 %v3394
    %v3489 = vpop.f32.mrf.mxu0
    %v3490 = vadd.f32 %v3382, %v3489
    %v3491 = vpop.f32.mrf.mxu0
    %3492 = vmatprep.mubr.f32.mxu0 0.0
    %3493 = vmatmul.mubr.f32.gmra.mxu0 %v3397
    %v3494 = vpop.f32.mrf.mxu0
    %v3495 = vadd.f32 %v3382, %v3494
    %v3496 = vpop.f32.mrf.mxu0
    %3497 = vmatprep.mubr.f32.mxu0 0.0
    %3498 = vmatmul.mubr.f32.gmra.mxu0 %v3400
    %v3499 = vpop.f32.mrf.mxu0
    %v3500 = vadd.f32 %v3382, %v3499
    %v3501 = vpop.f32.mrf.mxu0
    %3502 = vmatprep.mubr.f32.mxu0 0.0
    %3503 = vmatmul.mubr.f32.gmra.mxu0 %v3403
    %v3504 = vpop.f32.mrf.mxu0
    %v3505 = vadd.f32 %v3382, %v3504
    %v3506 = vpop.f32.mrf.mxu0
    %3507 = vmatprep.mubr.f32.mxu0 0.0
    %3508 = vmatmul.mubr.f32.gmra.mxu0 %v3406
    %v3509 = vpop.f32.mrf.mxu0
    %v3510 = vadd.f32 %v3382, %v3509
    %v3511 = vpop.f32.mrf.mxu0
    %3512 = vdwg.mxu0
    %v3513 = vsub.f32 0.0, %v3475
    %v3514 = vsub.f32 0.0, %v3480
    %v3515 = vsub.f32 0.0, %v3485
    %v3516 = vsub.f32 0.0, %v3490
    %v3517 = vsub.f32 0.0, %v3495
    %v3518 = vsub.f32 0.0, %v3500
    %v3519 = vsub.f32 0.0, %v3505
    %v3520 = vsub.f32 0.0, %v3510
    %v3521 = vmul.f32 %v3513, 1.442695
    %v3522 = vpow.pop %v3521
    %v3523 = vmul.f32 %v3514, 1.442695
    %v3524 = vpow.pop %v3523
    %v3525 = vmul.f32 %v3515, 1.442695
    %v3526 = vpow.pop %v3525
    %v3527 = vmul.f32 %v3516, 1.442695
    %v3528 = vpow.pop %v3527
    %v3529 = vmul.f32 %v3517, 1.442695
    %v3530 = vpow.pop %v3529
    %v3531 = vmul.f32 %v3518, 1.442695
    %v3532 = vpow.pop %v3531
    %v3533 = vmul.f32 %v3519, 1.442695
    %v3534 = vpow.pop %v3533
    %v3535 = vmul.f32 %v3520, 1.442695
    %v3536 = vpow.pop %v3535
    %v3537 = vadd.f32 %v3522, 1.0
    %v3538 = vadd.f32 %v3524, 1.0
    %v3539 = vadd.f32 %v3526, 1.0
    %v3540 = vadd.f32 %v3528, 1.0
    %v3541 = vadd.f32 %v3530, 1.0
    %v3542 = vadd.f32 %v3532, 1.0
    %v3543 = vadd.f32 %v3534, 1.0
    %v3544 = vadd.f32 %v3536, 1.0
    %v3545 = vrcp.pop %v3537
    %v3546 = vmul.f32 %v3475, %v3545
    %v3547 = vrcp.pop %v3538
    %v3548 = vmul.f32 %v3480, %v3547
    %v3549 = vrcp.pop %v3539
    %v3550 = vmul.f32 %v3485, %v3549
    %v3551 = vrcp.pop %v3540
    %v3552 = vmul.f32 %v3490, %v3551
    %v3553 = vrcp.pop %v3541
    %v3554 = vmul.f32 %v3495, %v3553
    %v3555 = vrcp.pop %v3542
    %v3556 = vmul.f32 %v3500, %v3555
    %v3557 = vrcp.pop %v3543
    %v3558 = vmul.f32 %v3505, %v3557
    %v3559 = vrcp.pop %v3544
    %v3560 = vmul.f32 %v3510, %v3559
    %v3561 = vmul.f32 %v3546, %v715
    %v3562 = vmul.f32 %v3548, %v720
    %v3563 = vmul.f32 %v3550, %v725
    %v3564 = vmul.f32 %v3552, %v730
    %v3565 = vmul.f32 %v3554, %v735
    %v3566 = vmul.f32 %v3556, %v740
    %v3567 = vmul.f32 %v3558, %v745
    %v3568 = vmul.f32 %v3560, %v750
    %v3569 = vadd.f32 %v3561, %v3563
    %v3570 = vadd.f32 %v3562, %v3564
    %v3571 = vadd.f32 %v3569, %v3565
    %v3572 = vadd.f32 %v3570, %v3566
    %v3573 = vadd.f32 %v3571, %v3567
    %v3574 = vadd.f32 %v3572, %v3568
    %3577 = vrot.lane.b32.xlu0 %v3573, 64
    %v3578 = vpop.permute.xlu0 %3577
    %3579 = vrot.lane.b32.xlu0 %v3574, 64
    %v3580 = vpop.permute.xlu0 %3579
    %v3583 = vsel %vm848, %v3053, %v3578
    %v3584 = vsel %vm848, %v3054, %v3580
    %v3586 = vlaneseq
    %v3587 = vshrl.u32 %v3586, 7
    %v3588 = vsub.s32 0, %v3587
    %v3589 = vrot.slane %v3097, %v3588
    %3591 = vmatprep.subr.mxu0 0.0
    %3592 = vmatpush1.msra.mxu0 %v3095
    %3593 = vmatprep.subr.mxu0 0.0
    %3594 = vmatpush1.msra.mxu0 %v3094
    %3595 = vmatprep.subr.mxu0 0.0
    %3596 = vmatpush1.msra.mxu0 %v3093
    %3597 = vmatprep.subr.mxu0 0.0
    %3598 = vmatpush1.msra.mxu0 %v3092
    %3599 = vmatprep.subr.mxu0 0.0
    %3600 = vmatpush1.msra.mxu0 %v3091
    %3601 = vmatprep.subr.mxu0 0.0
    %3602 = vmatpush1.msra.mxu0 %v3090
    %3603 = vmatprep.subr.mxu0 0.0
    %3604 = vmatpush1.msra.mxu0 %v3089
    %3605 = vmatprep.subr.mxu0 0.0
    %3606 = vmatpush1.msra.mxu0 %v3088
    %3607 = vmatprep.subr.mxu0 0.0
    %3608 = vmatpush1.msra.mxu0 %v3087
    %3609 = vmatprep.subr.mxu0 0.0
    %3610 = vmatpush1.msra.mxu0 %v3086
    %3611 = vmatprep.subr.mxu0 0.0
    %3612 = vmatpush1.msra.mxu0 %v3085
    %3613 = vmatprep.subr.mxu0 0.0
    %3614 = vmatpush1.msra.mxu0 %v3084
    %3615 = vmatprep.subr.mxu0 0.0
    %3616 = vmatpush1.msra.mxu0 %v3083
    %3617 = vmatprep.subr.mxu0 0.0
    %3618 = vmatpush1.msra.mxu0 %v3082
    %3619 = vmatprep.subr.mxu0 0.0
    %3620 = vmatpush1.msra.mxu0 %v3081
    %3621 = vmatprep.subr.mxu0 0.0
    %3622 = vmatpush1.msra.mxu0 %v3080
    %3623 = vmatprep.subr.mxu0 0.0
    %3624 = vmatpush2.msra.mxu0 0.0
    %3625 = vmatprep.subr.mxu0 0.0
    %3626 = vmatpush2.msra.mxu0 0.0
    %3627 = vmatprep.subr.mxu0 0.0
    %3628 = vmatpush2.msra.mxu0 0.0
    %3629 = vmatprep.subr.mxu0 0.0
    %3630 = vmatpush2.msra.mxu0 0.0
    %3631 = vmatprep.subr.mxu0 0.0
    %3632 = vmatpush2.msra.mxu0 0.0
    %3633 = vmatprep.subr.mxu0 0.0
    %3634 = vmatpush2.msra.mxu0 0.0
    %3635 = vmatprep.subr.mxu0 0.0
    %3636 = vmatpush2.msra.mxu0 0.0
    %3637 = vmatprep.subr.mxu0 0.0
    %3638 = vmatpush2.msra.mxu0 0.0
    %3639 = vmatprep.subr.mxu0 0.0
    %3640 = vmatpush2.msra.mxu0 0.0
    %3641 = vmatprep.subr.mxu0 0.0
    %3642 = vmatpush2.msra.mxu0 0.0
    %3643 = vmatprep.subr.mxu0 0.0
    %3644 = vmatpush2.msra.mxu0 0.0
    %3645 = vmatprep.subr.mxu0 0.0
    %3646 = vmatpush2.msra.mxu0 0.0
    %3647 = vmatprep.subr.mxu0 0.0
    %3648 = vmatpush2.msra.mxu0 0.0
    %3649 = vmatprep.subr.mxu0 0.0
    %3650 = vmatpush2.msra.mxu0 0.0
    %3651 = vmatprep.subr.mxu0 0.0
    %3652 = vmatpush2.msra.mxu0 0.0
    %3653 = vmatprep.subr.mxu0 0.0
    %3654 = vmatpush2.msra.mxu0 0.0
    %3655 = vmatprep.mubr.f32.mxu0 0.0
    %3656 = vmatmul.mubr.f32.gmra.mxu0 %v3583
    %v3657 = vpop.f32.mrf.mxu0
    %v3658 = vadd.f32 %v3589, %v3657
    %v3659 = vpop.f32.mrf.mxu0
    %3660 = vmatprep.mubr.f32.mxu0 0.0
    %3661 = vmatmul.mubr.f32.gmra.mxu0 %v3584
    %v3662 = vpop.f32.mrf.mxu0
    %v3663 = vadd.f32 %v3589, %v3662
    %v3664 = vpop.f32.mrf.mxu0
    %3665 = vdwg.mxu0
    %v3666 = vsub.f32 0.0, %v3658
    %v3667 = vsub.f32 0.0, %v3663
    %v3668 = vmul.f32 %v3666, 1.442695
    %v3669 = vpow.pop %v3668
    %v3670 = vmul.f32 %v3667, 1.442695
    %v3671 = vpow.pop %v3670
    %v3672 = vadd.f32 %v3669, 1.0
    %v3673 = vadd.f32 %v3671, 1.0
    %v3674 = vrcp.pop %v3672
    %v3675 = vmul.f32 %v3658, %v3674
    %v3676 = vrcp.pop %v3673
    %v3677 = vmul.f32 %v3663, %v3676
    %v3679 = vsel %vm848, %v3675, 0
    %v3682 = vsel %vm848, %v3677, 0
    %3684 = vmatprep.subr.mxu0 0.0
    %3685 = vmatpush1.msra.mxu0 0.0
    %3686 = vmatprep.subr.mxu0 0.0
    %3687 = vmatpush1.msra.mxu0 0.0
    %3688 = vmatprep.subr.mxu0 0.0
    %3689 = vmatpush1.msra.mxu0 0.0
    %3690 = vmatprep.subr.mxu0 0.0
    %3691 = vmatpush1.msra.mxu0 0.0
    %3692 = vmatprep.subr.mxu0 0.0
    %3693 = vmatpush1.msra.mxu0 0.0
    %3694 = vmatprep.subr.mxu0 0.0
    %3695 = vmatpush1.msra.mxu0 0.0
    %3696 = vmatprep.subr.mxu0 0.0
    %3697 = vmatpush1.msra.mxu0 0.0
    %3698 = vmatprep.subr.mxu0 0.0
    %3699 = vmatpush1.msra.mxu0 0.0
    %3700 = vmatprep.subr.mxu0 0.0
    %3701 = vmatpush1.msra.mxu0 %v3106
    %3702 = vmatprep.subr.mxu0 0.0
    %3703 = vmatpush1.msra.mxu0 %v3105
    %3704 = vmatprep.subr.mxu0 0.0
    %3705 = vmatpush1.msra.mxu0 %v3104
    %3706 = vmatprep.subr.mxu0 0.0
    %3707 = vmatpush1.msra.mxu0 %v3103
    %3708 = vmatprep.subr.mxu0 0.0
    %3709 = vmatpush1.msra.mxu0 %v3102
    %3710 = vmatprep.subr.mxu0 0.0
    %3711 = vmatpush1.msra.mxu0 %v3101
    %3712 = vmatprep.subr.mxu0 0.0
    %3713 = vmatpush1.msra.mxu0 %v3100
    %3714 = vmatprep.subr.mxu0 0.0
    %3715 = vmatpush1.msra.mxu0 %v3099
    %3716 = vmatprep.subr.mxu0 0.0
    %3717 = vmatpush2.msra.mxu0 0.0
    %3718 = vmatprep.subr.mxu0 0.0
    %3719 = vmatpush2.msra.mxu0 0.0
    %3720 = vmatprep.subr.mxu0 0.0
    %3721 = vmatpush2.msra.mxu0 0.0
    %3722 = vmatprep.subr.mxu0 0.0
    %3723 = vmatpush2.msra.mxu0 0.0
    %3724 = vmatprep.subr.mxu0 0.0
    %3725 = vmatpush2.msra.mxu0 0.0
    %3726 = vmatprep.subr.mxu0 0.0
    %3727 = vmatpush2.msra.mxu0 0.0
    %3728 = vmatprep.subr.mxu0 0.0
    %3729 = vmatpush2.msra.mxu0 0.0
    %3730 = vmatprep.subr.mxu0 0.0
    %3731 = vmatpush2.msra.mxu0 0.0
    %3732 = vmatprep.subr.mxu0 0.0
    %3733 = vmatpush2.msra.mxu0 0.0
    %3734 = vmatprep.subr.mxu0 0.0
    %3735 = vmatpush2.msra.mxu0 0.0
    %3736 = vmatprep.subr.mxu0 0.0
    %3737 = vmatpush2.msra.mxu0 0.0
    %3738 = vmatprep.subr.mxu0 0.0
    %3739 = vmatpush2.msra.mxu0 0.0
    %3740 = vmatprep.subr.mxu0 0.0
    %3741 = vmatpush2.msra.mxu0 0.0
    %3742 = vmatprep.subr.mxu0 0.0
    %3743 = vmatpush2.msra.mxu0 0.0
    %3744 = vmatprep.subr.mxu0 0.0
    %3745 = vmatpush2.msra.mxu0 0.0
    %3746 = vmatprep.subr.mxu0 0.0
    %3747 = vmatpush2.msra.mxu0 0.0
    %3748 = vmatprep.mubr.f32.mxu0 0.0
    %3749 = vmatmul.mubr.f32.gmra.mxu0 %v3679
    %v3750 = vpop.f32.mrf.mxu0
    %v3751 = vadd.f32 0.0, %v3750
    %v3752 = vpop.f32.mrf.mxu0
    %3753 = vmatprep.mubr.f32.mxu0 0.0
    %3754 = vmatmul.mubr.f32.gmra.mxu0 %v3682
    %v3755 = vpop.f32.mrf.mxu0
    %v3756 = vadd.f32 0.0, %v3755
    %v3757 = vpop.f32.mrf.mxu0
    %3758 = vdwg.mxu0
    %v3759 = vadd.f32 %v3053, %v3751
    %v3760 = vadd.f32 %v3054, %v3756
    %v3762 = vlaneseq
    %v3763 = vshrl.u32 %v3762, 7
    %v3764 = vsub.s32 0, %v3763
    %v3765 = vrot.slane %v3108, %v3764
    %v3767 = vadd.f32 %v3759, %v3765
    %v3768 = vadd.f32 %v3760, %v3765
    %3769 = vst.msk [vmem:[#allocation19] sm:$0xff] %vm848, %v3767
    %3770 = vst.msk [vmem:[#allocation19 + $0x8] sm:$0xff] %vm848, %v3768
    // Predicated region
    $region158: #{tpu_custom_call.1} parent=1 // pred_check
      _
    $region159: #{tpu_custom_call.1} parent=1 // pred_check_branch
      %3772 = sbr.rel (0) target = $region161
    $region160: #{tpu_custom_call.1} parent=1 // pred_region
      %s3774 = ssub.s32 256, 256
      %3775 = vsyncadd [#allocation4], %s3774
      %s3776 = sshll.u32 [#allocation19], 4
      %s3777 = int_to_ptr.vmem [resolvable:$true] %s3776
      %3782 = dma.vmem_to_hbm [thread:$0]  %s3777, 256, %s59, [#allocation4], 128, 128, 8
    $region161: #{tpu_custom_call.1} parent=1 // pred_fallthru
      _
    // Predicated region
    $region162: #{tpu_custom_call.1} parent=1 // pred_check
      _
    $region163: #{tpu_custom_call.1} parent=1 // pred_check_branch
      %3784 = sbr.rel (0) target = $region165
    $region164: #{tpu_custom_call.1} parent=1 // pred_region
      %3785 = dma.done [#allocation4], 256
    $region165: #{tpu_custom_call.1} parent=1 // pred_fallthru
      _
    %3786 = vsyncpa [#allocation3], 1
    %3787 = vsyncpa [#allocation6], 1
    %3788 = vsyncpa [#allocation9], 1
    %3789 = vsyncpa [#allocation12], 1
    %3790 = vsyncpa [#allocation15], 1
    %3791 = vsyncpa [#allocation18], 1
    %3792 = vsyncpa [#allocation4], 1

</llo_original>
